<compile_context>
chip_gen: v7x
topology: tpu7x:2x2x1
jax: 0.10.0
libtpu: 0.0.40
codegen_flags: <defaults>
</compile_context>

<pallas_src>
import jax
import jax.numpy as jnp
import numpy as np
from jax.experimental import pallas as pl
from jax.experimental.pallas import tpu as pltpu

# ---- model hyper-parameters (small shapes, module defaults) ------------------
NUM_PLAYERS = 3
NUM_CARDS = 6
HIDDEN_WIDTH = 16      # default
NUM_HIDDENS = 4        # default
CIN = NUM_PLAYERS + 1              # conv in-channels            = 4
L = NUM_CARDS + 2                  # conv spatial length         = 8
COUT = NUM_PLAYERS * HIDDEN_WIDTH  # conv out-channels           = 48
F = COUT * L                       # flattened feature width     = 384
M1 = NUM_PLAYERS * L               # tail mid width 1            = 24
M2 = L                             # tail mid width 2            = 8
EPS = 1e-5
LEAKY = 0.01

BATCH = 16
OUT_PAD = 128                      # lane-dense padded output width (real width = 2)


# ---- Pallas kernel: conv(as matmul) + LeakyReLU + BN, 4 residual FC blocks, tail
def nothanks_kernel(x_ref, wconv_ref, bflat_ref, cs_ref, csh_ref,
                    wh_ref, bh_ref, wt1_ref, bt1_ref, wt2_ref, bt2_ref,
                    wt3_ref, bt3_ref, out_ref):
    bf16 = jnp.bfloat16

    # head: Conv1d(padding='same') expressed as one matmul on the MXU (bf16 weights).
    y = jnp.dot(x_ref[...].astype(bf16), wconv_ref[...],
                preferred_element_type=jnp.float32) + bflat_ref[...]
    y = jnp.where(y > 0, y, LEAKY * y)          # LeakyReLU(0.01)
    y = y * cs_ref[...] + csh_ref[...]          # BatchNorm1d (per-channel affine)

    # residual hidden blocks: x = relu(BN(Linear(x)) + x)  (BN folded into W/b)
    for i in range(wh_ref.shape[0]):            # static unroll (4 iterations)
        h = jnp.dot(y.astype(bf16), wh_ref[i], preferred_element_type=jnp.float32)
        h = h + bh_ref[i][None, :]
        y = jnp.maximum(h + y, 0.0)

    # tail: Linear->ReLU->BN->Linear->ReLU->BN->Linear (BNs folded forward)
    u = jnp.maximum(jnp.dot(y.astype(bf16), wt1_ref[...],
                            preferred_element_type=jnp.float32) + bt1_ref[...], 0.0)
    u = jnp.maximum(jnp.dot(u.astype(bf16), wt2_ref[...],
                            preferred_element_type=jnp.float32) + bt2_ref[...], 0.0)
    # final Linear padded to 128 lanes -> unmasked lane-dense store
    out_ref[...] = jnp.dot(u.astype(bf16), wt3_ref[...],
                           preferred_element_type=jnp.float32) + bt3_ref[...]


def _full_spec(shape):
    nd = len(shape)
    return pl.BlockSpec(shape, lambda i, nd=nd: (0,) * nd)


def forward_pallas(x, folded):
    B = x.shape[0]
    xpad = jnp.pad(x, ((0, 0), (0, 0), (1, 1)))             # 'same' padding, glue
    xflat = xpad.reshape(B, CIN * (L + 2))                   # glue reshape
    operands = (xflat,) + tuple(folded)
    # single grid step: whole batch in one tile, weights single-buffered by construction
    in_specs = [pl.BlockSpec((B, CIN * (L + 2)), lambda i: (0, 0))]
    for op in folded:
        in_specs.append(_full_spec(op.shape))
    out_specs = pl.BlockSpec((B, OUT_PAD), lambda i: (0, 0))
    out = pl.pallas_call(
        nothanks_kernel,
        out_shape=jax.ShapeDtypeStruct((B, OUT_PAD), jnp.float32),
        grid_spec=pltpu.PrefetchScalarGridSpec(
            num_scalar_prefetch=0,
            grid=(1,),
            in_specs=in_specs,
            out_specs=out_specs),
        compiler_params=pltpu.CompilerParams(
            dimension_semantics=("arbitrary",)),   # do NOT shard this tiny grid across TCs
    )(*operands)
    return out[:, :2]                                        # drop lane padding


# ---- deterministic parameter construction ------------------------------------
def _bn_init(key, shape):
    if isinstance(shape, int):
        shape = (shape,)
    k = jax.random.split(key, 4)
    return dict(
        gamma=1.0 + 0.1 * jax.random.normal(k[0], shape, jnp.float32),
        beta=0.1 * jax.random.normal(k[1], shape, jnp.float32),
        mean=0.1 * jax.random.normal(k[2], shape, jnp.float32),
        var=0.5 + jax.random.uniform(k[3], shape, dtype=jnp.float32),
    )


def _bn_affine(bn):
    s = bn['gamma'] / jnp.sqrt(bn['var'] + EPS)
    return s, bn['beta'] - bn['mean'] * s


def init_params(key):
    k = jax.random.split(key, 16)
    p = {}
    p['Wc'] = jax.random.normal(k[0], (COUT, CIN, 3), jnp.float32) / np.sqrt(CIN * 3)
    p['bc'] = 0.05 * jax.random.normal(k[1], (COUT,), jnp.float32)
    p['bn_c'] = _bn_init(k[2], COUT)
    p['Wh'] = jax.random.normal(k[3], (NUM_HIDDENS, F, F), jnp.float32) / np.sqrt(F)
    p['bh'] = 0.05 * jax.random.normal(k[4], (NUM_HIDDENS, F), jnp.float32)
    p['bn_h'] = _bn_init(k[5], (NUM_HIDDENS, F))
    p['Wt1'] = jax.random.normal(k[6], (F, M1), jnp.float32) / np.sqrt(F)
    p['bt1'] = 0.05 * jax.random.normal(k[7], (M1,), jnp.float32)
    p['bn_t1'] = _bn_init(k[8], M1)
    p['Wt2'] = jax.random.normal(k[9], (M1, M2), jnp.float32) / np.sqrt(M1)
    p['bt2'] = 0.05 * jax.random.normal(k[10], (M2,), jnp.float32)
    p['bn_t2'] = _bn_init(k[11], M2)
    p['Wt3'] = jax.random.normal(k[12], (M2, 2), jnp.float32) / np.sqrt(M2)
    p['bt3'] = 0.05 * jax.random.normal(k[13], (2,), jnp.float32)
    return p


def fold_params(p):
    bf16 = jnp.bfloat16
    # conv weight unrolled to (CIN*(L+2), COUT*L) so conv == matmul on padded input
    Wc = np.asarray(p['Wc'])
    Wconv = np.zeros((CIN * (L + 2), F), dtype=np.float32)
    for co in range(COUT):
        for c in range(CIN):
            for k in range(3):
                for l in range(L):
                    Wconv[c * (L + 2) + l + k, co * L + l] = Wc[co, c, k]
    wconv = jnp.asarray(Wconv).astype(bf16)

    sc, shc = _bn_affine(p['bn_c'])
    bflat = jnp.repeat(p['bc'], L)[None, :]          # flatten order = co*L + l
    cs = jnp.repeat(sc, L)[None, :]
    csh = jnp.repeat(shc, L)[None, :]

    sh_s, sh_b = _bn_affine(p['bn_h'])               # (NH, F) each
    Whf = (p['Wh'] * sh_s[:, None, :]).astype(bf16)  # fold BN into Linear, bf16 storage
    bhf = p['bh'] * sh_s + sh_b

    s1, b1 = _bn_affine(p['bn_t1'])
    s2, b2 = _bn_affine(p['bn_t2'])
    Wt1 = p['Wt1'].astype(bf16)
    bt1 = p['bt1'][None, :]
    Wt2f = (s1[:, None] * p['Wt2']).astype(bf16)     # fold BN_t1 into next Linear
    bt2f = (b1 @ p['Wt2'] + p['bt2'])[None, :]
    Wt3f = s2[:, None] * p['Wt3']                    # fold BN_t2 into next Linear
    bt3f = (b2 @ p['Wt3'] + p['bt3'])[None, :]
    # pad final layer to 128 lanes for an unmasked, lane-dense output store
    Wt3p = jnp.zeros((M2, OUT_PAD), jnp.float32).at[:, :2].set(Wt3f).astype(bf16)
    bt3p = jnp.zeros((1, OUT_PAD), jnp.float32).at[:, :2].set(bt3f)

    return (wconv, bflat, cs, csh, Whf, bhf, Wt1, bt1, Wt2f, bt2f, Wt3p, bt3p)


# ---- same-math JAX reference (folded params, bf16 matmul inputs) --------------
# Catches kernel / BlockSpec bugs with a tight tolerance.
def folded_reference(x, folded):
    (wconv, bflat, cs, csh, Whf, bhf, Wt1, bt1, Wt2f, bt2f, Wt3p, bt3p) = folded
    bf16 = jnp.bfloat16
    B = x.shape[0]
    xflat = jnp.pad(x, ((0, 0), (0, 0), (1, 1))).reshape(B, CIN * (L + 2))
    y = jnp.dot(xflat.astype(bf16), wconv, preferred_element_type=jnp.float32) + bflat
    y = jnp.where(y > 0, y, LEAKY * y)
    y = y * cs + csh
    for i in range(NUM_HIDDENS):
        h = jnp.dot(y.astype(bf16), Whf[i], preferred_element_type=jnp.float32)
        y = jnp.maximum(h + bhf[i][None, :] + y, 0.0)
    u = jnp.maximum(jnp.dot(y.astype(bf16), Wt1,
                            preferred_element_type=jnp.float32) + bt1, 0.0)
    u = jnp.maximum(jnp.dot(u.astype(bf16), Wt2f,
                            preferred_element_type=jnp.float32) + bt2f, 0.0)
    out = jnp.dot(u.astype(bf16), Wt3p, preferred_element_type=jnp.float32) + bt3p
    return out[:, :2]


# ---- plain-JAX reference (unfolded, float32) to validate the folding algebra ---
def reference_forward(x, p):
    B = x.shape[0]
    xpad = jnp.pad(x, ((0, 0), (0, 0), (1, 1)))
    y = jnp.zeros((B, COUT, L), jnp.float32)
    for k in range(3):
        y = y + jnp.einsum('bcl,oc->bol', xpad[:, :, k:k + L], p['Wc'][:, :, k])
    y = y + p['bc'][None, :, None]
    y = jnp.where(y > 0, y, LEAKY * y)
    s, sh = _bn_affine(p['bn_c'])
    y = y * s[None, :, None] + sh[None, :, None]
    y = y.reshape(B, F)
    hs, hb = _bn_affine(p['bn_h'])
    for i in range(NUM_HIDDENS):
        h = y @ p['Wh'][i] + p['bh'][i]
        h = h * hs[i] + hb[i]
        y = jnp.maximum(h + y, 0.0)
    s1, b1 = _bn_affine(p['bn_t1'])
    s2, b2 = _bn_affine(p['bn_t2'])
    t = jnp.maximum(y @ p['Wt1'] + p['bt1'], 0.0)
    t = t * s1 + b1
    t = jnp.maximum(t @ p['Wt2'] + p['bt2'], 0.0)
    t = t * s2 + b2
    return t @ p['Wt3'] + p['bt3']


if __name__ == "__main__":
    key = jax.random.PRNGKey(0)
    kp, kx = jax.random.split(key)
    params = init_params(kp)
    x = jax.random.normal(kx, (BATCH, CIN, L), jnp.float32)   # (B, P+1, C+2), NCW

    folded = fold_params(params)
    out = forward_pallas(x, folded)
    out = jax.block_until_ready(out)
    assert out.shape == (BATCH, 2)
    out_np = np.asarray(out)

    # 1) tight check vs a JAX reference doing the exact same (folded, bf16) math
    ref_same = np.asarray(folded_reference(x, folded))
    if not np.allclose(out_np, ref_same, rtol=2e-3, atol=2e-3):
        raise AssertionError("Pallas output does not match same-math JAX reference")

    # 2) loose check vs the unfolded float32 reference (validates BN/conv folding);
    #    tolerance accounts for bf16 weight storage across ~7 chained matmuls.
    ref_f32 = np.asarray(reference_forward(x, params))
    if not np.allclose(out_np, ref_f32, rtol=1e-1, atol=1e-1):
        raise AssertionError("Pallas output does not match unfolded f32 reference")

    print("KERNEL_OK")
</pallas_src>

<mosaic_0001>
module attributes {stable_mosaic.version = 11 : i64} {
  func.func @nothanks_kernel(%arg0: i32, %arg1: memref<16x40xf32, #tpu.memory_space<vmem>>, %arg2: memref<40x384xbf16, #tpu.memory_space<vmem>>, %arg3: memref<1x384xf32, #tpu.memory_space<vmem>>, %arg4: memref<1x384xf32, #tpu.memory_space<vmem>>, %arg5: memref<1x384xf32, #tpu.memory_space<vmem>>, %arg6: memref<4x384x384xbf16, #tpu.memory_space<vmem>>, %arg7: memref<4x384xf32, #tpu.memory_space<vmem>>, %arg8: memref<384x24xbf16, #tpu.memory_space<vmem>>, %arg9: memref<1x24xf32, #tpu.memory_space<vmem>>, %arg10: memref<24x8xbf16, #tpu.memory_space<vmem>>, %arg11: memref<1x8xf32, #tpu.memory_space<vmem>>, %arg12: memref<8x128xbf16, #tpu.memory_space<vmem>>, %arg13: memref<1x128xf32, #tpu.memory_space<vmem>>, %arg14: memref<16x128xf32, #tpu.memory_space<vmem>>) attributes {dimension_semantics = [#tpu.dimension_semantics<arbitrary>], iteration_bounds = array<i64: 1>, scalar_prefetch = 0 : i64, scratch_operands = 0 : i64, tpu.core_type = #tpu.core_type<tc>, window_params = [{pipeline_mode = #tpu.pipeline_mode<synchronous>, transform_indices = @transform_0, window_bounds = array<i64: 16, 40>}, {pipeline_mode = #tpu.pipeline_mode<synchronous>, transform_indices = @transform_1, window_bounds = array<i64: 40, 384>}, {pipeline_mode = #tpu.pipeline_mode<synchronous>, transform_indices = @transform_2, window_bounds = array<i64: 1, 384>}, {pipeline_mode = #tpu.pipeline_mode<synchronous>, transform_indices = @transform_3, window_bounds = array<i64: 1, 384>}, {pipeline_mode = #tpu.pipeline_mode<synchronous>, transform_indices = @transform_4, window_bounds = array<i64: 1, 384>}, {pipeline_mode = #tpu.pipeline_mode<synchronous>, transform_indices = @transform_5, window_bounds = array<i64: 4, 384, 384>}, {pipeline_mode = #tpu.pipeline_mode<synchronous>, transform_indices = @transform_6, window_bounds = array<i64: 4, 384>}, {pipeline_mode = #tpu.pipeline_mode<synchronous>, transform_indices = @transform_7, window_bounds = array<i64: 384, 24>}, {pipeline_mode = #tpu.pipeline_mode<synchronous>, transform_indices = @transform_8, window_bounds = array<i64: 1, 24>}, {pipeline_mode = #tpu.pipeline_mode<synchronous>, transform_indices = @transform_9, window_bounds = array<i64: 24, 8>}, {pipeline_mode = #tpu.pipeline_mode<synchronous>, transform_indices = @transform_10, window_bounds = array<i64: 1, 8>}, {pipeline_mode = #tpu.pipeline_mode<synchronous>, transform_indices = @transform_11, window_bounds = array<i64: 8, 128>}, {pipeline_mode = #tpu.pipeline_mode<synchronous>, transform_indices = @transform_12, window_bounds = array<i64: 1, 128>}, {pipeline_mode = #tpu.pipeline_mode<synchronous>, transform_indices = @transform_13, window_bounds = array<i64: 16, 128>}]} {
    %c0 = arith.constant 0 : index
    %c0_0 = arith.constant 0 : index
    %0 = vector.load %arg1[%c0, %c0_0] : memref<16x40xf32, #tpu.memory_space<vmem>>, vector<16x40xf32>
    %1 = arith.truncf %0 : vector<16x40xf32> to vector<16x40xbf16>
    %c0_1 = arith.constant 0 : index
    %c0_2 = arith.constant 0 : index
    %2 = vector.load %arg2[%c0_1, %c0_2] : memref<40x384xbf16, #tpu.memory_space<vmem>>, vector<40x384xbf16>
    %cst = arith.constant dense<0.000000e+00> : vector<16x384xf32>
    %3 = tpu.matmul %1, %2, %cst {dimension_numbers = #tpu.dot_dimension_numbers<[1], [0], [0], [1], [0, 0, 1, 1], [], []>} : vector<16x40xbf16>, vector<40x384xbf16>, vector<16x384xf32> -> vector<16x384xf32>
    %c0_3 = arith.constant 0 : index
    %c0_4 = arith.constant 0 : index
    %4 = vector.load %arg3[%c0_3, %c0_4] : memref<1x384xf32, #tpu.memory_space<vmem>>, vector<1x384xf32>
    %5 = vector.broadcast %4 : vector<1x384xf32> to vector<16x384xf32>
    %6 = arith.addf %3, %5 : vector<16x384xf32>
    %cst_5 = arith.constant 0.000000e+00 : f32
    %7 = vector.broadcast %cst_5 : f32 to vector<16x384xf32>
    %8 = arith.cmpf ogt, %6, %7 : vector<16x384xf32>
    %cst_6 = arith.constant 0.00999999977 : f32
    %9 = vector.broadcast %cst_6 : f32 to vector<16x384xf32>
    %10 = arith.mulf %9, %6 : vector<16x384xf32>
    %11 = arith.select %8, %6, %10 : vector<16x384xi1>, vector<16x384xf32>
    %c0_7 = arith.constant 0 : index
    %c0_8 = arith.constant 0 : index
    %12 = vector.load %arg4[%c0_7, %c0_8] : memref<1x384xf32, #tpu.memory_space<vmem>>, vector<1x384xf32>
    %13 = vector.broadcast %12 : vector<1x384xf32> to vector<16x384xf32>
    %14 = arith.mulf %11, %13 : vector<16x384xf32>
    %c0_9 = arith.constant 0 : index
    %c0_10 = arith.constant 0 : index
    %15 = vector.load %arg5[%c0_9, %c0_10] : memref<1x384xf32, #tpu.memory_space<vmem>>, vector<1x384xf32>
    %16 = vector.broadcast %15 : vector<1x384xf32> to vector<16x384xf32>
    %17 = arith.addf %14, %16 : vector<16x384xf32>
    %18 = arith.truncf %17 : vector<16x384xf32> to vector<16x384xbf16>
    %c0_11 = arith.constant 0 : index
    %c0_12 = arith.constant 0 : index
    %c0_13 = arith.constant 0 : index
    %19 = vector.load %arg6[%c0_11, %c0_12, %c0_13] : memref<4x384x384xbf16, #tpu.memory_space<vmem>>, vector<1x384x384xbf16>
    %20 = vector.shape_cast %19 : vector<1x384x384xbf16> to vector<384x384xbf16>
    %cst_14 = arith.constant dense<0.000000e+00> : vector<16x384xf32>
    %21 = tpu.matmul %18, %20, %cst_14 {dimension_numbers = #tpu.dot_dimension_numbers<[1], [0], [0], [1], [0, 0, 1, 1], [], []>} : vector<16x384xbf16>, vector<384x384xbf16>, vector<16x384xf32> -> vector<16x384xf32>
    %c0_15 = arith.constant 0 : index
    %c0_16 = arith.constant 0 : index
    %22 = vector.load %arg7[%c0_15, %c0_16] : memref<4x384xf32, #tpu.memory_space<vmem>>, vector<1x384xf32>
    %23 = vector.shape_cast %22 : vector<1x384xf32> to vector<384xf32>
    %24 = vector.shape_cast %23 : vector<384xf32> to vector<1x384xf32>
    %25 = vector.broadcast %24 : vector<1x384xf32> to vector<16x384xf32>
    %26 = arith.addf %21, %25 : vector<16x384xf32>
    %27 = arith.addf %26, %17 : vector<16x384xf32>
    %cst_17 = arith.constant 0.000000e+00 : f32
    %28 = vector.broadcast %cst_17 : f32 to vector<16x384xf32>
    %29 = arith.maximumf %27, %28 : vector<16x384xf32>
    %30 = arith.truncf %29 : vector<16x384xf32> to vector<16x384xbf16>
    %c1 = arith.constant 1 : index
    %c0_18 = arith.constant 0 : index
    %c0_19 = arith.constant 0 : index
    %31 = vector.load %arg6[%c1, %c0_18, %c0_19] : memref<4x384x384xbf16, #tpu.memory_space<vmem>>, vector<1x384x384xbf16>
    %32 = vector.shape_cast %31 : vector<1x384x384xbf16> to vector<384x384xbf16>
    %cst_20 = arith.constant dense<0.000000e+00> : vector<16x384xf32>
    %33 = tpu.matmul %30, %32, %cst_20 {dimension_numbers = #tpu.dot_dimension_numbers<[1], [0], [0], [1], [0, 0, 1, 1], [], []>} : vector<16x384xbf16>, vector<384x384xbf16>, vector<16x384xf32> -> vector<16x384xf32>
    %c1_21 = arith.constant 1 : index
    %c0_22 = arith.constant 0 : index
    %34 = vector.load %arg7[%c1_21, %c0_22] : memref<4x384xf32, #tpu.memory_space<vmem>>, vector<1x384xf32>
    %35 = vector.shape_cast %34 : vector<1x384xf32> to vector<384xf32>
    %36 = vector.shape_cast %35 : vector<384xf32> to vector<1x384xf32>
    %37 = vector.broadcast %36 : vector<1x384xf32> to vector<16x384xf32>
    %38 = arith.addf %33, %37 : vector<16x384xf32>
    %39 = arith.addf %38, %29 : vector<16x384xf32>
    %cst_23 = arith.constant 0.000000e+00 : f32
    %40 = vector.broadcast %cst_23 : f32 to vector<16x384xf32>
    %41 = arith.maximumf %39, %40 : vector<16x384xf32>
    %42 = arith.truncf %41 : vector<16x384xf32> to vector<16x384xbf16>
    %c2 = arith.constant 2 : index
    %c0_24 = arith.constant 0 : index
    %c0_25 = arith.constant 0 : index
    %43 = vector.load %arg6[%c2, %c0_24, %c0_25] : memref<4x384x384xbf16, #tpu.memory_space<vmem>>, vector<1x384x384xbf16>
    %44 = vector.shape_cast %43 : vector<1x384x384xbf16> to vector<384x384xbf16>
    %cst_26 = arith.constant dense<0.000000e+00> : vector<16x384xf32>
    %45 = tpu.matmul %42, %44, %cst_26 {dimension_numbers = #tpu.dot_dimension_numbers<[1], [0], [0], [1], [0, 0, 1, 1], [], []>} : vector<16x384xbf16>, vector<384x384xbf16>, vector<16x384xf32> -> vector<16x384xf32>
    %c2_27 = arith.constant 2 : index
    %c0_28 = arith.constant 0 : index
    %46 = vector.load %arg7[%c2_27, %c0_28] : memref<4x384xf32, #tpu.memory_space<vmem>>, vector<1x384xf32>
    %47 = vector.shape_cast %46 : vector<1x384xf32> to vector<384xf32>
    %48 = vector.shape_cast %47 : vector<384xf32> to vector<1x384xf32>
    %49 = vector.broadcast %48 : vector<1x384xf32> to vector<16x384xf32>
    %50 = arith.addf %45, %49 : vector<16x384xf32>
    %51 = arith.addf %50, %41 : vector<16x384xf32>
    %cst_29 = arith.constant 0.000000e+00 : f32
    %52 = vector.broadcast %cst_29 : f32 to vector<16x384xf32>
    %53 = arith.maximumf %51, %52 : vector<16x384xf32>
    %54 = arith.truncf %53 : vector<16x384xf32> to vector<16x384xbf16>
    %c3 = arith.constant 3 : index
    %c0_30 = arith.constant 0 : index
    %c0_31 = arith.constant 0 : index
    %55 = vector.load %arg6[%c3, %c0_30, %c0_31] : memref<4x384x384xbf16, #tpu.memory_space<vmem>>, vector<1x384x384xbf16>
    %56 = vector.shape_cast %55 : vector<1x384x384xbf16> to vector<384x384xbf16>
    %cst_32 = arith.constant dense<0.000000e+00> : vector<16x384xf32>
    %57 = tpu.matmul %54, %56, %cst_32 {dimension_numbers = #tpu.dot_dimension_numbers<[1], [0], [0], [1], [0, 0, 1, 1], [], []>} : vector<16x384xbf16>, vector<384x384xbf16>, vector<16x384xf32> -> vector<16x384xf32>
    %c3_33 = arith.constant 3 : index
    %c0_34 = arith.constant 0 : index
    %58 = vector.load %arg7[%c3_33, %c0_34] : memref<4x384xf32, #tpu.memory_space<vmem>>, vector<1x384xf32>
    %59 = vector.shape_cast %58 : vector<1x384xf32> to vector<384xf32>
    %60 = vector.shape_cast %59 : vector<384xf32> to vector<1x384xf32>
    %61 = vector.broadcast %60 : vector<1x384xf32> to vector<16x384xf32>
    %62 = arith.addf %57, %61 : vector<16x384xf32>
    %63 = arith.addf %62, %53 : vector<16x384xf32>
    %cst_35 = arith.constant 0.000000e+00 : f32
    %64 = vector.broadcast %cst_35 : f32 to vector<16x384xf32>
    %65 = arith.maximumf %63, %64 : vector<16x384xf32>
    %66 = arith.truncf %65 : vector<16x384xf32> to vector<16x384xbf16>
    %c0_36 = arith.constant 0 : index
    %c0_37 = arith.constant 0 : index
    %67 = vector.load %arg8[%c0_36, %c0_37] : memref<384x24xbf16, #tpu.memory_space<vmem>>, vector<384x24xbf16>
    %cst_38 = arith.constant dense<0.000000e+00> : vector<16x24xf32>
    %68 = tpu.matmul %66, %67, %cst_38 {dimension_numbers = #tpu.dot_dimension_numbers<[1], [0], [0], [1], [0, 0, 1, 1], [], []>} : vector<16x384xbf16>, vector<384x24xbf16>, vector<16x24xf32> -> vector<16x24xf32>
    %c0_39 = arith.constant 0 : index
    %c0_40 = arith.constant 0 : index
    %69 = vector.load %arg9[%c0_39, %c0_40] : memref<1x24xf32, #tpu.memory_space<vmem>>, vector<1x24xf32>
    %70 = vector.broadcast %69 : vector<1x24xf32> to vector<16x24xf32>
    %71 = arith.addf %68, %70 : vector<16x24xf32>
    %cst_41 = arith.constant 0.000000e+00 : f32
    %72 = vector.broadcast %cst_41 : f32 to vector<16x24xf32>
    %73 = arith.maximumf %71, %72 : vector<16x24xf32>
    %74 = arith.truncf %73 : vector<16x24xf32> to vector<16x24xbf16>
    %c0_42 = arith.constant 0 : index
    %c0_43 = arith.constant 0 : index
    %75 = vector.load %arg10[%c0_42, %c0_43] : memref<24x8xbf16, #tpu.memory_space<vmem>>, vector<24x8xbf16>
    %cst_44 = arith.constant dense<0.000000e+00> : vector<16x8xf32>
    %76 = tpu.matmul %74, %75, %cst_44 {dimension_numbers = #tpu.dot_dimension_numbers<[1], [0], [0], [1], [0, 0, 1, 1], [], []>} : vector<16x24xbf16>, vector<24x8xbf16>, vector<16x8xf32> -> vector<16x8xf32>
    %c0_45 = arith.constant 0 : index
    %c0_46 = arith.constant 0 : index
    %77 = vector.load %arg11[%c0_45, %c0_46] : memref<1x8xf32, #tpu.memory_space<vmem>>, vector<1x8xf32>
    %78 = vector.broadcast %77 : vector<1x8xf32> to vector<16x8xf32>
    %79 = arith.addf %76, %78 : vector<16x8xf32>
    %cst_47 = arith.constant 0.000000e+00 : f32
    %80 = vector.broadcast %cst_47 : f32 to vector<16x8xf32>
    %81 = arith.maximumf %79, %80 : vector<16x8xf32>
    %82 = arith.truncf %81 : vector<16x8xf32> to vector<16x8xbf16>
    %c0_48 = arith.constant 0 : index
    %c0_49 = arith.constant 0 : index
    %83 = vector.load %arg12[%c0_48, %c0_49] : memref<8x128xbf16, #tpu.memory_space<vmem>>, vector<8x128xbf16>
    %cst_50 = arith.constant dense<0.000000e+00> : vector<16x128xf32>
    %84 = tpu.matmul %82, %83, %cst_50 {dimension_numbers = #tpu.dot_dimension_numbers<[1], [0], [0], [1], [0, 0, 1, 1], [], []>} : vector<16x8xbf16>, vector<8x128xbf16>, vector<16x128xf32> -> vector<16x128xf32>
    %c0_51 = arith.constant 0 : index
    %c0_52 = arith.constant 0 : index
    %85 = vector.load %arg13[%c0_51, %c0_52] : memref<1x128xf32, #tpu.memory_space<vmem>>, vector<1x128xf32>
    %86 = vector.broadcast %85 : vector<1x128xf32> to vector<16x128xf32>
    %87 = arith.addf %84, %86 : vector<16x128xf32>
    %c0_53 = arith.constant 0 : index
    %c0_54 = arith.constant 0 : index
    %88 = vector.load %arg14[%c0_53, %c0_54] : memref<16x128xf32, #tpu.memory_space<vmem>>, vector<16x128xf32>
    tpu.vector_store %arg14[%c0_53, %c0_54], %87 {strides = array<i32>} : memref<16x128xf32, #tpu.memory_space<vmem>>, vector<16x128xf32>,
    return
  }
  func.func @transform_0(%arg0: i32) -> (i32, i32) {
    %c0_i32 = arith.constant 0 : i32
    %c0_i32_0 = arith.constant 0 : i32
    %c0_i32_1 = arith.constant 0 : i32
    return %c0_i32, %c0_i32_0 : i32, i32
  }
  func.func @transform_1(%arg0: i32) -> (i32, i32) {
    %c0_i32 = arith.constant 0 : i32
    %c0_i32_0 = arith.constant 0 : i32
    %c0_i32_1 = arith.constant 0 : i32
    return %c0_i32, %c0_i32_0 : i32, i32
  }
  func.func @transform_2(%arg0: i32) -> (i32, i32) {
    %c0_i32 = arith.constant 0 : i32
    %c0_i32_0 = arith.constant 0 : i32
    %c0_i32_1 = arith.constant 0 : i32
    return %c0_i32, %c0_i32_0 : i32, i32
  }
  func.func @transform_3(%arg0: i32) -> (i32, i32) {
    %c0_i32 = arith.constant 0 : i32
    %c0_i32_0 = arith.constant 0 : i32
    %c0_i32_1 = arith.constant 0 : i32
    return %c0_i32, %c0_i32_0 : i32, i32
  }
  func.func @transform_4(%arg0: i32) -> (i32, i32) {
    %c0_i32 = arith.constant 0 : i32
    %c0_i32_0 = arith.constant 0 : i32
    %c0_i32_1 = arith.constant 0 : i32
    return %c0_i32, %c0_i32_0 : i32, i32
  }
  func.func @transform_5(%arg0: i32) -> (i32, i32, i32) {
    %c0_i32 = arith.constant 0 : i32
    %c0_i32_0 = arith.constant 0 : i32
    %c0_i32_1 = arith.constant 0 : i32
    %c0_i32_2 = arith.constant 0 : i32
    return %c0_i32, %c0_i32_0, %c0_i32_1 : i32, i32, i32
  }
  func.func @transform_6(%arg0: i32) -> (i32, i32) {
    %c0_i32 = arith.constant 0 : i32
    %c0_i32_0 = arith.constant 0 : i32
    %c0_i32_1 = arith.constant 0 : i32
    return %c0_i32, %c0_i32_0 : i32, i32
  }
  func.func @transform_7(%arg0: i32) -> (i32, i32) {
    %c0_i32 = arith.constant 0 : i32
    %c0_i32_0 = arith.constant 0 : i32
    %c0_i32_1 = arith.constant 0 : i32
    return %c0_i32, %c0_i32_0 : i32, i32
  }
  func.func @transform_8(%arg0: i32) -> (i32, i32) {
    %c0_i32 = arith.constant 0 : i32
    %c0_i32_0 = arith.constant 0 : i32
    %c0_i32_1 = arith.constant 0 : i32
    return %c0_i32, %c0_i32_0 : i32, i32
  }
  func.func @transform_9(%arg0: i32) -> (i32, i32) {
    %c0_i32 = arith.constant 0 : i32
    %c0_i32_0 = arith.constant 0 : i32
    %c0_i32_1 = arith.constant 0 : i32
    return %c0_i32, %c0_i32_0 : i32, i32
  }
  func.func @transform_10(%arg0: i32) -> (i32, i32) {
    %c0_i32 = arith.constant 0 : i32
    %c0_i32_0 = arith.constant 0 : i32
    %c0_i32_1 = arith.constant 0 : i32
    return %c0_i32, %c0_i32_0 : i32, i32
  }
  func.func @transform_11(%arg0: i32) -> (i32, i32) {
    %c0_i32 = arith.constant 0 : i32
    %c0_i32_0 = arith.constant 0 : i32
    %c0_i32_1 = arith.constant 0 : i32
    return %c0_i32, %c0_i32_0 : i32, i32
  }
  func.func @transform_12(%arg0: i32) -> (i32, i32) {
    %c0_i32 = arith.constant 0 : i32
    %c0_i32_0 = arith.constant 0 : i32
    %c0_i32_1 = arith.constant 0 : i32
    return %c0_i32, %c0_i32_0 : i32, i32
  }
  func.func @transform_13(%arg0: i32) -> (i32, i32) {
    %c0_i32 = arith.constant 0 : i32
    %c0_i32_0 = arith.constant 0 : i32
    %c0_i32_1 = arith.constant 0 : i32
    return %c0_i32, %c0_i32_0 : i32, i32
  }
}

</mosaic_0001>

<llo_original>
// kernel: tpu_custom_call.1
$region0: #{tpu_custom_call.1}
  #allocation0 [shape = 'u32[]', space=smem, size = 0x4, offset = 0x4, fixed_abs, tag = 'smem constant byte address 0x4 - core index']
  #allocation1 [shape = 'u32[144,128]{1,0:T(1,128)}', space=vmem, size = 0x12000, scoped, tag = 'internal scratch']
  %s0 = inlined_call_operand.hbm [shape: f32[16,40], index: 0, kind: input, shape index: {}]
  %s1 = inlined_call_operand.hbm [shape: bf16[40,384], index: 1, kind: input, shape index: {}]
  %s2 = inlined_call_operand.hbm [shape: f32[1,384], index: 2, kind: input, shape index: {}]
  %s3 = inlined_call_operand.hbm [shape: f32[1,384], index: 3, kind: input, shape index: {}]
  %s4 = inlined_call_operand.hbm [shape: f32[1,384], index: 4, kind: input, shape index: {}]
  %s5 = inlined_call_operand.hbm [shape: bf16[4,384,384], index: 5, kind: input, shape index: {}]
  %s6 = inlined_call_operand.hbm [shape: f32[4,384], index: 6, kind: input, shape index: {}]
  %s7 = inlined_call_operand.vmem [shape: bf16[384,24], index: 7, kind: input, shape index: {}]
  %s8 = inlined_call_operand.hbm [shape: f32[1,24], index: 8, kind: input, shape index: {}]
  %s9 = inlined_call_operand.vmem [shape: bf16[24,8], index: 9, kind: input, shape index: {}]
  %s10 = inlined_call_operand.hbm [shape: f32[1,8], index: 10, kind: input, shape index: {}]
  %s11 = inlined_call_operand.hbm [shape: bf16[8,128], index: 11, kind: input, shape index: {}]
  %s12 = inlined_call_operand.hbm [shape: f32[1,128], index: 12, kind: input, shape index: {}]
  %s13 = inlined_call_operand.hbm [shape: f32[16,128], index: 13, kind: output, shape index: {}]
  %s14 = sld [smem:[#allocation0]]
  $region106: #{tpu_custom_call.1} parent=0
    _
  %s16 = ssub.s32 1, %s14
  %s17 = scalar_select 0, %s16, %s14
  $region1: #{tpu_custom_call.1} parent=0
    #allocation2 [shape = 'u8[8192]{0}', space=vmem, size = 0x2000, scoped, tag = 'input window, operand 0, single buffered']
    #allocation3 [shape = 's32[1]{0}', space=sflag, size = 0x4, scoped, tag = 'scoped memory for tpu_custom_call.1']
    #allocation4 [shape = 's32[1]{0}', space=sflag, size = 0x4, scoped, tag = 'scoped memory for tpu_custom_call.1']
    #allocation5 [shape = 'u8[30720]{0}', space=vmem, size = 0x7800, scoped, tag = 'input window, operand 1, single buffered']
    #allocation6 [shape = 's32[1]{0}', space=sflag, size = 0x4, scoped, tag = 'scoped memory for tpu_custom_call.1']
    #allocation7 [shape = 'u8[1536]{0}', space=vmem, size = 0x800, scoped, tag = 'input window, operand 2, single buffered']
    #allocation8 [shape = 'u8[1536]{0}', space=vmem, size = 0x800, scoped, tag = 'input window, operand 3, single buffered']
    #allocation9 [shape = 's32[1]{0}', space=sflag, size = 0x4, scoped, tag = 'scoped memory for tpu_custom_call.1']
    #allocation10 [shape = 'u8[1536]{0}', space=vmem, size = 0x800, scoped, tag = 'input window, operand 4, single buffered']
    #allocation11 [shape = 'u8[1179648]{0}', space=vmem, size = 0x120000, scoped, tag = 'input window, operand 5, single buffered']
    #allocation12 [shape = 's32[1]{0}', space=sflag, size = 0x4, scoped, tag = 'scoped memory for tpu_custom_call.1']
    #allocation13 [shape = 'u8[6144]{0}', space=vmem, size = 0x1800, scoped, tag = 'input window, operand 6, single buffered']
    #allocation14 [shape = 'u8[512]{0}', space=vmem, size = 0x400, scoped, tag = 'input window, operand 8, single buffered']
    #allocation15 [shape = 's32[1]{0}', space=sflag, size = 0x4, scoped, tag = 'scoped memory for tpu_custom_call.1']
    #allocation16 [shape = 'u8[512]{0}', space=vmem, size = 0x400, scoped, tag = 'input window, operand 10, single buffered']
    #allocation17 [shape = 'u8[2048]{0}', space=vmem, size = 0x800, scoped, tag = 'input window, operand 11, single buffered']
    #allocation18 [shape = 's32[1]{0}', space=sflag, size = 0x4, scoped, tag = 'scoped memory for tpu_custom_call.1']
    #allocation19 [shape = 'u8[512]{0}', space=vmem, size = 0x400, scoped, tag = 'input window, operand 12, single buffered']
    #allocation20 [shape = 'u8[8192]{0}', space=vmem, size = 0x2000, scoped, tag = 'output window, operand 0, single buffered']
    %18 = vsyncpa [#allocation3], 0
    %19 = vsyncpa [#allocation6], 0
    %20 = vsyncpa [#allocation9], 0
    %21 = vsyncpa [#allocation12], 0
    %22 = vsyncpa [#allocation15], 0
    %23 = vsyncpa [#allocation18], 0
    %24 = vsyncpa [#allocation4], 0
    // Predicated region
    $region2: #{tpu_custom_call.1} parent=1 // pred_check
      _
    $region3: #{tpu_custom_call.1} parent=1 // pred_check_branch
      %26 = sbr.rel (0) target = $region5
    $region4: #{tpu_custom_call.1} parent=1 // pred_region
      %s28 = ssub.s32 256, 256
      %29 = vsyncadd [#allocation3], %s28
      %s30 = sshll.u32 [#allocation2], 4
      %s31 = int_to_ptr.vmem [resolvable:$true] %s30
      %36 = dma.hbm_to_vmem [thread:$0]  %s0, 256, %s31, [#allocation3], 128, 128, 8
    $region5: #{tpu_custom_call.1} parent=1 // pred_fallthru
      _
    // Predicated region
    $region6: #{tpu_custom_call.1} parent=1 // pred_check
      _
    $region7: #{tpu_custom_call.1} parent=1 // pred_check_branch
      %38 = sbr.rel (0) target = $region9
    $region8: #{tpu_custom_call.1} parent=1 // pred_region
      %s40 = ssub.s32 960, 960
      %41 = vsyncadd [#allocation6], %s40
      %s42 = sshll.u32 [#allocation5], 4
      %s43 = int_to_ptr.vmem [resolvable:$true] %s42
      %48 = dma.hbm_to_vmem [thread:$0]  %s1, 960, %s43, [#allocation6], 192, 192, 12
    $region9: #{tpu_custom_call.1} parent=1 // pred_fallthru
      _
    // Predicated region
    $region10: #{tpu_custom_call.1} parent=1 // pred_check
      _
    $region11: #{tpu_custom_call.1} parent=1 // pred_check_branch
      %50 = sbr.rel (0) target = $region13
    $region12: #{tpu_custom_call.1} parent=1 // pred_region
      %s52 = ssub.s32 48, 48
      %53 = vsyncadd [#allocation6], %s52
      %s55 = sshll.u32 [#allocation7], 4
      %s56 = int_to_ptr.vmem [resolvable:$true] %s55
      %58 = dma.hbm_to_vmem [thread:$0]  %s2, 48, %s56, [#allocation6]
    $region13: #{tpu_custom_call.1} parent=1 // pred_fallthru
      _
    // Predicated region
    $region14: #{tpu_custom_call.1} parent=1 // pred_check
      _
    $region15: #{tpu_custom_call.1} parent=1 // pred_check_branch
      %60 = sbr.rel (0) target = $region17
    $region16: #{tpu_custom_call.1} parent=1 // pred_region
      %s62 = ssub.s32 48, 48
      %63 = vsyncadd [#allocation9], %s62
      %s65 = sshll.u32 [#allocation8], 4
      %s66 = int_to_ptr.vmem [resolvable:$true] %s65
      %68 = dma.hbm_to_vmem [thread:$0]  %s3, 48, %s66, [#allocation9]
    $region17: #{tpu_custom_call.1} parent=1 // pred_fallthru
      _
    // Predicated region
    $region18: #{tpu_custom_call.1} parent=1 // pred_check
      _
    $region19: #{tpu_custom_call.1} parent=1 // pred_check_branch
      %70 = sbr.rel (0) target = $region21
    $region20: #{tpu_custom_call.1} parent=1 // pred_region
      %s72 = ssub.s32 48, 48
      %73 = vsyncadd [#allocation9], %s72
      %s75 = sshll.u32 [#allocation10], 4
      %s76 = int_to_ptr.vmem [resolvable:$true] %s75
      %78 = dma.hbm_to_vmem [thread:$0]  %s4, 48, %s76, [#allocation9]
    $region21: #{tpu_custom_call.1} parent=1 // pred_fallthru
      _
    // Predicated region
    $region22: #{tpu_custom_call.1} parent=1 // pred_check
      _
    $region23: #{tpu_custom_call.1} parent=1 // pred_check_branch
      %80 = sbr.rel (0) target = $region25
    $region24: #{tpu_custom_call.1} parent=1 // pred_region
      %s82 = ssub.s32 36864, 36864
      %83 = vsyncadd [#allocation12], %s82
      %s84 = sshll.u32 [#allocation11], 4
      %s85 = int_to_ptr.vmem [resolvable:$true] %s84
      %90 = dma.hbm_to_vmem [thread:$0]  %s5, 36864, %s85, [#allocation12], 192, 192, 12
    $region25: #{tpu_custom_call.1} parent=1 // pred_fallthru
      _
    // Predicated region
    $region26: #{tpu_custom_call.1} parent=1 // pred_check
      _
    $region27: #{tpu_custom_call.1} parent=1 // pred_check_branch
      %92 = sbr.rel (0) target = $region29
    $region28: #{tpu_custom_call.1} parent=1 // pred_region
      %s94 = ssub.s32 192, 192
      %95 = vsyncadd [#allocation12], %s94
      %s97 = sshll.u32 [#allocation13], 4
      %s98 = int_to_ptr.vmem [resolvable:$true] %s97
      %100 = dma.hbm_to_vmem [thread:$0]  %s6, 192, %s98, [#allocation12]
    $region29: #{tpu_custom_call.1} parent=1 // pred_fallthru
      _
    // Predicated region
    $region30: #{tpu_custom_call.1} parent=1 // pred_check
      _
    $region31: #{tpu_custom_call.1} parent=1 // pred_check_branch
      %102 = sbr.rel (0) target = $region33
    $region32: #{tpu_custom_call.1} parent=1 // pred_region
      _
    $region33: #{tpu_custom_call.1} parent=1 // pred_fallthru
      _
    // Predicated region
    $region34: #{tpu_custom_call.1} parent=1 // pred_check
      _
    $region35: #{tpu_custom_call.1} parent=1 // pred_check_branch
      %104 = sbr.rel (0) target = $region37
    $region36: #{tpu_custom_call.1} parent=1 // pred_region
      %s106 = ssub.s32 16, 16
      %107 = vsyncadd [#allocation15], %s106
      %s109 = sshll.u32 [#allocation14], 4
      %s110 = int_to_ptr.vmem [resolvable:$true] %s109
      %112 = dma.hbm_to_vmem [thread:$0]  %s8, 16, %s110, [#allocation15]
    $region37: #{tpu_custom_call.1} parent=1 // pred_fallthru
      _
    // Predicated region
    $region38: #{tpu_custom_call.1} parent=1 // pred_check
      _
    $region39: #{tpu_custom_call.1} parent=1 // pred_check_branch
      %114 = sbr.rel (0) target = $region41
    $region40: #{tpu_custom_call.1} parent=1 // pred_region
      _
    $region41: #{tpu_custom_call.1} parent=1 // pred_fallthru
      _
    // Predicated region
    $region42: #{tpu_custom_call.1} parent=1 // pred_check
      _
    $region43: #{tpu_custom_call.1} parent=1 // pred_check_branch
      %116 = sbr.rel (0) target = $region45
    $region44: #{tpu_custom_call.1} parent=1 // pred_region
      %s118 = ssub.s32 16, 16
      %119 = vsyncadd [#allocation15], %s118
      %s121 = sshll.u32 [#allocation16], 4
      %s122 = int_to_ptr.vmem [resolvable:$true] %s121
      %124 = dma.hbm_to_vmem [thread:$0]  %s10, 16, %s122, [#allocation15]
    $region45: #{tpu_custom_call.1} parent=1 // pred_fallthru
      _
    // Predicated region
    $region46: #{tpu_custom_call.1} parent=1 // pred_check
      _
    $region47: #{tpu_custom_call.1} parent=1 // pred_check_branch
      %126 = sbr.rel (0) target = $region49
    $region48: #{tpu_custom_call.1} parent=1 // pred_region
      %s128 = ssub.s32 64, 64
      %129 = vsyncadd [#allocation18], %s128
      %s131 = sshll.u32 [#allocation17], 4
      %s132 = int_to_ptr.vmem [resolvable:$true] %s131
      %134 = dma.hbm_to_vmem [thread:$0]  %s11, 64, %s132, [#allocation18]
    $region49: #{tpu_custom_call.1} parent=1 // pred_fallthru
      _
    // Predicated region
    $region50: #{tpu_custom_call.1} parent=1 // pred_check
      _
    $region51: #{tpu_custom_call.1} parent=1 // pred_check_branch
      %136 = sbr.rel (0) target = $region53
    $region52: #{tpu_custom_call.1} parent=1 // pred_region
      %s138 = ssub.s32 16, 16
      %139 = vsyncadd [#allocation18], %s138
      %s141 = sshll.u32 [#allocation19], 4
      %s142 = int_to_ptr.vmem [resolvable:$true] %s141
      %144 = dma.hbm_to_vmem [thread:$0]  %s12, 16, %s142, [#allocation18]
    $region53: #{tpu_custom_call.1} parent=1 // pred_fallthru
      _
    // Predicated region
    $region54: #{tpu_custom_call.1} parent=1 // pred_check
      _
    $region55: #{tpu_custom_call.1} parent=1 // pred_check_branch
      %146 = sbr.rel (0) target = $region57
    $region56: #{tpu_custom_call.1} parent=1 // pred_region
      %147 = dma.done [#allocation3], 256
    $region57: #{tpu_custom_call.1} parent=1 // pred_fallthru
      _
    // Predicated region
    $region58: #{tpu_custom_call.1} parent=1 // pred_check
      _
    $region59: #{tpu_custom_call.1} parent=1 // pred_check_branch
      %149 = sbr.rel (0) target = $region61
    $region60: #{tpu_custom_call.1} parent=1 // pred_region
      %150 = dma.done [#allocation6], 960
    $region61: #{tpu_custom_call.1} parent=1 // pred_fallthru
      _
    // Predicated region
    $region62: #{tpu_custom_call.1} parent=1 // pred_check
      _
    $region63: #{tpu_custom_call.1} parent=1 // pred_check_branch
      %152 = sbr.rel (0) target = $region65
    $region64: #{tpu_custom_call.1} parent=1 // pred_region
      %153 = dma.done [#allocation6], 48
    $region65: #{tpu_custom_call.1} parent=1 // pred_fallthru
      _
    // Predicated region
    $region66: #{tpu_custom_call.1} parent=1 // pred_check
      _
    $region67: #{tpu_custom_call.1} parent=1 // pred_check_branch
      %155 = sbr.rel (0) target = $region69
    $region68: #{tpu_custom_call.1} parent=1 // pred_region
      %156 = dma.done [#allocation9], 48
    $region69: #{tpu_custom_call.1} parent=1 // pred_fallthru
      _
    // Predicated region
    $region70: #{tpu_custom_call.1} parent=1 // pred_check
      _
    $region71: #{tpu_custom_call.1} parent=1 // pred_check_branch
      %158 = sbr.rel (0) target = $region73
    $region72: #{tpu_custom_call.1} parent=1 // pred_region
      %159 = dma.done [#allocation9], 48
    $region73: #{tpu_custom_call.1} parent=1 // pred_fallthru
      _
    // Predicated region
    $region74: #{tpu_custom_call.1} parent=1 // pred_check
      _
    $region75: #{tpu_custom_call.1} parent=1 // pred_check_branch
      %161 = sbr.rel (0) target = $region77
    $region76: #{tpu_custom_call.1} parent=1 // pred_region
      %162 = dma.done [#allocation12], 36864
    $region77: #{tpu_custom_call.1} parent=1 // pred_fallthru
      _
    // Predicated region
    $region78: #{tpu_custom_call.1} parent=1 // pred_check
      _
    $region79: #{tpu_custom_call.1} parent=1 // pred_check_branch
      %164 = sbr.rel (0) target = $region81
    $region80: #{tpu_custom_call.1} parent=1 // pred_region
      %165 = dma.done [#allocation12], 192
    $region81: #{tpu_custom_call.1} parent=1 // pred_fallthru
      _
    // Predicated region
    $region82: #{tpu_custom_call.1} parent=1 // pred_check
      _
    $region83: #{tpu_custom_call.1} parent=1 // pred_check_branch
      %167 = sbr.rel (0) target = $region85
    $region84: #{tpu_custom_call.1} parent=1 // pred_region
      %168 = dma.done [#allocation15], 16
    $region85: #{tpu_custom_call.1} parent=1 // pred_fallthru
      _
    // Predicated region
    $region86: #{tpu_custom_call.1} parent=1 // pred_check
      _
    $region87: #{tpu_custom_call.1} parent=1 // pred_check_branch
      %170 = sbr.rel (0) target = $region89
    $region88: #{tpu_custom_call.1} parent=1 // pred_region
      %171 = dma.done [#allocation15], 16
    $region89: #{tpu_custom_call.1} parent=1 // pred_fallthru
      _
    // Predicated region
    $region90: #{tpu_custom_call.1} parent=1 // pred_check
      _
    $region91: #{tpu_custom_call.1} parent=1 // pred_check_branch
      %173 = sbr.rel (0) target = $region93
    $region92: #{tpu_custom_call.1} parent=1 // pred_region
      %174 = dma.done [#allocation18], 64
    $region93: #{tpu_custom_call.1} parent=1 // pred_fallthru
      _
    // Predicated region
    $region94: #{tpu_custom_call.1} parent=1 // pred_check
      _
    $region95: #{tpu_custom_call.1} parent=1 // pred_check_branch
      %176 = sbr.rel (0) target = $region97
    $region96: #{tpu_custom_call.1} parent=1 // pred_region
      %177 = dma.done [#allocation18], 16
    $region97: #{tpu_custom_call.1} parent=1 // pred_fallthru
      _
    %v179 = vld [vmem:[#allocation2] sm:$0xff]
    %v180 = vld [vmem:[#allocation2 + $0x8] sm:$0xff]
    %v181 = vpack.c.bf16 %v180, %v179
    %v182 = vld [vmem:[#allocation5] sm:$0xff]
    %v183 = vld [vmem:[#allocation5 + $0x8] sm:$0xf]
    %v184 = vld [vmem:[#allocation5 + $0xc] sm:$0xff]
    %v185 = vld [vmem:[#allocation5 + $0x14] sm:$0xf]
    %v186 = vld [vmem:[#allocation5 + $0x18] sm:$0xff]
    %v187 = vld [vmem:[#allocation5 + $0x20] sm:$0xf]
    %v188 = vld [vmem:[#allocation5 + $0x24] sm:$0xff]
    %v189 = vld [vmem:[#allocation5 + $0x2c] sm:$0xf]
    %v190 = vld [vmem:[#allocation5 + $0x30] sm:$0xff]
    %v191 = vld [vmem:[#allocation5 + $0x38] sm:$0xf]
    %v192 = vld [vmem:[#allocation7] sm:$0x7]
    %v194 = vlaneseq
    %v195 = vshrl.u32 %v194, 7
    %v196 = vsub.s32 0, %v195
    %v197 = vrot.slane %v192, %v196
    %v198 = vlaneseq
    %v199 = vshrl.u32 %v198, 7
    %v200 = vsub.s32 1, %v199
    %v201 = vrot.slane %v192, %v200
    %v202 = vlaneseq
    %v203 = vshrl.u32 %v202, 7
    %v204 = vsub.s32 2, %v203
    %v205 = vrot.slane %v192, %v204
    %v219 = vunpack.c.l.b16 %v182
    %v220 = vunpack.c.h.b16 %v182
    %v221 = vunpack.c.l.b16 %v183
    %v222 = vunpack.c.l.b16 %v184
    %v223 = vunpack.c.h.b16 %v184
    %v224 = vunpack.c.l.b16 %v185
    %v225 = vunpack.c.l.b16 %v186
    %v226 = vunpack.c.h.b16 %v186
    %v227 = vunpack.c.l.b16 %v187
    %v228 = vunpack.c.l.b16 %v188
    %v229 = vunpack.c.h.b16 %v188
    %v230 = vunpack.c.l.b16 %v189
    %v231 = vunpack.c.l.b16 %v190
    %v232 = vunpack.c.h.b16 %v190
    %v233 = vunpack.c.l.b16 %v191
    %v234 = vpack.c.b16 %v222, %v219
    %v235 = vpack.c.b16 %v223, %v220
    %v236 = vpack.c.b16 %v224, %v221
    %v237 = vpack.c.b16 %v228, %v225
    %v238 = vpack.c.b16 %v229, %v226
    %v239 = vpack.c.b16 %v230, %v227
    %v240 = vpack.c.b16 %v231, %v231
    %v241 = vpack.c.b16 %v232, %v232
    %v242 = vpack.c.b16 %v233, %v233
    %vm249 = vcmask 326656
    %v251 = vsel %vm249, %v181, 0
    %vm253 = vcmask 1043456
    %v255 = vsel %vm253, %v240, 0
    %v258 = vsel %vm253, %v241, 0
    %v261 = vsel %vm253, %v242, 0
    %263 = vmatprep.subr.bf16.mxu0 %v235
    %264 = vmatpush1.bf16.msra.mxu0 %v234
    %265 = vmatprep.subr.bf16.mxu0 %v238
    %266 = vmatpush1.bf16.msra.mxu0 %v237
    %267 = vmatprep.subr.bf16.mxu0 %v258
    %268 = vmatpush1.bf16.msra.mxu0 %v255
    %269 = vmatprep.subr.bf16.mxu0 0
    %270 = vmatpush1.bf16.msra.mxu0 0
    %271 = vmatprep.subr.bf16.mxu0 0
    %272 = vmatpush1.bf16.msra.mxu0 0
    %273 = vmatprep.subr.bf16.mxu0 0
    %274 = vmatpush1.bf16.msra.mxu0 0
    %275 = vmatprep.subr.bf16.mxu0 0
    %276 = vmatpush1.bf16.msra.mxu0 0
    %277 = vmatprep.subr.bf16.mxu0 0
    %278 = vmatpush1.bf16.msra.mxu0 0
    %279 = vmatprep.subr.bf16.mxu0 0
    %280 = vmatpush1.bf16.msra.mxu0 0
    %281 = vmatprep.subr.bf16.mxu0 0
    %282 = vmatpush1.bf16.msra.mxu0 0
    %283 = vmatprep.subr.bf16.mxu0 0
    %284 = vmatpush1.bf16.msra.mxu0 0
    %285 = vmatprep.subr.bf16.mxu0 0
    %286 = vmatpush1.bf16.msra.mxu0 0
    %287 = vmatprep.subr.bf16.mxu0 0
    %288 = vmatpush1.bf16.msra.mxu0 0
    %289 = vmatprep.subr.bf16.mxu0 0
    %290 = vmatpush1.bf16.msra.mxu0 0
    %291 = vmatprep.subr.bf16.mxu0 0
    %292 = vmatpush1.bf16.msra.mxu0 0
    %293 = vmatprep.subr.bf16.mxu0 0
    %294 = vmatpush1.bf16.msra.mxu0 0
    %295 = vmatprep.mubr.bf16.mxu0 0
    %296 = vmatmul.mubr.bf16.gmra.mrb[0].mxu0 %v251
    %v297 = vpop.f32.mrb[0].mxu0
    %v298 = vadd.f32 %v197, %v297
    %v299 = vpop.f32.mrb[0].mxu0
    %v300 = vadd.f32 %v201, %v299
    %v301 = vpop.f32.mrb[0].mxu0
    %v302 = vadd.f32 %v197, %v301
    %v303 = vpop.f32.mrb[0].mxu0
    %v304 = vadd.f32 %v201, %v303
    %305 = vdwg.mxu0
    %306 = vmatprep.subr.bf16.mxu0 0
    %307 = vmatpush1.bf16.msra.mxu0 %v236
    %308 = vmatprep.subr.bf16.mxu0 0
    %309 = vmatpush1.bf16.msra.mxu0 %v239
    %310 = vmatprep.subr.bf16.mxu0 0
    %311 = vmatpush1.bf16.msra.mxu0 %v261
    %312 = vmatprep.subr.bf16.mxu0 0
    %313 = vmatpush1.bf16.msra.mxu0 0
    %314 = vmatprep.subr.bf16.mxu0 0
    %315 = vmatpush1.bf16.msra.mxu0 0
    %316 = vmatprep.subr.bf16.mxu0 0
    %317 = vmatpush1.bf16.msra.mxu0 0
    %318 = vmatprep.subr.bf16.mxu0 0
    %319 = vmatpush1.bf16.msra.mxu0 0
    %320 = vmatprep.subr.bf16.mxu0 0
    %321 = vmatpush1.bf16.msra.mxu0 0
    %322 = vmatprep.subr.bf16.mxu0 0
    %323 = vmatpush1.bf16.msra.mxu0 0
    %324 = vmatprep.subr.bf16.mxu0 0
    %325 = vmatpush1.bf16.msra.mxu0 0
    %326 = vmatprep.subr.bf16.mxu0 0
    %327 = vmatpush1.bf16.msra.mxu0 0
    %328 = vmatprep.subr.bf16.mxu0 0
    %329 = vmatpush1.bf16.msra.mxu0 0
    %330 = vmatprep.subr.bf16.mxu0 0
    %331 = vmatpush1.bf16.msra.mxu0 0
    %332 = vmatprep.subr.bf16.mxu0 0
    %333 = vmatpush1.bf16.msra.mxu0 0
    %334 = vmatprep.subr.bf16.mxu0 0
    %335 = vmatpush1.bf16.msra.mxu0 0
    %336 = vmatprep.subr.bf16.mxu0 0
    %337 = vmatpush1.bf16.msra.mxu0 0
    %338 = vmatprep.mubr.bf16.mxu0 0
    %339 = vmatmul.mubr.bf16.gmra.mrb[0].mxu0 %v251
    %v340 = vpop.f32.mrb[0].mxu0
    %v341 = vadd.f32 %v205, %v340
    %v342 = vpop.f32.mrb[0].mxu0
    %v343 = vpop.f32.mrb[0].mxu0
    %v344 = vadd.f32 %v205, %v343
    %v345 = vpop.f32.mrb[0].mxu0
    %346 = vdwg.mxu0
    %vm347 = vcmp.gt.f32.partialorder %v298, 0.0
    %vm348 = vcmp.gt.f32.partialorder %v300, 0.0
    %vm349 = vcmp.gt.f32.partialorder %v341, 0.0
    %vm350 = vcmp.gt.f32.partialorder %v302, 0.0
    %vm351 = vcmp.gt.f32.partialorder %v304, 0.0
    %vm352 = vcmp.gt.f32.partialorder %v344, 0.0
    %v353 = vmul.f32 %v298, 0.01
    %v354 = vmul.f32 %v300, 0.01
    %v355 = vmul.f32 %v341, 0.01
    %v356 = vmul.f32 %v302, 0.01
    %v357 = vmul.f32 %v304, 0.01
    %v358 = vmul.f32 %v344, 0.01
    %v359 = vsel %vm347, %v298, %v353
    %v360 = vsel %vm348, %v300, %v354
    %v361 = vsel %vm349, %v341, %v355
    %v362 = vsel %vm350, %v302, %v356
    %v363 = vsel %vm351, %v304, %v357
    %v364 = vsel %vm352, %v344, %v358
    %v365 = vld [vmem:[#allocation8] sm:$0x7]
    %v367 = vlaneseq
    %v368 = vshrl.u32 %v367, 7
    %v369 = vsub.s32 0, %v368
    %v370 = vrot.slane %v365, %v369
    %v371 = vlaneseq
    %v372 = vshrl.u32 %v371, 7
    %v373 = vsub.s32 1, %v372
    %v374 = vrot.slane %v365, %v373
    %v375 = vlaneseq
    %v376 = vshrl.u32 %v375, 7
    %v377 = vsub.s32 2, %v376
    %v378 = vrot.slane %v365, %v377
    %v382 = vmul.f32 %v359, %v370
    %v383 = vmul.f32 %v360, %v374
    %v384 = vmul.f32 %v361, %v378
    %v385 = vmul.f32 %v362, %v370
    %v386 = vmul.f32 %v363, %v374
    %v387 = vmul.f32 %v364, %v378
    %v388 = vld [vmem:[#allocation10] sm:$0x7]
    %v390 = vlaneseq
    %v391 = vshrl.u32 %v390, 7
    %v392 = vsub.s32 0, %v391
    %v393 = vrot.slane %v388, %v392
    %v394 = vlaneseq
    %v395 = vshrl.u32 %v394, 7
    %v396 = vsub.s32 1, %v395
    %v397 = vrot.slane %v388, %v396
    %v398 = vlaneseq
    %v399 = vshrl.u32 %v398, 7
    %v400 = vsub.s32 2, %v399
    %v401 = vrot.slane %v388, %v400
    %v405 = vadd.f32 %v382, %v393
    %v406 = vadd.f32 %v383, %v397
    %v407 = vadd.f32 %v384, %v401
    %v408 = vadd.f32 %v385, %v393
    %v409 = vadd.f32 %v386, %v397
    %v410 = vadd.f32 %v387, %v401
    %v411 = vpack.c.bf16 %v408, %v405
    %v412 = vpack.c.bf16 %v409, %v406
    %v413 = vpack.c.bf16 %v410, %v407
    %v414 = vld [vmem:[#allocation11] sm:$0xff]
    %v415 = vld [vmem:[#allocation11 + $0x8] sm:$0xf]
    %v416 = vld [vmem:[#allocation11 + $0xc] sm:$0xff]
    %v417 = vld [vmem:[#allocation11 + $0x14] sm:$0xf]
    %v418 = vld [vmem:[#allocation11 + $0x18] sm:$0xff]
    %v419 = vld [vmem:[#allocation11 + $0x20] sm:$0xf]
    %v420 = vld [vmem:[#allocation11 + $0x24] sm:$0xff]
    %v421 = vld [vmem:[#allocation11 + $0x2c] sm:$0xf]
    %v422 = vld [vmem:[#allocation11 + $0x30] sm:$0xff]
    %v423 = vld [vmem:[#allocation11 + $0x38] sm:$0xf]
    %v424 = vld [vmem:[#allocation11 + $0x3c] sm:$0xff]
    %v425 = vld [vmem:[#allocation11 + $0x44] sm:$0xf]
    %v426 = vld [vmem:[#allocation11 + $0x48] sm:$0xff]
    %v427 = vld [vmem:[#allocation11 + $0x50] sm:$0xf]
    %v428 = vld [vmem:[#allocation11 + $0x54] sm:$0xff]
    %v429 = vld [vmem:[#allocation11 + $0x5c] sm:$0xf]
    %v430 = vld [vmem:[#allocation11 + $0x60] sm:$0xff]
    %v431 = vld [vmem:[#allocation11 + $0x68] sm:$0xf]
    %v432 = vld [vmem:[#allocation11 + $0x6c] sm:$0xff]
    %v433 = vld [vmem:[#allocation11 + $0x74] sm:$0xf]
    %v434 = vld [vmem:[#allocation11 + $0x78] sm:$0xff]
    %v435 = vld [vmem:[#allocation11 + $0x80] sm:$0xf]
    %v436 = vld [vmem:[#allocation11 + $0x84] sm:$0xff]
    %v437 = vld [vmem:[#allocation11 + $0x8c] sm:$0xf]
    %v438 = vld [vmem:[#allocation11 + $0x90] sm:$0xff]
    %v439 = vld [vmem:[#allocation11 + $0x98] sm:$0xf]
    %v440 = vld [vmem:[#allocation11 + $0x9c] sm:$0xff]
    %v441 = vld [vmem:[#allocation11 + $0xa4] sm:$0xf]
    %v442 = vld [vmem:[#allocation11 + $0xa8] sm:$0xff]
    %v443 = vld [vmem:[#allocation11 + $0xb0] sm:$0xf]
    %v444 = vld [vmem:[#allocation11 + $0xb4] sm:$0xff]
    %v445 = vld [vmem:[#allocation11 + $0xbc] sm:$0xf]
    %v446 = vld [vmem:[#allocation11 + $0xc0] sm:$0xff]
    %v447 = vld [vmem:[#allocation11 + $0xc8] sm:$0xf]
    %v448 = vld [vmem:[#allocation11 + $0xcc] sm:$0xff]
    %v449 = vld [vmem:[#allocation11 + $0xd4] sm:$0xf]
    %v450 = vld [vmem:[#allocation11 + $0xd8] sm:$0xff]
    %v451 = vld [vmem:[#allocation11 + $0xe0] sm:$0xf]
    %v452 = vld [vmem:[#allocation11 + $0xe4] sm:$0xff]
    %v453 = vld [vmem:[#allocation11 + $0xec] sm:$0xf]
    %v454 = vld [vmem:[#allocation11 + $0xf0] sm:$0xff]
    %v455 = vld [vmem:[#allocation11 + $0xf8] sm:$0xf]
    %v456 = vld [vmem:[#allocation11 + $0xfc] sm:$0xff]
    %v457 = vld [vmem:[#allocation11 + $0x104] sm:$0xf]
    %v458 = vld [vmem:[#allocation11 + $0x108] sm:$0xff]
    %v459 = vld [vmem:[#allocation11 + $0x110] sm:$0xf]
    %v460 = vld [vmem:[#allocation11 + $0x114] sm:$0xff]
    %v461 = vld [vmem:[#allocation11 + $0x11c] sm:$0xf]
    %v462 = vld [vmem:[#allocation11 + $0x120] sm:$0xff]
    %v463 = vld [vmem:[#allocation11 + $0x128] sm:$0xf]
    %v464 = vld [vmem:[#allocation11 + $0x12c] sm:$0xff]
    %v465 = vld [vmem:[#allocation11 + $0x134] sm:$0xf]
    %v466 = vld [vmem:[#allocation11 + $0x138] sm:$0xff]
    %v467 = vld [vmem:[#allocation11 + $0x140] sm:$0xf]
    %v468 = vld [vmem:[#allocation11 + $0x144] sm:$0xff]
    %v469 = vld [vmem:[#allocation11 + $0x14c] sm:$0xf]
    %v470 = vld [vmem:[#allocation11 + $0x150] sm:$0xff]
    %v471 = vld [vmem:[#allocation11 + $0x158] sm:$0xf]
    %v472 = vld [vmem:[#allocation11 + $0x15c] sm:$0xff]
    %v473 = vld [vmem:[#allocation11 + $0x164] sm:$0xf]
    %v474 = vld [vmem:[#allocation11 + $0x168] sm:$0xff]
    %v475 = vld [vmem:[#allocation11 + $0x170] sm:$0xf]
    %v476 = vld [vmem:[#allocation11 + $0x174] sm:$0xff]
    %v477 = vld [vmem:[#allocation11 + $0x17c] sm:$0xf]
    %v478 = vld [vmem:[#allocation11 + $0x180] sm:$0xff]
    %v479 = vld [vmem:[#allocation11 + $0x188] sm:$0xf]
    %v480 = vld [vmem:[#allocation11 + $0x18c] sm:$0xff]
    %v481 = vld [vmem:[#allocation11 + $0x194] sm:$0xf]
    %v482 = vld [vmem:[#allocation11 + $0x198] sm:$0xff]
    %v483 = vld [vmem:[#allocation11 + $0x1a0] sm:$0xf]
    %v484 = vld [vmem:[#allocation11 + $0x1a4] sm:$0xff]
    %v485 = vld [vmem:[#allocation11 + $0x1ac] sm:$0xf]
    %v486 = vld [vmem:[#allocation11 + $0x1b0] sm:$0xff]
    %v487 = vld [vmem:[#allocation11 + $0x1b8] sm:$0xf]
    %v488 = vld [vmem:[#allocation11 + $0x1bc] sm:$0xff]
    %v489 = vld [vmem:[#allocation11 + $0x1c4] sm:$0xf]
    %v490 = vld [vmem:[#allocation11 + $0x1c8] sm:$0xff]
    %v491 = vld [vmem:[#allocation11 + $0x1d0] sm:$0xf]
    %v492 = vld [vmem:[#allocation11 + $0x1d4] sm:$0xff]
    %v493 = vld [vmem:[#allocation11 + $0x1dc] sm:$0xf]
    %v494 = vld [vmem:[#allocation11 + $0x1e0] sm:$0xff]
    %v495 = vld [vmem:[#allocation11 + $0x1e8] sm:$0xf]
    %v496 = vld [vmem:[#allocation11 + $0x1ec] sm:$0xff]
    %v497 = vld [vmem:[#allocation11 + $0x1f4] sm:$0xf]
    %v498 = vld [vmem:[#allocation11 + $0x1f8] sm:$0xff]
    %v499 = vld [vmem:[#allocation11 + $0x200] sm:$0xf]
    %v500 = vld [vmem:[#allocation11 + $0x204] sm:$0xff]
    %v501 = vld [vmem:[#allocation11 + $0x20c] sm:$0xf]
    %v502 = vld [vmem:[#allocation11 + $0x210] sm:$0xff]
    %v503 = vld [vmem:[#allocation11 + $0x218] sm:$0xf]
    %v504 = vld [vmem:[#allocation11 + $0x21c] sm:$0xff]
    %v505 = vld [vmem:[#allocation11 + $0x224] sm:$0xf]
    %v506 = vld [vmem:[#allocation11 + $0x228] sm:$0xff]
    %v507 = vld [vmem:[#allocation11 + $0x230] sm:$0xf]
    %v508 = vld [vmem:[#allocation11 + $0x234] sm:$0xff]
    %v509 = vld [vmem:[#allocation11 + $0x23c] sm:$0xf]
    %v510 = vld [vmem:[#allocation13] ss:$4 sm:$0x7]
    %v512 = vlaneseq
    %v513 = vshrl.u32 %v512, 7
    %v514 = vsub.s32 0, %v513
    %v515 = vrot.slane %v510, %v514
    %v516 = vlaneseq
    %v517 = vshrl.u32 %v516, 7
    %v518 = vsub.s32 1, %v517
    %v519 = vrot.slane %v510, %v518
    %v520 = vlaneseq
    %v521 = vshrl.u32 %v520, 7
    %v522 = vsub.s32 2, %v521
    %v523 = vrot.slane %v510, %v522
    %v623 = vunpack.c.l.b16 %v414
    %v624 = vunpack.c.h.b16 %v414
    %v625 = vunpack.c.l.b16 %v415
    %v626 = vunpack.c.l.b16 %v416
    %v627 = vunpack.c.h.b16 %v416
    %v628 = vunpack.c.l.b16 %v417
    %v629 = vunpack.c.l.b16 %v418
    %v630 = vunpack.c.h.b16 %v418
    %v631 = vunpack.c.l.b16 %v419
    %v632 = vunpack.c.l.b16 %v420
    %v633 = vunpack.c.h.b16 %v420
    %v634 = vunpack.c.l.b16 %v421
    %v635 = vunpack.c.l.b16 %v422
    %v636 = vunpack.c.h.b16 %v422
    %v637 = vunpack.c.l.b16 %v423
    %v638 = vunpack.c.l.b16 %v424
    %v639 = vunpack.c.h.b16 %v424
    %v640 = vunpack.c.l.b16 %v425
    %v641 = vunpack.c.l.b16 %v426
    %v642 = vunpack.c.h.b16 %v426
    %v643 = vunpack.c.l.b16 %v427
    %v644 = vunpack.c.l.b16 %v428
    %v645 = vunpack.c.h.b16 %v428
    %v646 = vunpack.c.l.b16 %v429
    %v647 = vunpack.c.l.b16 %v430
    %v648 = vunpack.c.h.b16 %v430
    %v649 = vunpack.c.l.b16 %v431
    %v650 = vunpack.c.l.b16 %v432
    %v651 = vunpack.c.h.b16 %v432
    %v652 = vunpack.c.l.b16 %v433
    %v653 = vunpack.c.l.b16 %v434
    %v654 = vunpack.c.h.b16 %v434
    %v655 = vunpack.c.l.b16 %v435
    %v656 = vunpack.c.l.b16 %v436
    %v657 = vunpack.c.h.b16 %v436
    %v658 = vunpack.c.l.b16 %v437
    %v659 = vunpack.c.l.b16 %v438
    %v660 = vunpack.c.h.b16 %v438
    %v661 = vunpack.c.l.b16 %v439
    %v662 = vunpack.c.l.b16 %v440
    %v663 = vunpack.c.h.b16 %v440
    %v664 = vunpack.c.l.b16 %v441
    %v665 = vunpack.c.l.b16 %v442
    %v666 = vunpack.c.h.b16 %v442
    %v667 = vunpack.c.l.b16 %v443
    %v668 = vunpack.c.l.b16 %v444
    %v669 = vunpack.c.h.b16 %v444
    %v670 = vunpack.c.l.b16 %v445
    %v671 = vunpack.c.l.b16 %v446
    %v672 = vunpack.c.h.b16 %v446
    %v673 = vunpack.c.l.b16 %v447
    %v674 = vunpack.c.l.b16 %v448
    %v675 = vunpack.c.h.b16 %v448
    %v676 = vunpack.c.l.b16 %v449
    %v677 = vunpack.c.l.b16 %v450
    %v678 = vunpack.c.h.b16 %v450
    %v679 = vunpack.c.l.b16 %v451
    %v680 = vunpack.c.l.b16 %v452
    %v681 = vunpack.c.h.b16 %v452
    %v682 = vunpack.c.l.b16 %v453
    %v683 = vunpack.c.l.b16 %v454
    %v684 = vunpack.c.h.b16 %v454
    %v685 = vunpack.c.l.b16 %v455
    %v686 = vunpack.c.l.b16 %v456
    %v687 = vunpack.c.h.b16 %v456
    %v688 = vunpack.c.l.b16 %v457
    %v689 = vunpack.c.l.b16 %v458
    %v690 = vunpack.c.h.b16 %v458
    %v691 = vunpack.c.l.b16 %v459
    %v692 = vunpack.c.l.b16 %v460
    %v693 = vunpack.c.h.b16 %v460
    %v694 = vunpack.c.l.b16 %v461
    %v695 = vunpack.c.l.b16 %v462
    %v696 = vunpack.c.h.b16 %v462
    %v697 = vunpack.c.l.b16 %v463
    %v698 = vunpack.c.l.b16 %v464
    %v699 = vunpack.c.h.b16 %v464
    %v700 = vunpack.c.l.b16 %v465
    %v701 = vunpack.c.l.b16 %v466
    %v702 = vunpack.c.h.b16 %v466
    %v703 = vunpack.c.l.b16 %v467
    %v704 = vunpack.c.l.b16 %v468
    %v705 = vunpack.c.h.b16 %v468
    %v706 = vunpack.c.l.b16 %v469
    %v707 = vunpack.c.l.b16 %v470
    %v708 = vunpack.c.h.b16 %v470
    %v709 = vunpack.c.l.b16 %v471
    %v710 = vunpack.c.l.b16 %v472
    %v711 = vunpack.c.h.b16 %v472
    %v712 = vunpack.c.l.b16 %v473
    %v713 = vunpack.c.l.b16 %v474
    %v714 = vunpack.c.h.b16 %v474
    %v715 = vunpack.c.l.b16 %v475
    %v716 = vunpack.c.l.b16 %v476
    %v717 = vunpack.c.h.b16 %v476
    %v718 = vunpack.c.l.b16 %v477
    %v719 = vunpack.c.l.b16 %v478
    %v720 = vunpack.c.h.b16 %v478
    %v721 = vunpack.c.l.b16 %v479
    %v722 = vunpack.c.l.b16 %v480
    %v723 = vunpack.c.h.b16 %v480
    %v724 = vunpack.c.l.b16 %v481
    %v725 = vunpack.c.l.b16 %v482
    %v726 = vunpack.c.h.b16 %v482
    %v727 = vunpack.c.l.b16 %v483
    %v728 = vunpack.c.l.b16 %v484
    %v729 = vunpack.c.h.b16 %v484
    %v730 = vunpack.c.l.b16 %v485
    %v731 = vunpack.c.l.b16 %v486
    %v732 = vunpack.c.h.b16 %v486
    %v733 = vunpack.c.l.b16 %v487
    %v734 = vunpack.c.l.b16 %v488
    %v735 = vunpack.c.h.b16 %v488
    %v736 = vunpack.c.l.b16 %v489
    %v737 = vunpack.c.l.b16 %v490
    %v738 = vunpack.c.h.b16 %v490
    %v739 = vunpack.c.l.b16 %v491
    %v740 = vunpack.c.l.b16 %v492
    %v741 = vunpack.c.h.b16 %v492
    %v742 = vunpack.c.l.b16 %v493
    %v743 = vunpack.c.l.b16 %v494
    %v744 = vunpack.c.h.b16 %v494
    %v745 = vunpack.c.l.b16 %v495
    %v746 = vunpack.c.l.b16 %v496
    %v747 = vunpack.c.h.b16 %v496
    %v748 = vunpack.c.l.b16 %v497
    %v749 = vunpack.c.l.b16 %v498
    %v750 = vunpack.c.h.b16 %v498
    %v751 = vunpack.c.l.b16 %v499
    %v752 = vunpack.c.l.b16 %v500
    %v753 = vunpack.c.h.b16 %v500
    %v754 = vunpack.c.l.b16 %v501
    %v755 = vunpack.c.l.b16 %v502
    %v756 = vunpack.c.h.b16 %v502
    %v757 = vunpack.c.l.b16 %v503
    %v758 = vunpack.c.l.b16 %v504
    %v759 = vunpack.c.h.b16 %v504
    %v760 = vunpack.c.l.b16 %v505
    %v761 = vunpack.c.l.b16 %v506
    %v762 = vunpack.c.h.b16 %v506
    %v763 = vunpack.c.l.b16 %v507
    %v764 = vunpack.c.l.b16 %v508
    %v765 = vunpack.c.h.b16 %v508
    %v766 = vunpack.c.l.b16 %v509
    %v767 = vpack.c.b16 %v626, %v623
    %v768 = vpack.c.b16 %v627, %v624
    %v769 = vpack.c.b16 %v628, %v625
    %v770 = vpack.c.b16 %v632, %v629
    %v771 = vpack.c.b16 %v633, %v630
    %v772 = vpack.c.b16 %v634, %v631
    %v773 = vpack.c.b16 %v638, %v635
    %v774 = vpack.c.b16 %v639, %v636
    %v775 = vpack.c.b16 %v640, %v637
    %v776 = vpack.c.b16 %v644, %v641
    %v777 = vpack.c.b16 %v645, %v642
    %v778 = vpack.c.b16 %v646, %v643
    %v779 = vpack.c.b16 %v650, %v647
    %v780 = vpack.c.b16 %v651, %v648
    %v781 = vpack.c.b16 %v652, %v649
    %v782 = vpack.c.b16 %v656, %v653
    %v783 = vpack.c.b16 %v657, %v654
    %v784 = vpack.c.b16 %v658, %v655
    %v785 = vpack.c.b16 %v662, %v659
    %v786 = vpack.c.b16 %v663, %v660
    %v787 = vpack.c.b16 %v664, %v661
    %v788 = vpack.c.b16 %v668, %v665
    %v789 = vpack.c.b16 %v669, %v666
    %v790 = vpack.c.b16 %v670, %v667
    %v791 = vpack.c.b16 %v674, %v671
    %v792 = vpack.c.b16 %v675, %v672
    %v793 = vpack.c.b16 %v676, %v673
    %v794 = vpack.c.b16 %v680, %v677
    %v795 = vpack.c.b16 %v681, %v678
    %v796 = vpack.c.b16 %v682, %v679
    %v797 = vpack.c.b16 %v686, %v683
    %v798 = vpack.c.b16 %v687, %v684
    %v799 = vpack.c.b16 %v688, %v685
    %v800 = vpack.c.b16 %v692, %v689
    %v801 = vpack.c.b16 %v693, %v690
    %v802 = vpack.c.b16 %v694, %v691
    %v803 = vpack.c.b16 %v698, %v695
    %v804 = vpack.c.b16 %v699, %v696
    %v805 = vpack.c.b16 %v700, %v697
    %v806 = vpack.c.b16 %v704, %v701
    %v807 = vpack.c.b16 %v705, %v702
    %v808 = vpack.c.b16 %v706, %v703
    %v809 = vpack.c.b16 %v710, %v707
    %v810 = vpack.c.b16 %v711, %v708
    %v811 = vpack.c.b16 %v712, %v709
    %v812 = vpack.c.b16 %v716, %v713
    %v813 = vpack.c.b16 %v717, %v714
    %v814 = vpack.c.b16 %v718, %v715
    %v815 = vpack.c.b16 %v722, %v719
    %v816 = vpack.c.b16 %v723, %v720
    %v817 = vpack.c.b16 %v724, %v721
    %v818 = vpack.c.b16 %v728, %v725
    %v819 = vpack.c.b16 %v729, %v726
    %v820 = vpack.c.b16 %v730, %v727
    %v821 = vpack.c.b16 %v734, %v731
    %v822 = vpack.c.b16 %v735, %v732
    %v823 = vpack.c.b16 %v736, %v733
    %v824 = vpack.c.b16 %v740, %v737
    %v825 = vpack.c.b16 %v741, %v738
    %v826 = vpack.c.b16 %v742, %v739
    %v827 = vpack.c.b16 %v746, %v743
    %v828 = vpack.c.b16 %v747, %v744
    %v829 = vpack.c.b16 %v748, %v745
    %v830 = vpack.c.b16 %v752, %v749
    %v831 = vpack.c.b16 %v753, %v750
    %v832 = vpack.c.b16 %v754, %v751
    %v833 = vpack.c.b16 %v758, %v755
    %v834 = vpack.c.b16 %v759, %v756
    %v835 = vpack.c.b16 %v760, %v757
    %v836 = vpack.c.b16 %v764, %v761
    %v837 = vpack.c.b16 %v765, %v762
    %v838 = vpack.c.b16 %v766, %v763
    %911 = vmatprep.subr.bf16.mxu0 %v768
    %912 = vmatpush1.bf16.msra.mxu0 %v767
    %913 = vmatprep.subr.bf16.mxu0 %v771
    %914 = vmatpush1.bf16.msra.mxu0 %v770
    %915 = vmatprep.subr.bf16.mxu0 %v774
    %916 = vmatpush1.bf16.msra.mxu0 %v773
    %917 = vmatprep.subr.bf16.mxu0 %v777
    %918 = vmatpush1.bf16.msra.mxu0 %v776
    %919 = vmatprep.subr.bf16.mxu0 %v780
    %920 = vmatpush1.bf16.msra.mxu0 %v779
    %921 = vmatprep.subr.bf16.mxu0 %v783
    %922 = vmatpush1.bf16.msra.mxu0 %v782
    %923 = vmatprep.subr.bf16.mxu0 %v786
    %924 = vmatpush1.bf16.msra.mxu0 %v785
    %925 = vmatprep.subr.bf16.mxu0 %v789
    %926 = vmatpush1.bf16.msra.mxu0 %v788
    %927 = vmatprep.subr.bf16.mxu0 %v792
    %928 = vmatpush1.bf16.msra.mxu0 %v791
    %929 = vmatprep.subr.bf16.mxu0 %v795
    %930 = vmatpush1.bf16.msra.mxu0 %v794
    %931 = vmatprep.subr.bf16.mxu0 %v798
    %932 = vmatpush1.bf16.msra.mxu0 %v797
    %933 = vmatprep.subr.bf16.mxu0 %v801
    %934 = vmatpush1.bf16.msra.mxu0 %v800
    %935 = vmatprep.subr.bf16.mxu0 %v804
    %936 = vmatpush1.bf16.msra.mxu0 %v803
    %937 = vmatprep.subr.bf16.mxu0 %v807
    %938 = vmatpush1.bf16.msra.mxu0 %v806
    %939 = vmatprep.subr.bf16.mxu0 %v810
    %940 = vmatpush1.bf16.msra.mxu0 %v809
    %941 = vmatprep.subr.bf16.mxu0 %v813
    %942 = vmatpush1.bf16.msra.mxu0 %v812
    %943 = vmatprep.mubr.bf16.mxu0 %v412
    %944 = vmatmul.mubr.bf16.gmra.mrb[0].mxu0 %v411
    %v945 = vpop.f32.mrb[0].mxu0
    %v946 = vadd.f32 %v515, %v945
    %v947 = vpop.f32.mrb[0].mxu0
    %v948 = vadd.f32 %v519, %v947
    %v949 = vpop.f32.mrb[0].mxu0
    %v950 = vadd.f32 %v515, %v949
    %v951 = vpop.f32.mrb[0].mxu0
    %v952 = vadd.f32 %v519, %v951
    %953 = vdwg.mxu0
    %954 = vmatprep.subr.bf16.mxu0 %v816
    %955 = vmatpush1.bf16.msra.mxu0 %v815
    %956 = vmatprep.subr.bf16.mxu0 %v819
    %957 = vmatpush1.bf16.msra.mxu0 %v818
    %958 = vmatprep.subr.bf16.mxu0 %v822
    %959 = vmatpush1.bf16.msra.mxu0 %v821
    %960 = vmatprep.subr.bf16.mxu0 %v825
    %961 = vmatpush1.bf16.msra.mxu0 %v824
    %962 = vmatprep.subr.bf16.mxu0 %v828
    %963 = vmatpush1.bf16.msra.mxu0 %v827
    %964 = vmatprep.subr.bf16.mxu0 %v831
    %965 = vmatpush1.bf16.msra.mxu0 %v830
    %966 = vmatprep.subr.bf16.mxu0 %v834
    %967 = vmatpush1.bf16.msra.mxu0 %v833
    %968 = vmatprep.subr.bf16.mxu0 %v837
    %969 = vmatpush1.bf16.msra.mxu0 %v836
    %970 = vmatprep.subr.bf16.mxu0 0
    %971 = vmatpush1.bf16.msra.mxu0 0
    %972 = vmatprep.subr.bf16.mxu0 0
    %973 = vmatpush1.bf16.msra.mxu0 0
    %974 = vmatprep.subr.bf16.mxu0 0
    %975 = vmatpush1.bf16.msra.mxu0 0
    %976 = vmatprep.subr.bf16.mxu0 0
    %977 = vmatpush1.bf16.msra.mxu0 0
    %978 = vmatprep.subr.bf16.mxu0 0
    %979 = vmatpush1.bf16.msra.mxu0 0
    %980 = vmatprep.subr.bf16.mxu0 0
    %981 = vmatpush1.bf16.msra.mxu0 0
    %982 = vmatprep.subr.bf16.mxu0 0
    %983 = vmatpush1.bf16.msra.mxu0 0
    %984 = vmatprep.subr.bf16.mxu0 0
    %985 = vmatpush1.bf16.msra.mxu0 0
    %986 = vmatprep.mubr.bf16.mxu0 0
    %987 = vmatmul.mubr.bf16.gmra.mrb[0].mxu0 %v413
    %v988 = vpop.f32.mrb[0].mxu0
    %v989 = vadd.f32 %v946, %v988
    %v990 = vpop.f32.mrb[0].mxu0
    %v991 = vadd.f32 %v948, %v990
    %v992 = vpop.f32.mrb[0].mxu0
    %v993 = vadd.f32 %v950, %v992
    %v994 = vpop.f32.mrb[0].mxu0
    %v995 = vadd.f32 %v952, %v994
    %996 = vdwg.mxu0
    %997 = vmatprep.subr.bf16.mxu0 0
    %998 = vmatpush1.bf16.msra.mxu0 %v769
    %999 = vmatprep.subr.bf16.mxu0 0
    %1000 = vmatpush1.bf16.msra.mxu0 %v772
    %1001 = vmatprep.subr.bf16.mxu0 0
    %1002 = vmatpush1.bf16.msra.mxu0 %v775
    %1003 = vmatprep.subr.bf16.mxu0 0
    %1004 = vmatpush1.bf16.msra.mxu0 %v778
    %1005 = vmatprep.subr.bf16.mxu0 0
    %1006 = vmatpush1.bf16.msra.mxu0 %v781
    %1007 = vmatprep.subr.bf16.mxu0 0
    %1008 = vmatpush1.bf16.msra.mxu0 %v784
    %1009 = vmatprep.subr.bf16.mxu0 0
    %1010 = vmatpush1.bf16.msra.mxu0 %v787
    %1011 = vmatprep.subr.bf16.mxu0 0
    %1012 = vmatpush1.bf16.msra.mxu0 %v790
    %1013 = vmatprep.subr.bf16.mxu0 0
    %1014 = vmatpush1.bf16.msra.mxu0 %v793
    %1015 = vmatprep.subr.bf16.mxu0 0
    %1016 = vmatpush1.bf16.msra.mxu0 %v796
    %1017 = vmatprep.subr.bf16.mxu0 0
    %1018 = vmatpush1.bf16.msra.mxu0 %v799
    %1019 = vmatprep.subr.bf16.mxu0 0
    %1020 = vmatpush1.bf16.msra.mxu0 %v802
    %1021 = vmatprep.subr.bf16.mxu0 0
    %1022 = vmatpush1.bf16.msra.mxu0 %v805
    %1023 = vmatprep.subr.bf16.mxu0 0
    %1024 = vmatpush1.bf16.msra.mxu0 %v808
    %1025 = vmatprep.subr.bf16.mxu0 0
    %1026 = vmatpush1.bf16.msra.mxu0 %v811
    %1027 = vmatprep.subr.bf16.mxu0 0
    %1028 = vmatpush1.bf16.msra.mxu0 %v814
    %1029 = vmatprep.mubr.bf16.mxu0 %v412
    %1030 = vmatmul.mubr.bf16.gmra.mrb[0].mxu0 %v411
    %v1031 = vpop.f32.mrb[0].mxu0
    %v1032 = vadd.f32 %v523, %v1031
    %v1033 = vpop.f32.mrb[0].mxu0
    %v1034 = vpop.f32.mrb[0].mxu0
    %v1035 = vadd.f32 %v523, %v1034
    %v1036 = vpop.f32.mrb[0].mxu0
    %1037 = vdwg.mxu0
    %1038 = vmatprep.subr.bf16.mxu0 0
    %1039 = vmatpush1.bf16.msra.mxu0 %v817
    %1040 = vmatprep.subr.bf16.mxu0 0
    %1041 = vmatpush1.bf16.msra.mxu0 %v820
    %1042 = vmatprep.subr.bf16.mxu0 0
    %1043 = vmatpush1.bf16.msra.mxu0 %v823
    %1044 = vmatprep.subr.bf16.mxu0 0
    %1045 = vmatpush1.bf16.msra.mxu0 %v826
    %1046 = vmatprep.subr.bf16.mxu0 0
    %1047 = vmatpush1.bf16.msra.mxu0 %v829
    %1048 = vmatprep.subr.bf16.mxu0 0
    %1049 = vmatpush1.bf16.msra.mxu0 %v832
    %1050 = vmatprep.subr.bf16.mxu0 0
    %1051 = vmatpush1.bf16.msra.mxu0 %v835
    %1052 = vmatprep.subr.bf16.mxu0 0
    %1053 = vmatpush1.bf16.msra.mxu0 %v838
    %1054 = vmatprep.subr.bf16.mxu0 0
    %1055 = vmatpush1.bf16.msra.mxu0 0
    %1056 = vmatprep.subr.bf16.mxu0 0
    %1057 = vmatpush1.bf16.msra.mxu0 0
    %1058 = vmatprep.subr.bf16.mxu0 0
    %1059 = vmatpush1.bf16.msra.mxu0 0
    %1060 = vmatprep.subr.bf16.mxu0 0
    %1061 = vmatpush1.bf16.msra.mxu0 0
    %1062 = vmatprep.subr.bf16.mxu0 0
    %1063 = vmatpush1.bf16.msra.mxu0 0
    %1064 = vmatprep.subr.bf16.mxu0 0
    %1065 = vmatpush1.bf16.msra.mxu0 0
    %1066 = vmatprep.subr.bf16.mxu0 0
    %1067 = vmatpush1.bf16.msra.mxu0 0
    %1068 = vmatprep.subr.bf16.mxu0 0
    %1069 = vmatpush1.bf16.msra.mxu0 0
    %1070 = vmatprep.mubr.bf16.mxu0 0
    %1071 = vmatmul.mubr.bf16.gmra.mrb[0].mxu0 %v413
    %v1072 = vpop.f32.mrb[0].mxu0
    %v1073 = vadd.f32 %v1032, %v1072
    %v1074 = vpop.f32.mrb[0].mxu0
    %v1075 = vpop.f32.mrb[0].mxu0
    %v1076 = vadd.f32 %v1035, %v1075
    %v1077 = vpop.f32.mrb[0].mxu0
    %1078 = vdwg.mxu0
    %v1079 = vadd.f32 %v989, %v405
    %v1080 = vadd.f32 %v991, %v406
    %v1081 = vadd.f32 %v1073, %v407
    %v1082 = vadd.f32 %v993, %v408
    %v1083 = vadd.f32 %v995, %v409
    %v1084 = vadd.f32 %v1076, %v410
    %v1085 = vmax.f32 %v1079, 0.0
    %v1086 = vmax.f32 %v1080, 0.0
    %v1087 = vmax.f32 %v1081, 0.0
    %v1088 = vmax.f32 %v1082, 0.0
    %v1089 = vmax.f32 %v1083, 0.0
    %v1090 = vmax.f32 %v1084, 0.0
    %v1091 = vpack.c.bf16 %v1088, %v1085
    %v1092 = vpack.c.bf16 %v1089, %v1086
    %v1093 = vpack.c.bf16 %v1090, %v1087
    %s1094 = scalar_lea.vmem [#allocation11], 576
    %v1095 = vld [vmem:[%s1094] sm:$0xff]
    %v1096 = vld [vmem:[%s1094 + $0x8] sm:$0xf]
    %v1097 = vld [vmem:[%s1094 + $0xc] sm:$0xff]
    %v1098 = vld [vmem:[%s1094 + $0x14] sm:$0xf]
    %v1099 = vld [vmem:[%s1094 + $0x18] sm:$0xff]
    %v1100 = vld [vmem:[%s1094 + $0x20] sm:$0xf]
    %v1101 = vld [vmem:[%s1094 + $0x24] sm:$0xff]
    %v1102 = vld [vmem:[%s1094 + $0x2c] sm:$0xf]
    %v1103 = vld [vmem:[%s1094 + $0x30] sm:$0xff]
    %v1104 = vld [vmem:[%s1094 + $0x38] sm:$0xf]
    %v1105 = vld [vmem:[%s1094 + $0x3c] sm:$0xff]
    %v1106 = vld [vmem:[%s1094 + $0x44] sm:$0xf]
    %v1107 = vld [vmem:[%s1094 + $0x48] sm:$0xff]
    %v1108 = vld [vmem:[%s1094 + $0x50] sm:$0xf]
    %v1109 = vld [vmem:[%s1094 + $0x54] sm:$0xff]
    %v1110 = vld [vmem:[%s1094 + $0x5c] sm:$0xf]
    %v1111 = vld [vmem:[%s1094 + $0x60] sm:$0xff]
    %v1112 = vld [vmem:[%s1094 + $0x68] sm:$0xf]
    %v1113 = vld [vmem:[%s1094 + $0x6c] sm:$0xff]
    %v1114 = vld [vmem:[%s1094 + $0x74] sm:$0xf]
    %v1115 = vld [vmem:[%s1094 + $0x78] sm:$0xff]
    %v1116 = vld [vmem:[%s1094 + $0x80] sm:$0xf]
    %v1117 = vld [vmem:[%s1094 + $0x84] sm:$0xff]
    %v1118 = vld [vmem:[%s1094 + $0x8c] sm:$0xf]
    %v1119 = vld [vmem:[%s1094 + $0x90] sm:$0xff]
    %v1120 = vld [vmem:[%s1094 + $0x98] sm:$0xf]
    %v1121 = vld [vmem:[%s1094 + $0x9c] sm:$0xff]
    %v1122 = vld [vmem:[%s1094 + $0xa4] sm:$0xf]
    %v1123 = vld [vmem:[%s1094 + $0xa8] sm:$0xff]
    %v1124 = vld [vmem:[%s1094 + $0xb0] sm:$0xf]
    %v1125 = vld [vmem:[%s1094 + $0xb4] sm:$0xff]
    %v1126 = vld [vmem:[%s1094 + $0xbc] sm:$0xf]
    %v1127 = vld [vmem:[%s1094 + $0xc0] sm:$0xff]
    %v1128 = vld [vmem:[%s1094 + $0xc8] sm:$0xf]
    %v1129 = vld [vmem:[%s1094 + $0xcc] sm:$0xff]
    %v1130 = vld [vmem:[%s1094 + $0xd4] sm:$0xf]
    %v1131 = vld [vmem:[%s1094 + $0xd8] sm:$0xff]
    %v1132 = vld [vmem:[%s1094 + $0xe0] sm:$0xf]
    %v1133 = vld [vmem:[%s1094 + $0xe4] sm:$0xff]
    %v1134 = vld [vmem:[%s1094 + $0xec] sm:$0xf]
    %v1135 = vld [vmem:[%s1094 + $0xf0] sm:$0xff]
    %v1136 = vld [vmem:[%s1094 + $0xf8] sm:$0xf]
    %v1137 = vld [vmem:[%s1094 + $0xfc] sm:$0xff]
    %v1138 = vld [vmem:[%s1094 + $0x104] sm:$0xf]
    %v1139 = vld [vmem:[%s1094 + $0x108] sm:$0xff]
    %v1140 = vld [vmem:[%s1094 + $0x110] sm:$0xf]
    %v1141 = vld [vmem:[%s1094 + $0x114] sm:$0xff]
    %v1142 = vld [vmem:[%s1094 + $0x11c] sm:$0xf]
    %v1143 = vld [vmem:[%s1094 + $0x120] sm:$0xff]
    %v1144 = vld [vmem:[%s1094 + $0x128] sm:$0xf]
    %v1145 = vld [vmem:[%s1094 + $0x12c] sm:$0xff]
    %v1146 = vld [vmem:[%s1094 + $0x134] sm:$0xf]
    %v1147 = vld [vmem:[%s1094 + $0x138] sm:$0xff]
    %v1148 = vld [vmem:[%s1094 + $0x140] sm:$0xf]
    %v1149 = vld [vmem:[%s1094 + $0x144] sm:$0xff]
    %v1150 = vld [vmem:[%s1094 + $0x14c] sm:$0xf]
    %v1151 = vld [vmem:[%s1094 + $0x150] sm:$0xff]
    %v1152 = vld [vmem:[%s1094 + $0x158] sm:$0xf]
    %v1153 = vld [vmem:[%s1094 + $0x15c] sm:$0xff]
    %v1154 = vld [vmem:[%s1094 + $0x164] sm:$0xf]
    %v1155 = vld [vmem:[%s1094 + $0x168] sm:$0xff]
    %v1156 = vld [vmem:[%s1094 + $0x170] sm:$0xf]
    %v1157 = vld [vmem:[%s1094 + $0x174] sm:$0xff]
    %v1158 = vld [vmem:[%s1094 + $0x17c] sm:$0xf]
    %v1159 = vld [vmem:[%s1094 + $0x180] sm:$0xff]
    %v1160 = vld [vmem:[%s1094 + $0x188] sm:$0xf]
    %v1161 = vld [vmem:[%s1094 + $0x18c] sm:$0xff]
    %v1162 = vld [vmem:[%s1094 + $0x194] sm:$0xf]
    %v1163 = vld [vmem:[%s1094 + $0x198] sm:$0xff]
    %v1164 = vld [vmem:[%s1094 + $0x1a0] sm:$0xf]
    %v1165 = vld [vmem:[%s1094 + $0x1a4] sm:$0xff]
    %v1166 = vld [vmem:[%s1094 + $0x1ac] sm:$0xf]
    %v1167 = vld [vmem:[%s1094 + $0x1b0] sm:$0xff]
    %v1168 = vld [vmem:[%s1094 + $0x1b8] sm:$0xf]
    %v1169 = vld [vmem:[%s1094 + $0x1bc] sm:$0xff]
    %v1170 = vld [vmem:[%s1094 + $0x1c4] sm:$0xf]
    %v1171 = vld [vmem:[%s1094 + $0x1c8] sm:$0xff]
    %v1172 = vld [vmem:[%s1094 + $0x1d0] sm:$0xf]
    %v1173 = vld [vmem:[%s1094 + $0x1d4] sm:$0xff]
    %v1174 = vld [vmem:[%s1094 + $0x1dc] sm:$0xf]
    %v1175 = vld [vmem:[%s1094 + $0x1e0] sm:$0xff]
    %v1176 = vld [vmem:[%s1094 + $0x1e8] sm:$0xf]
    %v1177 = vld [vmem:[%s1094 + $0x1ec] sm:$0xff]
    %v1178 = vld [vmem:[%s1094 + $0x1f4] sm:$0xf]
    %v1179 = vld [vmem:[%s1094 + $0x1f8] sm:$0xff]
    %v1180 = vld [vmem:[%s1094 + $0x200] sm:$0xf]
    %v1181 = vld [vmem:[%s1094 + $0x204] sm:$0xff]
    %v1182 = vld [vmem:[%s1094 + $0x20c] sm:$0xf]
    %v1183 = vld [vmem:[%s1094 + $0x210] sm:$0xff]
    %v1184 = vld [vmem:[%s1094 + $0x218] sm:$0xf]
    %v1185 = vld [vmem:[%s1094 + $0x21c] sm:$0xff]
    %v1186 = vld [vmem:[%s1094 + $0x224] sm:$0xf]
    %v1187 = vld [vmem:[%s1094 + $0x228] sm:$0xff]
    %v1188 = vld [vmem:[%s1094 + $0x230] sm:$0xf]
    %v1189 = vld [vmem:[%s1094 + $0x234] sm:$0xff]
    %v1190 = vld [vmem:[%s1094 + $0x23c] sm:$0xf]
    %s1191 = scalar_lea.vmem [#allocation13], 1
    %v1192 = vld [vmem:[%s1191] ss:$4 sm:$0x7]
    %v1194 = vlaneseq
    %v1195 = vshrl.u32 %v1194, 7
    %v1196 = vsub.s32 0, %v1195
    %v1197 = vrot.slane %v1192, %v1196
    %v1198 = vlaneseq
    %v1199 = vshrl.u32 %v1198, 7
    %v1200 = vsub.s32 1, %v1199
    %v1201 = vrot.slane %v1192, %v1200
    %v1202 = vlaneseq
    %v1203 = vshrl.u32 %v1202, 7
    %v1204 = vsub.s32 2, %v1203
    %v1205 = vrot.slane %v1192, %v1204
    %v1305 = vunpack.c.l.b16 %v1095
    %v1306 = vunpack.c.h.b16 %v1095
    %v1307 = vunpack.c.l.b16 %v1096
    %v1308 = vunpack.c.l.b16 %v1097
    %v1309 = vunpack.c.h.b16 %v1097
    %v1310 = vunpack.c.l.b16 %v1098
    %v1311 = vunpack.c.l.b16 %v1099
    %v1312 = vunpack.c.h.b16 %v1099
    %v1313 = vunpack.c.l.b16 %v1100
    %v1314 = vunpack.c.l.b16 %v1101
    %v1315 = vunpack.c.h.b16 %v1101
    %v1316 = vunpack.c.l.b16 %v1102
    %v1317 = vunpack.c.l.b16 %v1103
    %v1318 = vunpack.c.h.b16 %v1103
    %v1319 = vunpack.c.l.b16 %v1104
    %v1320 = vunpack.c.l.b16 %v1105
    %v1321 = vunpack.c.h.b16 %v1105
    %v1322 = vunpack.c.l.b16 %v1106
    %v1323 = vunpack.c.l.b16 %v1107
    %v1324 = vunpack.c.h.b16 %v1107
    %v1325 = vunpack.c.l.b16 %v1108
    %v1326 = vunpack.c.l.b16 %v1109
    %v1327 = vunpack.c.h.b16 %v1109
    %v1328 = vunpack.c.l.b16 %v1110
    %v1329 = vunpack.c.l.b16 %v1111
    %v1330 = vunpack.c.h.b16 %v1111
    %v1331 = vunpack.c.l.b16 %v1112
    %v1332 = vunpack.c.l.b16 %v1113
    %v1333 = vunpack.c.h.b16 %v1113
    %v1334 = vunpack.c.l.b16 %v1114
    %v1335 = vunpack.c.l.b16 %v1115
    %v1336 = vunpack.c.h.b16 %v1115
    %v1337 = vunpack.c.l.b16 %v1116
    %v1338 = vunpack.c.l.b16 %v1117
    %v1339 = vunpack.c.h.b16 %v1117
    %v1340 = vunpack.c.l.b16 %v1118
    %v1341 = vunpack.c.l.b16 %v1119
    %v1342 = vunpack.c.h.b16 %v1119
    %v1343 = vunpack.c.l.b16 %v1120
    %v1344 = vunpack.c.l.b16 %v1121
    %v1345 = vunpack.c.h.b16 %v1121
    %v1346 = vunpack.c.l.b16 %v1122
    %v1347 = vunpack.c.l.b16 %v1123
    %v1348 = vunpack.c.h.b16 %v1123
    %v1349 = vunpack.c.l.b16 %v1124
    %v1350 = vunpack.c.l.b16 %v1125
    %v1351 = vunpack.c.h.b16 %v1125
    %v1352 = vunpack.c.l.b16 %v1126
    %v1353 = vunpack.c.l.b16 %v1127
    %v1354 = vunpack.c.h.b16 %v1127
    %v1355 = vunpack.c.l.b16 %v1128
    %v1356 = vunpack.c.l.b16 %v1129
    %v1357 = vunpack.c.h.b16 %v1129
    %v1358 = vunpack.c.l.b16 %v1130
    %v1359 = vunpack.c.l.b16 %v1131
    %v1360 = vunpack.c.h.b16 %v1131
    %v1361 = vunpack.c.l.b16 %v1132
    %v1362 = vunpack.c.l.b16 %v1133
    %v1363 = vunpack.c.h.b16 %v1133
    %v1364 = vunpack.c.l.b16 %v1134
    %v1365 = vunpack.c.l.b16 %v1135
    %v1366 = vunpack.c.h.b16 %v1135
    %v1367 = vunpack.c.l.b16 %v1136
    %v1368 = vunpack.c.l.b16 %v1137
    %v1369 = vunpack.c.h.b16 %v1137
    %v1370 = vunpack.c.l.b16 %v1138
    %v1371 = vunpack.c.l.b16 %v1139
    %v1372 = vunpack.c.h.b16 %v1139
    %v1373 = vunpack.c.l.b16 %v1140
    %v1374 = vunpack.c.l.b16 %v1141
    %v1375 = vunpack.c.h.b16 %v1141
    %v1376 = vunpack.c.l.b16 %v1142
    %v1377 = vunpack.c.l.b16 %v1143
    %v1378 = vunpack.c.h.b16 %v1143
    %v1379 = vunpack.c.l.b16 %v1144
    %v1380 = vunpack.c.l.b16 %v1145
    %v1381 = vunpack.c.h.b16 %v1145
    %v1382 = vunpack.c.l.b16 %v1146
    %v1383 = vunpack.c.l.b16 %v1147
    %v1384 = vunpack.c.h.b16 %v1147
    %v1385 = vunpack.c.l.b16 %v1148
    %v1386 = vunpack.c.l.b16 %v1149
    %v1387 = vunpack.c.h.b16 %v1149
    %v1388 = vunpack.c.l.b16 %v1150
    %v1389 = vunpack.c.l.b16 %v1151
    %v1390 = vunpack.c.h.b16 %v1151
    %v1391 = vunpack.c.l.b16 %v1152
    %v1392 = vunpack.c.l.b16 %v1153
    %v1393 = vunpack.c.h.b16 %v1153
    %v1394 = vunpack.c.l.b16 %v1154
    %v1395 = vunpack.c.l.b16 %v1155
    %v1396 = vunpack.c.h.b16 %v1155
    %v1397 = vunpack.c.l.b16 %v1156
    %v1398 = vunpack.c.l.b16 %v1157
    %v1399 = vunpack.c.h.b16 %v1157
    %v1400 = vunpack.c.l.b16 %v1158
    %v1401 = vunpack.c.l.b16 %v1159
    %v1402 = vunpack.c.h.b16 %v1159
    %v1403 = vunpack.c.l.b16 %v1160
    %v1404 = vunpack.c.l.b16 %v1161
    %v1405 = vunpack.c.h.b16 %v1161
    %v1406 = vunpack.c.l.b16 %v1162
    %v1407 = vunpack.c.l.b16 %v1163
    %v1408 = vunpack.c.h.b16 %v1163
    %v1409 = vunpack.c.l.b16 %v1164
    %v1410 = vunpack.c.l.b16 %v1165
    %v1411 = vunpack.c.h.b16 %v1165
    %v1412 = vunpack.c.l.b16 %v1166
    %v1413 = vunpack.c.l.b16 %v1167
    %v1414 = vunpack.c.h.b16 %v1167
    %v1415 = vunpack.c.l.b16 %v1168
    %v1416 = vunpack.c.l.b16 %v1169
    %v1417 = vunpack.c.h.b16 %v1169
    %v1418 = vunpack.c.l.b16 %v1170
    %v1419 = vunpack.c.l.b16 %v1171
    %v1420 = vunpack.c.h.b16 %v1171
    %v1421 = vunpack.c.l.b16 %v1172
    %v1422 = vunpack.c.l.b16 %v1173
    %v1423 = vunpack.c.h.b16 %v1173
    %v1424 = vunpack.c.l.b16 %v1174
    %v1425 = vunpack.c.l.b16 %v1175
    %v1426 = vunpack.c.h.b16 %v1175
    %v1427 = vunpack.c.l.b16 %v1176
    %v1428 = vunpack.c.l.b16 %v1177
    %v1429 = vunpack.c.h.b16 %v1177
    %v1430 = vunpack.c.l.b16 %v1178
    %v1431 = vunpack.c.l.b16 %v1179
    %v1432 = vunpack.c.h.b16 %v1179
    %v1433 = vunpack.c.l.b16 %v1180
    %v1434 = vunpack.c.l.b16 %v1181
    %v1435 = vunpack.c.h.b16 %v1181
    %v1436 = vunpack.c.l.b16 %v1182
    %v1437 = vunpack.c.l.b16 %v1183
    %v1438 = vunpack.c.h.b16 %v1183
    %v1439 = vunpack.c.l.b16 %v1184
    %v1440 = vunpack.c.l.b16 %v1185
    %v1441 = vunpack.c.h.b16 %v1185
    %v1442 = vunpack.c.l.b16 %v1186
    %v1443 = vunpack.c.l.b16 %v1187
    %v1444 = vunpack.c.h.b16 %v1187
    %v1445 = vunpack.c.l.b16 %v1188
    %v1446 = vunpack.c.l.b16 %v1189
    %v1447 = vunpack.c.h.b16 %v1189
    %v1448 = vunpack.c.l.b16 %v1190
    %v1449 = vpack.c.b16 %v1308, %v1305
    %v1450 = vpack.c.b16 %v1309, %v1306
    %v1451 = vpack.c.b16 %v1310, %v1307
    %v1452 = vpack.c.b16 %v1314, %v1311
    %v1453 = vpack.c.b16 %v1315, %v1312
    %v1454 = vpack.c.b16 %v1316, %v1313
    %v1455 = vpack.c.b16 %v1320, %v1317
    %v1456 = vpack.c.b16 %v1321, %v1318
    %v1457 = vpack.c.b16 %v1322, %v1319
    %v1458 = vpack.c.b16 %v1326, %v1323
    %v1459 = vpack.c.b16 %v1327, %v1324
    %v1460 = vpack.c.b16 %v1328, %v1325
    %v1461 = vpack.c.b16 %v1332, %v1329
    %v1462 = vpack.c.b16 %v1333, %v1330
    %v1463 = vpack.c.b16 %v1334, %v1331
    %v1464 = vpack.c.b16 %v1338, %v1335
    %v1465 = vpack.c.b16 %v1339, %v1336
    %v1466 = vpack.c.b16 %v1340, %v1337
    %v1467 = vpack.c.b16 %v1344, %v1341
    %v1468 = vpack.c.b16 %v1345, %v1342
    %v1469 = vpack.c.b16 %v1346, %v1343
    %v1470 = vpack.c.b16 %v1350, %v1347
    %v1471 = vpack.c.b16 %v1351, %v1348
    %v1472 = vpack.c.b16 %v1352, %v1349
    %v1473 = vpack.c.b16 %v1356, %v1353
    %v1474 = vpack.c.b16 %v1357, %v1354
    %v1475 = vpack.c.b16 %v1358, %v1355
    %v1476 = vpack.c.b16 %v1362, %v1359
    %v1477 = vpack.c.b16 %v1363, %v1360
    %v1478 = vpack.c.b16 %v1364, %v1361
    %v1479 = vpack.c.b16 %v1368, %v1365
    %v1480 = vpack.c.b16 %v1369, %v1366
    %v1481 = vpack.c.b16 %v1370, %v1367
    %v1482 = vpack.c.b16 %v1374, %v1371
    %v1483 = vpack.c.b16 %v1375, %v1372
    %v1484 = vpack.c.b16 %v1376, %v1373
    %v1485 = vpack.c.b16 %v1380, %v1377
    %v1486 = vpack.c.b16 %v1381, %v1378
    %v1487 = vpack.c.b16 %v1382, %v1379
    %v1488 = vpack.c.b16 %v1386, %v1383
    %v1489 = vpack.c.b16 %v1387, %v1384
    %v1490 = vpack.c.b16 %v1388, %v1385
    %v1491 = vpack.c.b16 %v1392, %v1389
    %v1492 = vpack.c.b16 %v1393, %v1390
    %v1493 = vpack.c.b16 %v1394, %v1391
    %v1494 = vpack.c.b16 %v1398, %v1395
    %v1495 = vpack.c.b16 %v1399, %v1396
    %v1496 = vpack.c.b16 %v1400, %v1397
    %v1497 = vpack.c.b16 %v1404, %v1401
    %v1498 = vpack.c.b16 %v1405, %v1402
    %v1499 = vpack.c.b16 %v1406, %v1403
    %v1500 = vpack.c.b16 %v1410, %v1407
    %v1501 = vpack.c.b16 %v1411, %v1408
    %v1502 = vpack.c.b16 %v1412, %v1409
    %v1503 = vpack.c.b16 %v1416, %v1413
    %v1504 = vpack.c.b16 %v1417, %v1414
    %v1505 = vpack.c.b16 %v1418, %v1415
    %v1506 = vpack.c.b16 %v1422, %v1419
    %v1507 = vpack.c.b16 %v1423, %v1420
    %v1508 = vpack.c.b16 %v1424, %v1421
    %v1509 = vpack.c.b16 %v1428, %v1425
    %v1510 = vpack.c.b16 %v1429, %v1426
    %v1511 = vpack.c.b16 %v1430, %v1427
    %v1512 = vpack.c.b16 %v1434, %v1431
    %v1513 = vpack.c.b16 %v1435, %v1432
    %v1514 = vpack.c.b16 %v1436, %v1433
    %v1515 = vpack.c.b16 %v1440, %v1437
    %v1516 = vpack.c.b16 %v1441, %v1438
    %v1517 = vpack.c.b16 %v1442, %v1439
    %v1518 = vpack.c.b16 %v1446, %v1443
    %v1519 = vpack.c.b16 %v1447, %v1444
    %v1520 = vpack.c.b16 %v1448, %v1445
    %1593 = vmatprep.subr.bf16.mxu0 %v1450
    %1594 = vmatpush1.bf16.msra.mxu0 %v1449
    %1595 = vmatprep.subr.bf16.mxu0 %v1453
    %1596 = vmatpush1.bf16.msra.mxu0 %v1452
    %1597 = vmatprep.subr.bf16.mxu0 %v1456
    %1598 = vmatpush1.bf16.msra.mxu0 %v1455
    %1599 = vmatprep.subr.bf16.mxu0 %v1459
    %1600 = vmatpush1.bf16.msra.mxu0 %v1458
    %1601 = vmatprep.subr.bf16.mxu0 %v1462
    %1602 = vmatpush1.bf16.msra.mxu0 %v1461
    %1603 = vmatprep.subr.bf16.mxu0 %v1465
    %1604 = vmatpush1.bf16.msra.mxu0 %v1464
    %1605 = vmatprep.subr.bf16.mxu0 %v1468
    %1606 = vmatpush1.bf16.msra.mxu0 %v1467
    %1607 = vmatprep.subr.bf16.mxu0 %v1471
    %1608 = vmatpush1.bf16.msra.mxu0 %v1470
    %1609 = vmatprep.subr.bf16.mxu0 %v1474
    %1610 = vmatpush1.bf16.msra.mxu0 %v1473
    %1611 = vmatprep.subr.bf16.mxu0 %v1477
    %1612 = vmatpush1.bf16.msra.mxu0 %v1476
    %1613 = vmatprep.subr.bf16.mxu0 %v1480
    %1614 = vmatpush1.bf16.msra.mxu0 %v1479
    %1615 = vmatprep.subr.bf16.mxu0 %v1483
    %1616 = vmatpush1.bf16.msra.mxu0 %v1482
    %1617 = vmatprep.subr.bf16.mxu0 %v1486
    %1618 = vmatpush1.bf16.msra.mxu0 %v1485
    %1619 = vmatprep.subr.bf16.mxu0 %v1489
    %1620 = vmatpush1.bf16.msra.mxu0 %v1488
    %1621 = vmatprep.subr.bf16.mxu0 %v1492
    %1622 = vmatpush1.bf16.msra.mxu0 %v1491
    %1623 = vmatprep.subr.bf16.mxu0 %v1495
    %1624 = vmatpush1.bf16.msra.mxu0 %v1494
    %1625 = vmatprep.mubr.bf16.mxu0 %v1092
    %1626 = vmatmul.mubr.bf16.gmra.mrb[0].mxu0 %v1091
    %v1627 = vpop.f32.mrb[0].mxu0
    %v1628 = vadd.f32 %v1197, %v1627
    %v1629 = vpop.f32.mrb[0].mxu0
    %v1630 = vadd.f32 %v1201, %v1629
    %v1631 = vpop.f32.mrb[0].mxu0
    %v1632 = vadd.f32 %v1197, %v1631
    %v1633 = vpop.f32.mrb[0].mxu0
    %v1634 = vadd.f32 %v1201, %v1633
    %1635 = vdwg.mxu0
    %1636 = vmatprep.subr.bf16.mxu0 %v1498
    %1637 = vmatpush1.bf16.msra.mxu0 %v1497
    %1638 = vmatprep.subr.bf16.mxu0 %v1501
    %1639 = vmatpush1.bf16.msra.mxu0 %v1500
    %1640 = vmatprep.subr.bf16.mxu0 %v1504
    %1641 = vmatpush1.bf16.msra.mxu0 %v1503
    %1642 = vmatprep.subr.bf16.mxu0 %v1507
    %1643 = vmatpush1.bf16.msra.mxu0 %v1506
    %1644 = vmatprep.subr.bf16.mxu0 %v1510
    %1645 = vmatpush1.bf16.msra.mxu0 %v1509
    %1646 = vmatprep.subr.bf16.mxu0 %v1513
    %1647 = vmatpush1.bf16.msra.mxu0 %v1512
    %1648 = vmatprep.subr.bf16.mxu0 %v1516
    %1649 = vmatpush1.bf16.msra.mxu0 %v1515
    %1650 = vmatprep.subr.bf16.mxu0 %v1519
    %1651 = vmatpush1.bf16.msra.mxu0 %v1518
    %1652 = vmatprep.subr.bf16.mxu0 0
    %1653 = vmatpush1.bf16.msra.mxu0 0
    %1654 = vmatprep.subr.bf16.mxu0 0
    %1655 = vmatpush1.bf16.msra.mxu0 0
    %1656 = vmatprep.subr.bf16.mxu0 0
    %1657 = vmatpush1.bf16.msra.mxu0 0
    %1658 = vmatprep.subr.bf16.mxu0 0
    %1659 = vmatpush1.bf16.msra.mxu0 0
    %1660 = vmatprep.subr.bf16.mxu0 0
    %1661 = vmatpush1.bf16.msra.mxu0 0
    %1662 = vmatprep.subr.bf16.mxu0 0
    %1663 = vmatpush1.bf16.msra.mxu0 0
    %1664 = vmatprep.subr.bf16.mxu0 0
    %1665 = vmatpush1.bf16.msra.mxu0 0
    %1666 = vmatprep.subr.bf16.mxu0 0
    %1667 = vmatpush1.bf16.msra.mxu0 0
    %1668 = vmatprep.mubr.bf16.mxu0 0
    %1669 = vmatmul.mubr.bf16.gmra.mrb[0].mxu0 %v1093
    %v1670 = vpop.f32.mrb[0].mxu0
    %v1671 = vadd.f32 %v1628, %v1670
    %v1672 = vpop.f32.mrb[0].mxu0
    %v1673 = vadd.f32 %v1630, %v1672
    %v1674 = vpop.f32.mrb[0].mxu0
    %v1675 = vadd.f32 %v1632, %v1674
    %v1676 = vpop.f32.mrb[0].mxu0
    %v1677 = vadd.f32 %v1634, %v1676
    %1678 = vdwg.mxu0
    %1679 = vmatprep.subr.bf16.mxu0 0
    %1680 = vmatpush1.bf16.msra.mxu0 %v1451
    %1681 = vmatprep.subr.bf16.mxu0 0
    %1682 = vmatpush1.bf16.msra.mxu0 %v1454
    %1683 = vmatprep.subr.bf16.mxu0 0
    %1684 = vmatpush1.bf16.msra.mxu0 %v1457
    %1685 = vmatprep.subr.bf16.mxu0 0
    %1686 = vmatpush1.bf16.msra.mxu0 %v1460
    %1687 = vmatprep.subr.bf16.mxu0 0
    %1688 = vmatpush1.bf16.msra.mxu0 %v1463
    %1689 = vmatprep.subr.bf16.mxu0 0
    %1690 = vmatpush1.bf16.msra.mxu0 %v1466
    %1691 = vmatprep.subr.bf16.mxu0 0
    %1692 = vmatpush1.bf16.msra.mxu0 %v1469
    %1693 = vmatprep.subr.bf16.mxu0 0
    %1694 = vmatpush1.bf16.msra.mxu0 %v1472
    %1695 = vmatprep.subr.bf16.mxu0 0
    %1696 = vmatpush1.bf16.msra.mxu0 %v1475
    %1697 = vmatprep.subr.bf16.mxu0 0
    %1698 = vmatpush1.bf16.msra.mxu0 %v1478
    %1699 = vmatprep.subr.bf16.mxu0 0
    %1700 = vmatpush1.bf16.msra.mxu0 %v1481
    %1701 = vmatprep.subr.bf16.mxu0 0
    %1702 = vmatpush1.bf16.msra.mxu0 %v1484
    %1703 = vmatprep.subr.bf16.mxu0 0
    %1704 = vmatpush1.bf16.msra.mxu0 %v1487
    %1705 = vmatprep.subr.bf16.mxu0 0
    %1706 = vmatpush1.bf16.msra.mxu0 %v1490
    %1707 = vmatprep.subr.bf16.mxu0 0
    %1708 = vmatpush1.bf16.msra.mxu0 %v1493
    %1709 = vmatprep.subr.bf16.mxu0 0
    %1710 = vmatpush1.bf16.msra.mxu0 %v1496
    %1711 = vmatprep.mubr.bf16.mxu0 %v1092
    %1712 = vmatmul.mubr.bf16.gmra.mrb[0].mxu0 %v1091
    %v1713 = vpop.f32.mrb[0].mxu0
    %v1714 = vadd.f32 %v1205, %v1713
    %v1715 = vpop.f32.mrb[0].mxu0
    %v1716 = vpop.f32.mrb[0].mxu0
    %v1717 = vadd.f32 %v1205, %v1716
    %v1718 = vpop.f32.mrb[0].mxu0
    %1719 = vdwg.mxu0
    %1720 = vmatprep.subr.bf16.mxu0 0
    %1721 = vmatpush1.bf16.msra.mxu0 %v1499
    %1722 = vmatprep.subr.bf16.mxu0 0
    %1723 = vmatpush1.bf16.msra.mxu0 %v1502
    %1724 = vmatprep.subr.bf16.mxu0 0
    %1725 = vmatpush1.bf16.msra.mxu0 %v1505
    %1726 = vmatprep.subr.bf16.mxu0 0
    %1727 = vmatpush1.bf16.msra.mxu0 %v1508
    %1728 = vmatprep.subr.bf16.mxu0 0
    %1729 = vmatpush1.bf16.msra.mxu0 %v1511
    %1730 = vmatprep.subr.bf16.mxu0 0
    %1731 = vmatpush1.bf16.msra.mxu0 %v1514
    %1732 = vmatprep.subr.bf16.mxu0 0
    %1733 = vmatpush1.bf16.msra.mxu0 %v1517
    %1734 = vmatprep.subr.bf16.mxu0 0
    %1735 = vmatpush1.bf16.msra.mxu0 %v1520
    %1736 = vmatprep.subr.bf16.mxu0 0
    %1737 = vmatpush1.bf16.msra.mxu0 0
    %1738 = vmatprep.subr.bf16.mxu0 0
    %1739 = vmatpush1.bf16.msra.mxu0 0
    %1740 = vmatprep.subr.bf16.mxu0 0
    %1741 = vmatpush1.bf16.msra.mxu0 0
    %1742 = vmatprep.subr.bf16.mxu0 0
    %1743 = vmatpush1.bf16.msra.mxu0 0
    %1744 = vmatprep.subr.bf16.mxu0 0
    %1745 = vmatpush1.bf16.msra.mxu0 0
    %1746 = vmatprep.subr.bf16.mxu0 0
    %1747 = vmatpush1.bf16.msra.mxu0 0
    %1748 = vmatprep.subr.bf16.mxu0 0
    %1749 = vmatpush1.bf16.msra.mxu0 0
    %1750 = vmatprep.subr.bf16.mxu0 0
    %1751 = vmatpush1.bf16.msra.mxu0 0
    %1752 = vmatprep.mubr.bf16.mxu0 0
    %1753 = vmatmul.mubr.bf16.gmra.mrb[0].mxu0 %v1093
    %v1754 = vpop.f32.mrb[0].mxu0
    %v1755 = vadd.f32 %v1714, %v1754
    %v1756 = vpop.f32.mrb[0].mxu0
    %v1757 = vpop.f32.mrb[0].mxu0
    %v1758 = vadd.f32 %v1717, %v1757
    %v1759 = vpop.f32.mrb[0].mxu0
    %1760 = vdwg.mxu0
    %v1761 = vadd.f32 %v1671, %v1085
    %v1762 = vadd.f32 %v1673, %v1086
    %v1763 = vadd.f32 %v1755, %v1087
    %v1764 = vadd.f32 %v1675, %v1088
    %v1765 = vadd.f32 %v1677, %v1089
    %v1766 = vadd.f32 %v1758, %v1090
    %v1767 = vmax.f32 %v1761, 0.0
    %v1768 = vmax.f32 %v1762, 0.0
    %v1769 = vmax.f32 %v1763, 0.0
    %v1770 = vmax.f32 %v1764, 0.0
    %v1771 = vmax.f32 %v1765, 0.0
    %v1772 = vmax.f32 %v1766, 0.0
    %v1773 = vpack.c.bf16 %v1770, %v1767
    %v1774 = vpack.c.bf16 %v1771, %v1768
    %v1775 = vpack.c.bf16 %v1772, %v1769
    %s1776 = scalar_lea.vmem [#allocation11], 1152
    %v1777 = vld [vmem:[%s1776] sm:$0xff]
    %v1778 = vld [vmem:[%s1776 + $0x8] sm:$0xf]
    %v1779 = vld [vmem:[%s1776 + $0xc] sm:$0xff]
    %v1780 = vld [vmem:[%s1776 + $0x14] sm:$0xf]
    %v1781 = vld [vmem:[%s1776 + $0x18] sm:$0xff]
    %v1782 = vld [vmem:[%s1776 + $0x20] sm:$0xf]
    %v1783 = vld [vmem:[%s1776 + $0x24] sm:$0xff]
    %v1784 = vld [vmem:[%s1776 + $0x2c] sm:$0xf]
    %v1785 = vld [vmem:[%s1776 + $0x30] sm:$0xff]
    %v1786 = vld [vmem:[%s1776 + $0x38] sm:$0xf]
    %v1787 = vld [vmem:[%s1776 + $0x3c] sm:$0xff]
    %v1788 = vld [vmem:[%s1776 + $0x44] sm:$0xf]
    %v1789 = vld [vmem:[%s1776 + $0x48] sm:$0xff]
    %v1790 = vld [vmem:[%s1776 + $0x50] sm:$0xf]
    %v1791 = vld [vmem:[%s1776 + $0x54] sm:$0xff]
    %v1792 = vld [vmem:[%s1776 + $0x5c] sm:$0xf]
    %v1793 = vld [vmem:[%s1776 + $0x60] sm:$0xff]
    %v1794 = vld [vmem:[%s1776 + $0x68] sm:$0xf]
    %v1795 = vld [vmem:[%s1776 + $0x6c] sm:$0xff]
    %v1796 = vld [vmem:[%s1776 + $0x74] sm:$0xf]
    %v1797 = vld [vmem:[%s1776 + $0x78] sm:$0xff]
    %v1798 = vld [vmem:[%s1776 + $0x80] sm:$0xf]
    %v1799 = vld [vmem:[%s1776 + $0x84] sm:$0xff]
    %v1800 = vld [vmem:[%s1776 + $0x8c] sm:$0xf]
    %v1801 = vld [vmem:[%s1776 + $0x90] sm:$0xff]
    %v1802 = vld [vmem:[%s1776 + $0x98] sm:$0xf]
    %v1803 = vld [vmem:[%s1776 + $0x9c] sm:$0xff]
    %v1804 = vld [vmem:[%s1776 + $0xa4] sm:$0xf]
    %v1805 = vld [vmem:[%s1776 + $0xa8] sm:$0xff]
    %v1806 = vld [vmem:[%s1776 + $0xb0] sm:$0xf]
    %v1807 = vld [vmem:[%s1776 + $0xb4] sm:$0xff]
    %v1808 = vld [vmem:[%s1776 + $0xbc] sm:$0xf]
    %v1809 = vld [vmem:[%s1776 + $0xc0] sm:$0xff]
    %v1810 = vld [vmem:[%s1776 + $0xc8] sm:$0xf]
    %v1811 = vld [vmem:[%s1776 + $0xcc] sm:$0xff]
    %v1812 = vld [vmem:[%s1776 + $0xd4] sm:$0xf]
    %v1813 = vld [vmem:[%s1776 + $0xd8] sm:$0xff]
    %v1814 = vld [vmem:[%s1776 + $0xe0] sm:$0xf]
    %v1815 = vld [vmem:[%s1776 + $0xe4] sm:$0xff]
    %v1816 = vld [vmem:[%s1776 + $0xec] sm:$0xf]
    %v1817 = vld [vmem:[%s1776 + $0xf0] sm:$0xff]
    %v1818 = vld [vmem:[%s1776 + $0xf8] sm:$0xf]
    %v1819 = vld [vmem:[%s1776 + $0xfc] sm:$0xff]
    %v1820 = vld [vmem:[%s1776 + $0x104] sm:$0xf]
    %v1821 = vld [vmem:[%s1776 + $0x108] sm:$0xff]
    %v1822 = vld [vmem:[%s1776 + $0x110] sm:$0xf]
    %v1823 = vld [vmem:[%s1776 + $0x114] sm:$0xff]
    %v1824 = vld [vmem:[%s1776 + $0x11c] sm:$0xf]
    %v1825 = vld [vmem:[%s1776 + $0x120] sm:$0xff]
    %v1826 = vld [vmem:[%s1776 + $0x128] sm:$0xf]
    %v1827 = vld [vmem:[%s1776 + $0x12c] sm:$0xff]
    %v1828 = vld [vmem:[%s1776 + $0x134] sm:$0xf]
    %v1829 = vld [vmem:[%s1776 + $0x138] sm:$0xff]
    %v1830 = vld [vmem:[%s1776 + $0x140] sm:$0xf]
    %v1831 = vld [vmem:[%s1776 + $0x144] sm:$0xff]
    %v1832 = vld [vmem:[%s1776 + $0x14c] sm:$0xf]
    %v1833 = vld [vmem:[%s1776 + $0x150] sm:$0xff]
    %v1834 = vld [vmem:[%s1776 + $0x158] sm:$0xf]
    %v1835 = vld [vmem:[%s1776 + $0x15c] sm:$0xff]
    %v1836 = vld [vmem:[%s1776 + $0x164] sm:$0xf]
    %v1837 = vld [vmem:[%s1776 + $0x168] sm:$0xff]
    %v1838 = vld [vmem:[%s1776 + $0x170] sm:$0xf]
    %v1839 = vld [vmem:[%s1776 + $0x174] sm:$0xff]
    %v1840 = vld [vmem:[%s1776 + $0x17c] sm:$0xf]
    %v1841 = vld [vmem:[%s1776 + $0x180] sm:$0xff]
    %v1842 = vld [vmem:[%s1776 + $0x188] sm:$0xf]
    %v1843 = vld [vmem:[%s1776 + $0x18c] sm:$0xff]
    %v1844 = vld [vmem:[%s1776 + $0x194] sm:$0xf]
    %v1845 = vld [vmem:[%s1776 + $0x198] sm:$0xff]
    %v1846 = vld [vmem:[%s1776 + $0x1a0] sm:$0xf]
    %v1847 = vld [vmem:[%s1776 + $0x1a4] sm:$0xff]
    %v1848 = vld [vmem:[%s1776 + $0x1ac] sm:$0xf]
    %v1849 = vld [vmem:[%s1776 + $0x1b0] sm:$0xff]
    %v1850 = vld [vmem:[%s1776 + $0x1b8] sm:$0xf]
    %v1851 = vld [vmem:[%s1776 + $0x1bc] sm:$0xff]
    %v1852 = vld [vmem:[%s1776 + $0x1c4] sm:$0xf]
    %v1853 = vld [vmem:[%s1776 + $0x1c8] sm:$0xff]
    %v1854 = vld [vmem:[%s1776 + $0x1d0] sm:$0xf]
    %v1855 = vld [vmem:[%s1776 + $0x1d4] sm:$0xff]
    %v1856 = vld [vmem:[%s1776 + $0x1dc] sm:$0xf]
    %v1857 = vld [vmem:[%s1776 + $0x1e0] sm:$0xff]
    %v1858 = vld [vmem:[%s1776 + $0x1e8] sm:$0xf]
    %v1859 = vld [vmem:[%s1776 + $0x1ec] sm:$0xff]
    %v1860 = vld [vmem:[%s1776 + $0x1f4] sm:$0xf]
    %v1861 = vld [vmem:[%s1776 + $0x1f8] sm:$0xff]
    %v1862 = vld [vmem:[%s1776 + $0x200] sm:$0xf]
    %v1863 = vld [vmem:[%s1776 + $0x204] sm:$0xff]
    %v1864 = vld [vmem:[%s1776 + $0x20c] sm:$0xf]
    %v1865 = vld [vmem:[%s1776 + $0x210] sm:$0xff]
    %v1866 = vld [vmem:[%s1776 + $0x218] sm:$0xf]
    %v1867 = vld [vmem:[%s1776 + $0x21c] sm:$0xff]
    %v1868 = vld [vmem:[%s1776 + $0x224] sm:$0xf]
    %v1869 = vld [vmem:[%s1776 + $0x228] sm:$0xff]
    %v1870 = vld [vmem:[%s1776 + $0x230] sm:$0xf]
    %v1871 = vld [vmem:[%s1776 + $0x234] sm:$0xff]
    %v1872 = vld [vmem:[%s1776 + $0x23c] sm:$0xf]
    %s1873 = scalar_lea.vmem [#allocation13], 2
    %v1874 = vld [vmem:[%s1873] ss:$4 sm:$0x7]
    %v1876 = vlaneseq
    %v1877 = vshrl.u32 %v1876, 7
    %v1878 = vsub.s32 0, %v1877
    %v1879 = vrot.slane %v1874, %v1878
    %v1880 = vlaneseq
    %v1881 = vshrl.u32 %v1880, 7
    %v1882 = vsub.s32 1, %v1881
    %v1883 = vrot.slane %v1874, %v1882
    %v1884 = vlaneseq
    %v1885 = vshrl.u32 %v1884, 7
    %v1886 = vsub.s32 2, %v1885
    %v1887 = vrot.slane %v1874, %v1886
    %v1987 = vunpack.c.l.b16 %v1777
    %v1988 = vunpack.c.h.b16 %v1777
    %v1989 = vunpack.c.l.b16 %v1778
    %v1990 = vunpack.c.l.b16 %v1779
    %v1991 = vunpack.c.h.b16 %v1779
    %v1992 = vunpack.c.l.b16 %v1780
    %v1993 = vunpack.c.l.b16 %v1781
    %v1994 = vunpack.c.h.b16 %v1781
    %v1995 = vunpack.c.l.b16 %v1782
    %v1996 = vunpack.c.l.b16 %v1783
    %v1997 = vunpack.c.h.b16 %v1783
    %v1998 = vunpack.c.l.b16 %v1784
    %v1999 = vunpack.c.l.b16 %v1785
    %v2000 = vunpack.c.h.b16 %v1785
    %v2001 = vunpack.c.l.b16 %v1786
    %v2002 = vunpack.c.l.b16 %v1787
    %v2003 = vunpack.c.h.b16 %v1787
    %v2004 = vunpack.c.l.b16 %v1788
    %v2005 = vunpack.c.l.b16 %v1789
    %v2006 = vunpack.c.h.b16 %v1789
    %v2007 = vunpack.c.l.b16 %v1790
    %v2008 = vunpack.c.l.b16 %v1791
    %v2009 = vunpack.c.h.b16 %v1791
    %v2010 = vunpack.c.l.b16 %v1792
    %v2011 = vunpack.c.l.b16 %v1793
    %v2012 = vunpack.c.h.b16 %v1793
    %v2013 = vunpack.c.l.b16 %v1794
    %v2014 = vunpack.c.l.b16 %v1795
    %v2015 = vunpack.c.h.b16 %v1795
    %v2016 = vunpack.c.l.b16 %v1796
    %v2017 = vunpack.c.l.b16 %v1797
    %v2018 = vunpack.c.h.b16 %v1797
    %v2019 = vunpack.c.l.b16 %v1798
    %v2020 = vunpack.c.l.b16 %v1799
    %v2021 = vunpack.c.h.b16 %v1799
    %v2022 = vunpack.c.l.b16 %v1800
    %v2023 = vunpack.c.l.b16 %v1801
    %v2024 = vunpack.c.h.b16 %v1801
    %v2025 = vunpack.c.l.b16 %v1802
    %v2026 = vunpack.c.l.b16 %v1803
    %v2027 = vunpack.c.h.b16 %v1803
    %v2028 = vunpack.c.l.b16 %v1804
    %v2029 = vunpack.c.l.b16 %v1805
    %v2030 = vunpack.c.h.b16 %v1805
    %v2031 = vunpack.c.l.b16 %v1806
    %v2032 = vunpack.c.l.b16 %v1807
    %v2033 = vunpack.c.h.b16 %v1807
    %v2034 = vunpack.c.l.b16 %v1808
    %v2035 = vunpack.c.l.b16 %v1809
    %v2036 = vunpack.c.h.b16 %v1809
    %v2037 = vunpack.c.l.b16 %v1810
    %v2038 = vunpack.c.l.b16 %v1811
    %v2039 = vunpack.c.h.b16 %v1811
    %v2040 = vunpack.c.l.b16 %v1812
    %v2041 = vunpack.c.l.b16 %v1813
    %v2042 = vunpack.c.h.b16 %v1813
    %v2043 = vunpack.c.l.b16 %v1814
    %v2044 = vunpack.c.l.b16 %v1815
    %v2045 = vunpack.c.h.b16 %v1815
    %v2046 = vunpack.c.l.b16 %v1816
    %v2047 = vunpack.c.l.b16 %v1817
    %v2048 = vunpack.c.h.b16 %v1817
    %v2049 = vunpack.c.l.b16 %v1818
    %v2050 = vunpack.c.l.b16 %v1819
    %v2051 = vunpack.c.h.b16 %v1819
    %v2052 = vunpack.c.l.b16 %v1820
    %v2053 = vunpack.c.l.b16 %v1821
    %v2054 = vunpack.c.h.b16 %v1821
    %v2055 = vunpack.c.l.b16 %v1822
    %v2056 = vunpack.c.l.b16 %v1823
    %v2057 = vunpack.c.h.b16 %v1823
    %v2058 = vunpack.c.l.b16 %v1824
    %v2059 = vunpack.c.l.b16 %v1825
    %v2060 = vunpack.c.h.b16 %v1825
    %v2061 = vunpack.c.l.b16 %v1826
    %v2062 = vunpack.c.l.b16 %v1827
    %v2063 = vunpack.c.h.b16 %v1827
    %v2064 = vunpack.c.l.b16 %v1828
    %v2065 = vunpack.c.l.b16 %v1829
    %v2066 = vunpack.c.h.b16 %v1829
    %v2067 = vunpack.c.l.b16 %v1830
    %v2068 = vunpack.c.l.b16 %v1831
    %v2069 = vunpack.c.h.b16 %v1831
    %v2070 = vunpack.c.l.b16 %v1832
    %v2071 = vunpack.c.l.b16 %v1833
    %v2072 = vunpack.c.h.b16 %v1833
    %v2073 = vunpack.c.l.b16 %v1834
    %v2074 = vunpack.c.l.b16 %v1835
    %v2075 = vunpack.c.h.b16 %v1835
    %v2076 = vunpack.c.l.b16 %v1836
    %v2077 = vunpack.c.l.b16 %v1837
    %v2078 = vunpack.c.h.b16 %v1837
    %v2079 = vunpack.c.l.b16 %v1838
    %v2080 = vunpack.c.l.b16 %v1839
    %v2081 = vunpack.c.h.b16 %v1839
    %v2082 = vunpack.c.l.b16 %v1840
    %v2083 = vunpack.c.l.b16 %v1841
    %v2084 = vunpack.c.h.b16 %v1841
    %v2085 = vunpack.c.l.b16 %v1842
    %v2086 = vunpack.c.l.b16 %v1843
    %v2087 = vunpack.c.h.b16 %v1843
    %v2088 = vunpack.c.l.b16 %v1844
    %v2089 = vunpack.c.l.b16 %v1845
    %v2090 = vunpack.c.h.b16 %v1845
    %v2091 = vunpack.c.l.b16 %v1846
    %v2092 = vunpack.c.l.b16 %v1847
    %v2093 = vunpack.c.h.b16 %v1847
    %v2094 = vunpack.c.l.b16 %v1848
    %v2095 = vunpack.c.l.b16 %v1849
    %v2096 = vunpack.c.h.b16 %v1849
    %v2097 = vunpack.c.l.b16 %v1850
    %v2098 = vunpack.c.l.b16 %v1851
    %v2099 = vunpack.c.h.b16 %v1851
    %v2100 = vunpack.c.l.b16 %v1852
    %v2101 = vunpack.c.l.b16 %v1853
    %v2102 = vunpack.c.h.b16 %v1853
    %v2103 = vunpack.c.l.b16 %v1854
    %v2104 = vunpack.c.l.b16 %v1855
    %v2105 = vunpack.c.h.b16 %v1855
    %v2106 = vunpack.c.l.b16 %v1856
    %v2107 = vunpack.c.l.b16 %v1857
    %v2108 = vunpack.c.h.b16 %v1857
    %v2109 = vunpack.c.l.b16 %v1858
    %v2110 = vunpack.c.l.b16 %v1859
    %v2111 = vunpack.c.h.b16 %v1859
    %v2112 = vunpack.c.l.b16 %v1860
    %v2113 = vunpack.c.l.b16 %v1861
    %v2114 = vunpack.c.h.b16 %v1861
    %v2115 = vunpack.c.l.b16 %v1862
    %v2116 = vunpack.c.l.b16 %v1863
    %v2117 = vunpack.c.h.b16 %v1863
    %v2118 = vunpack.c.l.b16 %v1864
    %v2119 = vunpack.c.l.b16 %v1865
    %v2120 = vunpack.c.h.b16 %v1865
    %v2121 = vunpack.c.l.b16 %v1866
    %v2122 = vunpack.c.l.b16 %v1867
    %v2123 = vunpack.c.h.b16 %v1867
    %v2124 = vunpack.c.l.b16 %v1868
    %v2125 = vunpack.c.l.b16 %v1869
    %v2126 = vunpack.c.h.b16 %v1869
    %v2127 = vunpack.c.l.b16 %v1870
    %v2128 = vunpack.c.l.b16 %v1871
    %v2129 = vunpack.c.h.b16 %v1871
    %v2130 = vunpack.c.l.b16 %v1872
    %v2131 = vpack.c.b16 %v1990, %v1987
    %v2132 = vpack.c.b16 %v1991, %v1988
    %v2133 = vpack.c.b16 %v1992, %v1989
    %v2134 = vpack.c.b16 %v1996, %v1993
    %v2135 = vpack.c.b16 %v1997, %v1994
    %v2136 = vpack.c.b16 %v1998, %v1995
    %v2137 = vpack.c.b16 %v2002, %v1999
    %v2138 = vpack.c.b16 %v2003, %v2000
    %v2139 = vpack.c.b16 %v2004, %v2001
    %v2140 = vpack.c.b16 %v2008, %v2005
    %v2141 = vpack.c.b16 %v2009, %v2006
    %v2142 = vpack.c.b16 %v2010, %v2007
    %v2143 = vpack.c.b16 %v2014, %v2011
    %v2144 = vpack.c.b16 %v2015, %v2012
    %v2145 = vpack.c.b16 %v2016, %v2013
    %v2146 = vpack.c.b16 %v2020, %v2017
    %v2147 = vpack.c.b16 %v2021, %v2018
    %v2148 = vpack.c.b16 %v2022, %v2019
    %v2149 = vpack.c.b16 %v2026, %v2023
    %v2150 = vpack.c.b16 %v2027, %v2024
    %v2151 = vpack.c.b16 %v2028, %v2025
    %v2152 = vpack.c.b16 %v2032, %v2029
    %v2153 = vpack.c.b16 %v2033, %v2030
    %v2154 = vpack.c.b16 %v2034, %v2031
    %v2155 = vpack.c.b16 %v2038, %v2035
    %v2156 = vpack.c.b16 %v2039, %v2036
    %v2157 = vpack.c.b16 %v2040, %v2037
    %v2158 = vpack.c.b16 %v2044, %v2041
    %v2159 = vpack.c.b16 %v2045, %v2042
    %v2160 = vpack.c.b16 %v2046, %v2043
    %v2161 = vpack.c.b16 %v2050, %v2047
    %v2162 = vpack.c.b16 %v2051, %v2048
    %v2163 = vpack.c.b16 %v2052, %v2049
    %v2164 = vpack.c.b16 %v2056, %v2053
    %v2165 = vpack.c.b16 %v2057, %v2054
    %v2166 = vpack.c.b16 %v2058, %v2055
    %v2167 = vpack.c.b16 %v2062, %v2059
    %v2168 = vpack.c.b16 %v2063, %v2060
    %v2169 = vpack.c.b16 %v2064, %v2061
    %v2170 = vpack.c.b16 %v2068, %v2065
    %v2171 = vpack.c.b16 %v2069, %v2066
    %v2172 = vpack.c.b16 %v2070, %v2067
    %v2173 = vpack.c.b16 %v2074, %v2071
    %v2174 = vpack.c.b16 %v2075, %v2072
    %v2175 = vpack.c.b16 %v2076, %v2073
    %v2176 = vpack.c.b16 %v2080, %v2077
    %v2177 = vpack.c.b16 %v2081, %v2078
    %v2178 = vpack.c.b16 %v2082, %v2079
    %v2179 = vpack.c.b16 %v2086, %v2083
    %v2180 = vpack.c.b16 %v2087, %v2084
    %v2181 = vpack.c.b16 %v2088, %v2085
    %v2182 = vpack.c.b16 %v2092, %v2089
    %v2183 = vpack.c.b16 %v2093, %v2090
    %v2184 = vpack.c.b16 %v2094, %v2091
    %v2185 = vpack.c.b16 %v2098, %v2095
    %v2186 = vpack.c.b16 %v2099, %v2096
    %v2187 = vpack.c.b16 %v2100, %v2097
    %v2188 = vpack.c.b16 %v2104, %v2101
    %v2189 = vpack.c.b16 %v2105, %v2102
    %v2190 = vpack.c.b16 %v2106, %v2103
    %v2191 = vpack.c.b16 %v2110, %v2107
    %v2192 = vpack.c.b16 %v2111, %v2108
    %v2193 = vpack.c.b16 %v2112, %v2109
    %v2194 = vpack.c.b16 %v2116, %v2113
    %v2195 = vpack.c.b16 %v2117, %v2114
    %v2196 = vpack.c.b16 %v2118, %v2115
    %v2197 = vpack.c.b16 %v2122, %v2119
    %v2198 = vpack.c.b16 %v2123, %v2120
    %v2199 = vpack.c.b16 %v2124, %v2121
    %v2200 = vpack.c.b16 %v2128, %v2125
    %v2201 = vpack.c.b16 %v2129, %v2126
    %v2202 = vpack.c.b16 %v2130, %v2127
    %2275 = vmatprep.subr.bf16.mxu0 %v2132
    %2276 = vmatpush1.bf16.msra.mxu0 %v2131
    %2277 = vmatprep.subr.bf16.mxu0 %v2135
    %2278 = vmatpush1.bf16.msra.mxu0 %v2134
    %2279 = vmatprep.subr.bf16.mxu0 %v2138
    %2280 = vmatpush1.bf16.msra.mxu0 %v2137
    %2281 = vmatprep.subr.bf16.mxu0 %v2141
    %2282 = vmatpush1.bf16.msra.mxu0 %v2140
    %2283 = vmatprep.subr.bf16.mxu0 %v2144
    %2284 = vmatpush1.bf16.msra.mxu0 %v2143
    %2285 = vmatprep.subr.bf16.mxu0 %v2147
    %2286 = vmatpush1.bf16.msra.mxu0 %v2146
    %2287 = vmatprep.subr.bf16.mxu0 %v2150
    %2288 = vmatpush1.bf16.msra.mxu0 %v2149
    %2289 = vmatprep.subr.bf16.mxu0 %v2153
    %2290 = vmatpush1.bf16.msra.mxu0 %v2152
    %2291 = vmatprep.subr.bf16.mxu0 %v2156
    %2292 = vmatpush1.bf16.msra.mxu0 %v2155
    %2293 = vmatprep.subr.bf16.mxu0 %v2159
    %2294 = vmatpush1.bf16.msra.mxu0 %v2158
    %2295 = vmatprep.subr.bf16.mxu0 %v2162
    %2296 = vmatpush1.bf16.msra.mxu0 %v2161
    %2297 = vmatprep.subr.bf16.mxu0 %v2165
    %2298 = vmatpush1.bf16.msra.mxu0 %v2164
    %2299 = vmatprep.subr.bf16.mxu0 %v2168
    %2300 = vmatpush1.bf16.msra.mxu0 %v2167
    %2301 = vmatprep.subr.bf16.mxu0 %v2171
    %2302 = vmatpush1.bf16.msra.mxu0 %v2170
    %2303 = vmatprep.subr.bf16.mxu0 %v2174
    %2304 = vmatpush1.bf16.msra.mxu0 %v2173
    %2305 = vmatprep.subr.bf16.mxu0 %v2177
    %2306 = vmatpush1.bf16.msra.mxu0 %v2176
    %2307 = vmatprep.mubr.bf16.mxu0 %v1774
    %2308 = vmatmul.mubr.bf16.gmra.mrb[0].mxu0 %v1773
    %v2309 = vpop.f32.mrb[0].mxu0
    %v2310 = vadd.f32 %v1879, %v2309
    %v2311 = vpop.f32.mrb[0].mxu0
    %v2312 = vadd.f32 %v1883, %v2311
    %v2313 = vpop.f32.mrb[0].mxu0
    %v2314 = vadd.f32 %v1879, %v2313
    %v2315 = vpop.f32.mrb[0].mxu0
    %v2316 = vadd.f32 %v1883, %v2315
    %2317 = vdwg.mxu0
    %2318 = vmatprep.subr.bf16.mxu0 %v2180
    %2319 = vmatpush1.bf16.msra.mxu0 %v2179
    %2320 = vmatprep.subr.bf16.mxu0 %v2183
    %2321 = vmatpush1.bf16.msra.mxu0 %v2182
    %2322 = vmatprep.subr.bf16.mxu0 %v2186
    %2323 = vmatpush1.bf16.msra.mxu0 %v2185
    %2324 = vmatprep.subr.bf16.mxu0 %v2189
    %2325 = vmatpush1.bf16.msra.mxu0 %v2188
    %2326 = vmatprep.subr.bf16.mxu0 %v2192
    %2327 = vmatpush1.bf16.msra.mxu0 %v2191
    %2328 = vmatprep.subr.bf16.mxu0 %v2195
    %2329 = vmatpush1.bf16.msra.mxu0 %v2194
    %2330 = vmatprep.subr.bf16.mxu0 %v2198
    %2331 = vmatpush1.bf16.msra.mxu0 %v2197
    %2332 = vmatprep.subr.bf16.mxu0 %v2201
    %2333 = vmatpush1.bf16.msra.mxu0 %v2200
    %2334 = vmatprep.subr.bf16.mxu0 0
    %2335 = vmatpush1.bf16.msra.mxu0 0
    %2336 = vmatprep.subr.bf16.mxu0 0
    %2337 = vmatpush1.bf16.msra.mxu0 0
    %2338 = vmatprep.subr.bf16.mxu0 0
    %2339 = vmatpush1.bf16.msra.mxu0 0
    %2340 = vmatprep.subr.bf16.mxu0 0
    %2341 = vmatpush1.bf16.msra.mxu0 0
    %2342 = vmatprep.subr.bf16.mxu0 0
    %2343 = vmatpush1.bf16.msra.mxu0 0
    %2344 = vmatprep.subr.bf16.mxu0 0
    %2345 = vmatpush1.bf16.msra.mxu0 0
    %2346 = vmatprep.subr.bf16.mxu0 0
    %2347 = vmatpush1.bf16.msra.mxu0 0
    %2348 = vmatprep.subr.bf16.mxu0 0
    %2349 = vmatpush1.bf16.msra.mxu0 0
    %2350 = vmatprep.mubr.bf16.mxu0 0
    %2351 = vmatmul.mubr.bf16.gmra.mrb[0].mxu0 %v1775
    %v2352 = vpop.f32.mrb[0].mxu0
    %v2353 = vadd.f32 %v2310, %v2352
    %v2354 = vpop.f32.mrb[0].mxu0
    %v2355 = vadd.f32 %v2312, %v2354
    %v2356 = vpop.f32.mrb[0].mxu0
    %v2357 = vadd.f32 %v2314, %v2356
    %v2358 = vpop.f32.mrb[0].mxu0
    %v2359 = vadd.f32 %v2316, %v2358
    %2360 = vdwg.mxu0
    %2361 = vmatprep.subr.bf16.mxu0 0
    %2362 = vmatpush1.bf16.msra.mxu0 %v2133
    %2363 = vmatprep.subr.bf16.mxu0 0
    %2364 = vmatpush1.bf16.msra.mxu0 %v2136
    %2365 = vmatprep.subr.bf16.mxu0 0
    %2366 = vmatpush1.bf16.msra.mxu0 %v2139
    %2367 = vmatprep.subr.bf16.mxu0 0
    %2368 = vmatpush1.bf16.msra.mxu0 %v2142
    %2369 = vmatprep.subr.bf16.mxu0 0
    %2370 = vmatpush1.bf16.msra.mxu0 %v2145
    %2371 = vmatprep.subr.bf16.mxu0 0
    %2372 = vmatpush1.bf16.msra.mxu0 %v2148
    %2373 = vmatprep.subr.bf16.mxu0 0
    %2374 = vmatpush1.bf16.msra.mxu0 %v2151
    %2375 = vmatprep.subr.bf16.mxu0 0
    %2376 = vmatpush1.bf16.msra.mxu0 %v2154
    %2377 = vmatprep.subr.bf16.mxu0 0
    %2378 = vmatpush1.bf16.msra.mxu0 %v2157
    %2379 = vmatprep.subr.bf16.mxu0 0
    %2380 = vmatpush1.bf16.msra.mxu0 %v2160
    %2381 = vmatprep.subr.bf16.mxu0 0
    %2382 = vmatpush1.bf16.msra.mxu0 %v2163
    %2383 = vmatprep.subr.bf16.mxu0 0
    %2384 = vmatpush1.bf16.msra.mxu0 %v2166
    %2385 = vmatprep.subr.bf16.mxu0 0
    %2386 = vmatpush1.bf16.msra.mxu0 %v2169
    %2387 = vmatprep.subr.bf16.mxu0 0
    %2388 = vmatpush1.bf16.msra.mxu0 %v2172
    %2389 = vmatprep.subr.bf16.mxu0 0
    %2390 = vmatpush1.bf16.msra.mxu0 %v2175
    %2391 = vmatprep.subr.bf16.mxu0 0
    %2392 = vmatpush1.bf16.msra.mxu0 %v2178
    %2393 = vmatprep.mubr.bf16.mxu0 %v1774
    %2394 = vmatmul.mubr.bf16.gmra.mrb[0].mxu0 %v1773
    %v2395 = vpop.f32.mrb[0].mxu0
    %v2396 = vadd.f32 %v1887, %v2395
    %v2397 = vpop.f32.mrb[0].mxu0
    %v2398 = vpop.f32.mrb[0].mxu0
    %v2399 = vadd.f32 %v1887, %v2398
    %v2400 = vpop.f32.mrb[0].mxu0
    %2401 = vdwg.mxu0
    %2402 = vmatprep.subr.bf16.mxu0 0
    %2403 = vmatpush1.bf16.msra.mxu0 %v2181
    %2404 = vmatprep.subr.bf16.mxu0 0
    %2405 = vmatpush1.bf16.msra.mxu0 %v2184
    %2406 = vmatprep.subr.bf16.mxu0 0
    %2407 = vmatpush1.bf16.msra.mxu0 %v2187
    %2408 = vmatprep.subr.bf16.mxu0 0
    %2409 = vmatpush1.bf16.msra.mxu0 %v2190
    %2410 = vmatprep.subr.bf16.mxu0 0
    %2411 = vmatpush1.bf16.msra.mxu0 %v2193
    %2412 = vmatprep.subr.bf16.mxu0 0
    %2413 = vmatpush1.bf16.msra.mxu0 %v2196
    %2414 = vmatprep.subr.bf16.mxu0 0
    %2415 = vmatpush1.bf16.msra.mxu0 %v2199
    %2416 = vmatprep.subr.bf16.mxu0 0
    %2417 = vmatpush1.bf16.msra.mxu0 %v2202
    %2418 = vmatprep.subr.bf16.mxu0 0
    %2419 = vmatpush1.bf16.msra.mxu0 0
    %2420 = vmatprep.subr.bf16.mxu0 0
    %2421 = vmatpush1.bf16.msra.mxu0 0
    %2422 = vmatprep.subr.bf16.mxu0 0
    %2423 = vmatpush1.bf16.msra.mxu0 0
    %2424 = vmatprep.subr.bf16.mxu0 0
    %2425 = vmatpush1.bf16.msra.mxu0 0
    %2426 = vmatprep.subr.bf16.mxu0 0
    %2427 = vmatpush1.bf16.msra.mxu0 0
    %2428 = vmatprep.subr.bf16.mxu0 0
    %2429 = vmatpush1.bf16.msra.mxu0 0
    %2430 = vmatprep.subr.bf16.mxu0 0
    %2431 = vmatpush1.bf16.msra.mxu0 0
    %2432 = vmatprep.subr.bf16.mxu0 0
    %2433 = vmatpush1.bf16.msra.mxu0 0
    %2434 = vmatprep.mubr.bf16.mxu0 0
    %2435 = vmatmul.mubr.bf16.gmra.mrb[0].mxu0 %v1775
    %v2436 = vpop.f32.mrb[0].mxu0
    %v2437 = vadd.f32 %v2396, %v2436
    %v2438 = vpop.f32.mrb[0].mxu0
    %v2439 = vpop.f32.mrb[0].mxu0
    %v2440 = vadd.f32 %v2399, %v2439
    %v2441 = vpop.f32.mrb[0].mxu0
    %2442 = vdwg.mxu0
    %v2443 = vadd.f32 %v2353, %v1767
    %v2444 = vadd.f32 %v2355, %v1768
    %v2445 = vadd.f32 %v2437, %v1769
    %v2446 = vadd.f32 %v2357, %v1770
    %v2447 = vadd.f32 %v2359, %v1771
    %v2448 = vadd.f32 %v2440, %v1772
    %v2449 = vmax.f32 %v2443, 0.0
    %v2450 = vmax.f32 %v2444, 0.0
    %v2451 = vmax.f32 %v2445, 0.0
    %v2452 = vmax.f32 %v2446, 0.0
    %v2453 = vmax.f32 %v2447, 0.0
    %v2454 = vmax.f32 %v2448, 0.0
    %v2455 = vpack.c.bf16 %v2452, %v2449
    %v2456 = vpack.c.bf16 %v2453, %v2450
    %v2457 = vpack.c.bf16 %v2454, %v2451
    %s2458 = scalar_lea.vmem [#allocation11], 1728
    %v2459 = vld [vmem:[%s2458] sm:$0xff]
    %v2460 = vld [vmem:[%s2458 + $0x8] sm:$0xf]
    %v2461 = vld [vmem:[%s2458 + $0xc] sm:$0xff]
    %v2462 = vld [vmem:[%s2458 + $0x14] sm:$0xf]
    %v2463 = vld [vmem:[%s2458 + $0x18] sm:$0xff]
    %v2464 = vld [vmem:[%s2458 + $0x20] sm:$0xf]
    %v2465 = vld [vmem:[%s2458 + $0x24] sm:$0xff]
    %v2466 = vld [vmem:[%s2458 + $0x2c] sm:$0xf]
    %v2467 = vld [vmem:[%s2458 + $0x30] sm:$0xff]
    %v2468 = vld [vmem:[%s2458 + $0x38] sm:$0xf]
    %v2469 = vld [vmem:[%s2458 + $0x3c] sm:$0xff]
    %v2470 = vld [vmem:[%s2458 + $0x44] sm:$0xf]
    %v2471 = vld [vmem:[%s2458 + $0x48] sm:$0xff]
    %v2472 = vld [vmem:[%s2458 + $0x50] sm:$0xf]
    %v2473 = vld [vmem:[%s2458 + $0x54] sm:$0xff]
    %v2474 = vld [vmem:[%s2458 + $0x5c] sm:$0xf]
    %v2475 = vld [vmem:[%s2458 + $0x60] sm:$0xff]
    %v2476 = vld [vmem:[%s2458 + $0x68] sm:$0xf]
    %v2477 = vld [vmem:[%s2458 + $0x6c] sm:$0xff]
    %v2478 = vld [vmem:[%s2458 + $0x74] sm:$0xf]
    %v2479 = vld [vmem:[%s2458 + $0x78] sm:$0xff]
    %v2480 = vld [vmem:[%s2458 + $0x80] sm:$0xf]
    %v2481 = vld [vmem:[%s2458 + $0x84] sm:$0xff]
    %v2482 = vld [vmem:[%s2458 + $0x8c] sm:$0xf]
    %v2483 = vld [vmem:[%s2458 + $0x90] sm:$0xff]
    %v2484 = vld [vmem:[%s2458 + $0x98] sm:$0xf]
    %v2485 = vld [vmem:[%s2458 + $0x9c] sm:$0xff]
    %v2486 = vld [vmem:[%s2458 + $0xa4] sm:$0xf]
    %v2487 = vld [vmem:[%s2458 + $0xa8] sm:$0xff]
    %v2488 = vld [vmem:[%s2458 + $0xb0] sm:$0xf]
    %v2489 = vld [vmem:[%s2458 + $0xb4] sm:$0xff]
    %v2490 = vld [vmem:[%s2458 + $0xbc] sm:$0xf]
    %v2491 = vld [vmem:[%s2458 + $0xc0] sm:$0xff]
    %v2492 = vld [vmem:[%s2458 + $0xc8] sm:$0xf]
    %v2493 = vld [vmem:[%s2458 + $0xcc] sm:$0xff]
    %v2494 = vld [vmem:[%s2458 + $0xd4] sm:$0xf]
    %v2495 = vld [vmem:[%s2458 + $0xd8] sm:$0xff]
    %v2496 = vld [vmem:[%s2458 + $0xe0] sm:$0xf]
    %v2497 = vld [vmem:[%s2458 + $0xe4] sm:$0xff]
    %v2498 = vld [vmem:[%s2458 + $0xec] sm:$0xf]
    %v2499 = vld [vmem:[%s2458 + $0xf0] sm:$0xff]
    %v2500 = vld [vmem:[%s2458 + $0xf8] sm:$0xf]
    %v2501 = vld [vmem:[%s2458 + $0xfc] sm:$0xff]
    %v2502 = vld [vmem:[%s2458 + $0x104] sm:$0xf]
    %v2503 = vld [vmem:[%s2458 + $0x108] sm:$0xff]
    %v2504 = vld [vmem:[%s2458 + $0x110] sm:$0xf]
    %v2505 = vld [vmem:[%s2458 + $0x114] sm:$0xff]
    %v2506 = vld [vmem:[%s2458 + $0x11c] sm:$0xf]
    %v2507 = vld [vmem:[%s2458 + $0x120] sm:$0xff]
    %v2508 = vld [vmem:[%s2458 + $0x128] sm:$0xf]
    %v2509 = vld [vmem:[%s2458 + $0x12c] sm:$0xff]
    %v2510 = vld [vmem:[%s2458 + $0x134] sm:$0xf]
    %v2511 = vld [vmem:[%s2458 + $0x138] sm:$0xff]
    %v2512 = vld [vmem:[%s2458 + $0x140] sm:$0xf]
    %v2513 = vld [vmem:[%s2458 + $0x144] sm:$0xff]
    %v2514 = vld [vmem:[%s2458 + $0x14c] sm:$0xf]
    %v2515 = vld [vmem:[%s2458 + $0x150] sm:$0xff]
    %v2516 = vld [vmem:[%s2458 + $0x158] sm:$0xf]
    %v2517 = vld [vmem:[%s2458 + $0x15c] sm:$0xff]
    %v2518 = vld [vmem:[%s2458 + $0x164] sm:$0xf]
    %v2519 = vld [vmem:[%s2458 + $0x168] sm:$0xff]
    %v2520 = vld [vmem:[%s2458 + $0x170] sm:$0xf]
    %v2521 = vld [vmem:[%s2458 + $0x174] sm:$0xff]
    %v2522 = vld [vmem:[%s2458 + $0x17c] sm:$0xf]
    %v2523 = vld [vmem:[%s2458 + $0x180] sm:$0xff]
    %v2524 = vld [vmem:[%s2458 + $0x188] sm:$0xf]
    %v2525 = vld [vmem:[%s2458 + $0x18c] sm:$0xff]
    %v2526 = vld [vmem:[%s2458 + $0x194] sm:$0xf]
    %v2527 = vld [vmem:[%s2458 + $0x198] sm:$0xff]
    %v2528 = vld [vmem:[%s2458 + $0x1a0] sm:$0xf]
    %v2529 = vld [vmem:[%s2458 + $0x1a4] sm:$0xff]
    %v2530 = vld [vmem:[%s2458 + $0x1ac] sm:$0xf]
    %v2531 = vld [vmem:[%s2458 + $0x1b0] sm:$0xff]
    %v2532 = vld [vmem:[%s2458 + $0x1b8] sm:$0xf]
    %v2533 = vld [vmem:[%s2458 + $0x1bc] sm:$0xff]
    %v2534 = vld [vmem:[%s2458 + $0x1c4] sm:$0xf]
    %v2535 = vld [vmem:[%s2458 + $0x1c8] sm:$0xff]
    %v2536 = vld [vmem:[%s2458 + $0x1d0] sm:$0xf]
    %v2537 = vld [vmem:[%s2458 + $0x1d4] sm:$0xff]
    %v2538 = vld [vmem:[%s2458 + $0x1dc] sm:$0xf]
    %v2539 = vld [vmem:[%s2458 + $0x1e0] sm:$0xff]
    %v2540 = vld [vmem:[%s2458 + $0x1e8] sm:$0xf]
    %v2541 = vld [vmem:[%s2458 + $0x1ec] sm:$0xff]
    %v2542 = vld [vmem:[%s2458 + $0x1f4] sm:$0xf]
    %v2543 = vld [vmem:[%s2458 + $0x1f8] sm:$0xff]
    %v2544 = vld [vmem:[%s2458 + $0x200] sm:$0xf]
    %v2545 = vld [vmem:[%s2458 + $0x204] sm:$0xff]
    %v2546 = vld [vmem:[%s2458 + $0x20c] sm:$0xf]
    %v2547 = vld [vmem:[%s2458 + $0x210] sm:$0xff]
    %v2548 = vld [vmem:[%s2458 + $0x218] sm:$0xf]
    %v2549 = vld [vmem:[%s2458 + $0x21c] sm:$0xff]
    %v2550 = vld [vmem:[%s2458 + $0x224] sm:$0xf]
    %v2551 = vld [vmem:[%s2458 + $0x228] sm:$0xff]
    %v2552 = vld [vmem:[%s2458 + $0x230] sm:$0xf]
    %v2553 = vld [vmem:[%s2458 + $0x234] sm:$0xff]
    %v2554 = vld [vmem:[%s2458 + $0x23c] sm:$0xf]
    %s2555 = scalar_lea.vmem [#allocation13], 3
    %v2556 = vld [vmem:[%s2555] ss:$4 sm:$0x7]
    %v2558 = vlaneseq
    %v2559 = vshrl.u32 %v2558, 7
    %v2560 = vsub.s32 0, %v2559
    %v2561 = vrot.slane %v2556, %v2560
    %v2562 = vlaneseq
    %v2563 = vshrl.u32 %v2562, 7
    %v2564 = vsub.s32 1, %v2563
    %v2565 = vrot.slane %v2556, %v2564
    %v2566 = vlaneseq
    %v2567 = vshrl.u32 %v2566, 7
    %v2568 = vsub.s32 2, %v2567
    %v2569 = vrot.slane %v2556, %v2568
    %v2669 = vunpack.c.l.b16 %v2459
    %v2670 = vunpack.c.h.b16 %v2459
    %v2671 = vunpack.c.l.b16 %v2460
    %v2672 = vunpack.c.l.b16 %v2461
    %v2673 = vunpack.c.h.b16 %v2461
    %v2674 = vunpack.c.l.b16 %v2462
    %v2675 = vunpack.c.l.b16 %v2463
    %v2676 = vunpack.c.h.b16 %v2463
    %v2677 = vunpack.c.l.b16 %v2464
    %v2678 = vunpack.c.l.b16 %v2465
    %v2679 = vunpack.c.h.b16 %v2465
    %v2680 = vunpack.c.l.b16 %v2466
    %v2681 = vunpack.c.l.b16 %v2467
    %v2682 = vunpack.c.h.b16 %v2467
    %v2683 = vunpack.c.l.b16 %v2468
    %v2684 = vunpack.c.l.b16 %v2469
    %v2685 = vunpack.c.h.b16 %v2469
    %v2686 = vunpack.c.l.b16 %v2470
    %v2687 = vunpack.c.l.b16 %v2471
    %v2688 = vunpack.c.h.b16 %v2471
    %v2689 = vunpack.c.l.b16 %v2472
    %v2690 = vunpack.c.l.b16 %v2473
    %v2691 = vunpack.c.h.b16 %v2473
    %v2692 = vunpack.c.l.b16 %v2474
    %v2693 = vunpack.c.l.b16 %v2475
    %v2694 = vunpack.c.h.b16 %v2475
    %v2695 = vunpack.c.l.b16 %v2476
    %v2696 = vunpack.c.l.b16 %v2477
    %v2697 = vunpack.c.h.b16 %v2477
    %v2698 = vunpack.c.l.b16 %v2478
    %v2699 = vunpack.c.l.b16 %v2479
    %v2700 = vunpack.c.h.b16 %v2479
    %v2701 = vunpack.c.l.b16 %v2480
    %v2702 = vunpack.c.l.b16 %v2481
    %v2703 = vunpack.c.h.b16 %v2481
    %v2704 = vunpack.c.l.b16 %v2482
    %v2705 = vunpack.c.l.b16 %v2483
    %v2706 = vunpack.c.h.b16 %v2483
    %v2707 = vunpack.c.l.b16 %v2484
    %v2708 = vunpack.c.l.b16 %v2485
    %v2709 = vunpack.c.h.b16 %v2485
    %v2710 = vunpack.c.l.b16 %v2486
    %v2711 = vunpack.c.l.b16 %v2487
    %v2712 = vunpack.c.h.b16 %v2487
    %v2713 = vunpack.c.l.b16 %v2488
    %v2714 = vunpack.c.l.b16 %v2489
    %v2715 = vunpack.c.h.b16 %v2489
    %v2716 = vunpack.c.l.b16 %v2490
    %v2717 = vunpack.c.l.b16 %v2491
    %v2718 = vunpack.c.h.b16 %v2491
    %v2719 = vunpack.c.l.b16 %v2492
    %v2720 = vunpack.c.l.b16 %v2493
    %v2721 = vunpack.c.h.b16 %v2493
    %v2722 = vunpack.c.l.b16 %v2494
    %v2723 = vunpack.c.l.b16 %v2495
    %v2724 = vunpack.c.h.b16 %v2495
    %v2725 = vunpack.c.l.b16 %v2496
    %v2726 = vunpack.c.l.b16 %v2497
    %v2727 = vunpack.c.h.b16 %v2497
    %v2728 = vunpack.c.l.b16 %v2498
    %v2729 = vunpack.c.l.b16 %v2499
    %v2730 = vunpack.c.h.b16 %v2499
    %v2731 = vunpack.c.l.b16 %v2500
    %v2732 = vunpack.c.l.b16 %v2501
    %v2733 = vunpack.c.h.b16 %v2501
    %v2734 = vunpack.c.l.b16 %v2502
    %v2735 = vunpack.c.l.b16 %v2503
    %v2736 = vunpack.c.h.b16 %v2503
    %v2737 = vunpack.c.l.b16 %v2504
    %v2738 = vunpack.c.l.b16 %v2505
    %v2739 = vunpack.c.h.b16 %v2505
    %v2740 = vunpack.c.l.b16 %v2506
    %v2741 = vunpack.c.l.b16 %v2507
    %v2742 = vunpack.c.h.b16 %v2507
    %v2743 = vunpack.c.l.b16 %v2508
    %v2744 = vunpack.c.l.b16 %v2509
    %v2745 = vunpack.c.h.b16 %v2509
    %v2746 = vunpack.c.l.b16 %v2510
    %v2747 = vunpack.c.l.b16 %v2511
    %v2748 = vunpack.c.h.b16 %v2511
    %v2749 = vunpack.c.l.b16 %v2512
    %v2750 = vunpack.c.l.b16 %v2513
    %v2751 = vunpack.c.h.b16 %v2513
    %v2752 = vunpack.c.l.b16 %v2514
    %v2753 = vunpack.c.l.b16 %v2515
    %v2754 = vunpack.c.h.b16 %v2515
    %v2755 = vunpack.c.l.b16 %v2516
    %v2756 = vunpack.c.l.b16 %v2517
    %v2757 = vunpack.c.h.b16 %v2517
    %v2758 = vunpack.c.l.b16 %v2518
    %v2759 = vunpack.c.l.b16 %v2519
    %v2760 = vunpack.c.h.b16 %v2519
    %v2761 = vunpack.c.l.b16 %v2520
    %v2762 = vunpack.c.l.b16 %v2521
    %v2763 = vunpack.c.h.b16 %v2521
    %v2764 = vunpack.c.l.b16 %v2522
    %v2765 = vunpack.c.l.b16 %v2523
    %v2766 = vunpack.c.h.b16 %v2523
    %v2767 = vunpack.c.l.b16 %v2524
    %v2768 = vunpack.c.l.b16 %v2525
    %v2769 = vunpack.c.h.b16 %v2525
    %v2770 = vunpack.c.l.b16 %v2526
    %v2771 = vunpack.c.l.b16 %v2527
    %v2772 = vunpack.c.h.b16 %v2527
    %v2773 = vunpack.c.l.b16 %v2528
    %v2774 = vunpack.c.l.b16 %v2529
    %v2775 = vunpack.c.h.b16 %v2529
    %v2776 = vunpack.c.l.b16 %v2530
    %v2777 = vunpack.c.l.b16 %v2531
    %v2778 = vunpack.c.h.b16 %v2531
    %v2779 = vunpack.c.l.b16 %v2532
    %v2780 = vunpack.c.l.b16 %v2533
    %v2781 = vunpack.c.h.b16 %v2533
    %v2782 = vunpack.c.l.b16 %v2534
    %v2783 = vunpack.c.l.b16 %v2535
    %v2784 = vunpack.c.h.b16 %v2535
    %v2785 = vunpack.c.l.b16 %v2536
    %v2786 = vunpack.c.l.b16 %v2537
    %v2787 = vunpack.c.h.b16 %v2537
    %v2788 = vunpack.c.l.b16 %v2538
    %v2789 = vunpack.c.l.b16 %v2539
    %v2790 = vunpack.c.h.b16 %v2539
    %v2791 = vunpack.c.l.b16 %v2540
    %v2792 = vunpack.c.l.b16 %v2541
    %v2793 = vunpack.c.h.b16 %v2541
    %v2794 = vunpack.c.l.b16 %v2542
    %v2795 = vunpack.c.l.b16 %v2543
    %v2796 = vunpack.c.h.b16 %v2543
    %v2797 = vunpack.c.l.b16 %v2544
    %v2798 = vunpack.c.l.b16 %v2545
    %v2799 = vunpack.c.h.b16 %v2545
    %v2800 = vunpack.c.l.b16 %v2546
    %v2801 = vunpack.c.l.b16 %v2547
    %v2802 = vunpack.c.h.b16 %v2547
    %v2803 = vunpack.c.l.b16 %v2548
    %v2804 = vunpack.c.l.b16 %v2549
    %v2805 = vunpack.c.h.b16 %v2549
    %v2806 = vunpack.c.l.b16 %v2550
    %v2807 = vunpack.c.l.b16 %v2551
    %v2808 = vunpack.c.h.b16 %v2551
    %v2809 = vunpack.c.l.b16 %v2552
    %v2810 = vunpack.c.l.b16 %v2553
    %v2811 = vunpack.c.h.b16 %v2553
    %v2812 = vunpack.c.l.b16 %v2554
    %v2813 = vpack.c.b16 %v2672, %v2669
    %v2814 = vpack.c.b16 %v2673, %v2670
    %v2815 = vpack.c.b16 %v2674, %v2671
    %v2816 = vpack.c.b16 %v2678, %v2675
    %v2817 = vpack.c.b16 %v2679, %v2676
    %v2818 = vpack.c.b16 %v2680, %v2677
    %v2819 = vpack.c.b16 %v2684, %v2681
    %v2820 = vpack.c.b16 %v2685, %v2682
    %v2821 = vpack.c.b16 %v2686, %v2683
    %v2822 = vpack.c.b16 %v2690, %v2687
    %v2823 = vpack.c.b16 %v2691, %v2688
    %v2824 = vpack.c.b16 %v2692, %v2689
    %v2825 = vpack.c.b16 %v2696, %v2693
    %v2826 = vpack.c.b16 %v2697, %v2694
    %v2827 = vpack.c.b16 %v2698, %v2695
    %v2828 = vpack.c.b16 %v2702, %v2699
    %v2829 = vpack.c.b16 %v2703, %v2700
    %v2830 = vpack.c.b16 %v2704, %v2701
    %v2831 = vpack.c.b16 %v2708, %v2705
    %v2832 = vpack.c.b16 %v2709, %v2706
    %v2833 = vpack.c.b16 %v2710, %v2707
    %v2834 = vpack.c.b16 %v2714, %v2711
    %v2835 = vpack.c.b16 %v2715, %v2712
    %v2836 = vpack.c.b16 %v2716, %v2713
    %v2837 = vpack.c.b16 %v2720, %v2717
    %v2838 = vpack.c.b16 %v2721, %v2718
    %v2839 = vpack.c.b16 %v2722, %v2719
    %v2840 = vpack.c.b16 %v2726, %v2723
    %v2841 = vpack.c.b16 %v2727, %v2724
    %v2842 = vpack.c.b16 %v2728, %v2725
    %v2843 = vpack.c.b16 %v2732, %v2729
    %v2844 = vpack.c.b16 %v2733, %v2730
    %v2845 = vpack.c.b16 %v2734, %v2731
    %v2846 = vpack.c.b16 %v2738, %v2735
    %v2847 = vpack.c.b16 %v2739, %v2736
    %v2848 = vpack.c.b16 %v2740, %v2737
    %v2849 = vpack.c.b16 %v2744, %v2741
    %v2850 = vpack.c.b16 %v2745, %v2742
    %v2851 = vpack.c.b16 %v2746, %v2743
    %v2852 = vpack.c.b16 %v2750, %v2747
    %v2853 = vpack.c.b16 %v2751, %v2748
    %v2854 = vpack.c.b16 %v2752, %v2749
    %v2855 = vpack.c.b16 %v2756, %v2753
    %v2856 = vpack.c.b16 %v2757, %v2754
    %v2857 = vpack.c.b16 %v2758, %v2755
    %v2858 = vpack.c.b16 %v2762, %v2759
    %v2859 = vpack.c.b16 %v2763, %v2760
    %v2860 = vpack.c.b16 %v2764, %v2761
    %v2861 = vpack.c.b16 %v2768, %v2765
    %v2862 = vpack.c.b16 %v2769, %v2766
    %v2863 = vpack.c.b16 %v2770, %v2767
    %v2864 = vpack.c.b16 %v2774, %v2771
    %v2865 = vpack.c.b16 %v2775, %v2772
    %v2866 = vpack.c.b16 %v2776, %v2773
    %v2867 = vpack.c.b16 %v2780, %v2777
    %v2868 = vpack.c.b16 %v2781, %v2778
    %v2869 = vpack.c.b16 %v2782, %v2779
    %v2870 = vpack.c.b16 %v2786, %v2783
    %v2871 = vpack.c.b16 %v2787, %v2784
    %v2872 = vpack.c.b16 %v2788, %v2785
    %v2873 = vpack.c.b16 %v2792, %v2789
    %v2874 = vpack.c.b16 %v2793, %v2790
    %v2875 = vpack.c.b16 %v2794, %v2791
    %v2876 = vpack.c.b16 %v2798, %v2795
    %v2877 = vpack.c.b16 %v2799, %v2796
    %v2878 = vpack.c.b16 %v2800, %v2797
    %v2879 = vpack.c.b16 %v2804, %v2801
    %v2880 = vpack.c.b16 %v2805, %v2802
    %v2881 = vpack.c.b16 %v2806, %v2803
    %v2882 = vpack.c.b16 %v2810, %v2807
    %v2883 = vpack.c.b16 %v2811, %v2808
    %v2884 = vpack.c.b16 %v2812, %v2809
    %2957 = vmatprep.subr.bf16.mxu0 %v2814
    %2958 = vmatpush1.bf16.msra.mxu0 %v2813
    %2959 = vmatprep.subr.bf16.mxu0 %v2817
    %2960 = vmatpush1.bf16.msra.mxu0 %v2816
    %2961 = vmatprep.subr.bf16.mxu0 %v2820
    %2962 = vmatpush1.bf16.msra.mxu0 %v2819
    %2963 = vmatprep.subr.bf16.mxu0 %v2823
    %2964 = vmatpush1.bf16.msra.mxu0 %v2822
    %2965 = vmatprep.subr.bf16.mxu0 %v2826
    %2966 = vmatpush1.bf16.msra.mxu0 %v2825
    %2967 = vmatprep.subr.bf16.mxu0 %v2829
    %2968 = vmatpush1.bf16.msra.mxu0 %v2828
    %2969 = vmatprep.subr.bf16.mxu0 %v2832
    %2970 = vmatpush1.bf16.msra.mxu0 %v2831
    %2971 = vmatprep.subr.bf16.mxu0 %v2835
    %2972 = vmatpush1.bf16.msra.mxu0 %v2834
    %2973 = vmatprep.subr.bf16.mxu0 %v2838
    %2974 = vmatpush1.bf16.msra.mxu0 %v2837
    %2975 = vmatprep.subr.bf16.mxu0 %v2841
    %2976 = vmatpush1.bf16.msra.mxu0 %v2840
    %2977 = vmatprep.subr.bf16.mxu0 %v2844
    %2978 = vmatpush1.bf16.msra.mxu0 %v2843
    %2979 = vmatprep.subr.bf16.mxu0 %v2847
    %2980 = vmatpush1.bf16.msra.mxu0 %v2846
    %2981 = vmatprep.subr.bf16.mxu0 %v2850
    %2982 = vmatpush1.bf16.msra.mxu0 %v2849
    %2983 = vmatprep.subr.bf16.mxu0 %v2853
    %2984 = vmatpush1.bf16.msra.mxu0 %v2852
    %2985 = vmatprep.subr.bf16.mxu0 %v2856
    %2986 = vmatpush1.bf16.msra.mxu0 %v2855
    %2987 = vmatprep.subr.bf16.mxu0 %v2859
    %2988 = vmatpush1.bf16.msra.mxu0 %v2858
    %2989 = vmatprep.mubr.bf16.mxu0 %v2456
    %2990 = vmatmul.mubr.bf16.gmra.mrb[0].mxu0 %v2455
    %v2991 = vpop.f32.mrb[0].mxu0
    %v2992 = vadd.f32 %v2561, %v2991
    %v2993 = vpop.f32.mrb[0].mxu0
    %v2994 = vadd.f32 %v2565, %v2993
    %v2995 = vpop.f32.mrb[0].mxu0
    %v2996 = vadd.f32 %v2561, %v2995
    %v2997 = vpop.f32.mrb[0].mxu0
    %v2998 = vadd.f32 %v2565, %v2997
    %2999 = vdwg.mxu0
    %3000 = vmatprep.subr.bf16.mxu0 %v2862
    %3001 = vmatpush1.bf16.msra.mxu0 %v2861
    %3002 = vmatprep.subr.bf16.mxu0 %v2865
    %3003 = vmatpush1.bf16.msra.mxu0 %v2864
    %3004 = vmatprep.subr.bf16.mxu0 %v2868
    %3005 = vmatpush1.bf16.msra.mxu0 %v2867
    %3006 = vmatprep.subr.bf16.mxu0 %v2871
    %3007 = vmatpush1.bf16.msra.mxu0 %v2870
    %3008 = vmatprep.subr.bf16.mxu0 %v2874
    %3009 = vmatpush1.bf16.msra.mxu0 %v2873
    %3010 = vmatprep.subr.bf16.mxu0 %v2877
    %3011 = vmatpush1.bf16.msra.mxu0 %v2876
    %3012 = vmatprep.subr.bf16.mxu0 %v2880
    %3013 = vmatpush1.bf16.msra.mxu0 %v2879
    %3014 = vmatprep.subr.bf16.mxu0 %v2883
    %3015 = vmatpush1.bf16.msra.mxu0 %v2882
    %3016 = vmatprep.subr.bf16.mxu0 0
    %3017 = vmatpush1.bf16.msra.mxu0 0
    %3018 = vmatprep.subr.bf16.mxu0 0
    %3019 = vmatpush1.bf16.msra.mxu0 0
    %3020 = vmatprep.subr.bf16.mxu0 0
    %3021 = vmatpush1.bf16.msra.mxu0 0
    %3022 = vmatprep.subr.bf16.mxu0 0
    %3023 = vmatpush1.bf16.msra.mxu0 0
    %3024 = vmatprep.subr.bf16.mxu0 0
    %3025 = vmatpush1.bf16.msra.mxu0 0
    %3026 = vmatprep.subr.bf16.mxu0 0
    %3027 = vmatpush1.bf16.msra.mxu0 0
    %3028 = vmatprep.subr.bf16.mxu0 0
    %3029 = vmatpush1.bf16.msra.mxu0 0
    %3030 = vmatprep.subr.bf16.mxu0 0
    %3031 = vmatpush1.bf16.msra.mxu0 0
    %3032 = vmatprep.mubr.bf16.mxu0 0
    %3033 = vmatmul.mubr.bf16.gmra.mrb[0].mxu0 %v2457
    %v3034 = vpop.f32.mrb[0].mxu0
    %v3035 = vadd.f32 %v2992, %v3034
    %v3036 = vpop.f32.mrb[0].mxu0
    %v3037 = vadd.f32 %v2994, %v3036
    %v3038 = vpop.f32.mrb[0].mxu0
    %v3039 = vadd.f32 %v2996, %v3038
    %v3040 = vpop.f32.mrb[0].mxu0
    %v3041 = vadd.f32 %v2998, %v3040
    %3042 = vdwg.mxu0
    %3043 = vmatprep.subr.bf16.mxu0 0
    %3044 = vmatpush1.bf16.msra.mxu0 %v2815
    %3045 = vmatprep.subr.bf16.mxu0 0
    %3046 = vmatpush1.bf16.msra.mxu0 %v2818
    %3047 = vmatprep.subr.bf16.mxu0 0
    %3048 = vmatpush1.bf16.msra.mxu0 %v2821
    %3049 = vmatprep.subr.bf16.mxu0 0
    %3050 = vmatpush1.bf16.msra.mxu0 %v2824
    %3051 = vmatprep.subr.bf16.mxu0 0
    %3052 = vmatpush1.bf16.msra.mxu0 %v2827
    %3053 = vmatprep.subr.bf16.mxu0 0
    %3054 = vmatpush1.bf16.msra.mxu0 %v2830
    %3055 = vmatprep.subr.bf16.mxu0 0
    %3056 = vmatpush1.bf16.msra.mxu0 %v2833
    %3057 = vmatprep.subr.bf16.mxu0 0
    %3058 = vmatpush1.bf16.msra.mxu0 %v2836
    %3059 = vmatprep.subr.bf16.mxu0 0
    %3060 = vmatpush1.bf16.msra.mxu0 %v2839
    %3061 = vmatprep.subr.bf16.mxu0 0
    %3062 = vmatpush1.bf16.msra.mxu0 %v2842
    %3063 = vmatprep.subr.bf16.mxu0 0
    %3064 = vmatpush1.bf16.msra.mxu0 %v2845
    %3065 = vmatprep.subr.bf16.mxu0 0
    %3066 = vmatpush1.bf16.msra.mxu0 %v2848
    %3067 = vmatprep.subr.bf16.mxu0 0
    %3068 = vmatpush1.bf16.msra.mxu0 %v2851
    %3069 = vmatprep.subr.bf16.mxu0 0
    %3070 = vmatpush1.bf16.msra.mxu0 %v2854
    %3071 = vmatprep.subr.bf16.mxu0 0
    %3072 = vmatpush1.bf16.msra.mxu0 %v2857
    %3073 = vmatprep.subr.bf16.mxu0 0
    %3074 = vmatpush1.bf16.msra.mxu0 %v2860
    %3075 = vmatprep.mubr.bf16.mxu0 %v2456
    %3076 = vmatmul.mubr.bf16.gmra.mrb[0].mxu0 %v2455
    %v3077 = vpop.f32.mrb[0].mxu0
    %v3078 = vadd.f32 %v2569, %v3077
    %v3079 = vpop.f32.mrb[0].mxu0
    %v3080 = vpop.f32.mrb[0].mxu0
    %v3081 = vadd.f32 %v2569, %v3080
    %v3082 = vpop.f32.mrb[0].mxu0
    %3083 = vdwg.mxu0
    %3084 = vmatprep.subr.bf16.mxu0 0
    %3085 = vmatpush1.bf16.msra.mxu0 %v2863
    %3086 = vmatprep.subr.bf16.mxu0 0
    %3087 = vmatpush1.bf16.msra.mxu0 %v2866
    %3088 = vmatprep.subr.bf16.mxu0 0
    %3089 = vmatpush1.bf16.msra.mxu0 %v2869
    %3090 = vmatprep.subr.bf16.mxu0 0
    %3091 = vmatpush1.bf16.msra.mxu0 %v2872
    %3092 = vmatprep.subr.bf16.mxu0 0
    %3093 = vmatpush1.bf16.msra.mxu0 %v2875
    %3094 = vmatprep.subr.bf16.mxu0 0
    %3095 = vmatpush1.bf16.msra.mxu0 %v2878
    %3096 = vmatprep.subr.bf16.mxu0 0
    %3097 = vmatpush1.bf16.msra.mxu0 %v2881
    %3098 = vmatprep.subr.bf16.mxu0 0
    %3099 = vmatpush1.bf16.msra.mxu0 %v2884
    %3100 = vmatprep.subr.bf16.mxu0 0
    %3101 = vmatpush1.bf16.msra.mxu0 0
    %3102 = vmatprep.subr.bf16.mxu0 0
    %3103 = vmatpush1.bf16.msra.mxu0 0
    %3104 = vmatprep.subr.bf16.mxu0 0
    %3105 = vmatpush1.bf16.msra.mxu0 0
    %3106 = vmatprep.subr.bf16.mxu0 0
    %3107 = vmatpush1.bf16.msra.mxu0 0
    %3108 = vmatprep.subr.bf16.mxu0 0
    %3109 = vmatpush1.bf16.msra.mxu0 0
    %3110 = vmatprep.subr.bf16.mxu0 0
    %3111 = vmatpush1.bf16.msra.mxu0 0
    %3112 = vmatprep.subr.bf16.mxu0 0
    %3113 = vmatpush1.bf16.msra.mxu0 0
    %3114 = vmatprep.subr.bf16.mxu0 0
    %3115 = vmatpush1.bf16.msra.mxu0 0
    %3116 = vmatprep.mubr.bf16.mxu0 0
    %3117 = vmatmul.mubr.bf16.gmra.mrb[0].mxu0 %v2457
    %v3118 = vpop.f32.mrb[0].mxu0
    %v3119 = vadd.f32 %v3078, %v3118
    %v3120 = vpop.f32.mrb[0].mxu0
    %v3121 = vpop.f32.mrb[0].mxu0
    %v3122 = vadd.f32 %v3081, %v3121
    %v3123 = vpop.f32.mrb[0].mxu0
    %3124 = vdwg.mxu0
    %v3125 = vadd.f32 %v3035, %v2449
    %v3126 = vadd.f32 %v3037, %v2450
    %v3127 = vadd.f32 %v3119, %v2451
    %v3128 = vadd.f32 %v3039, %v2452
    %v3129 = vadd.f32 %v3041, %v2453
    %v3130 = vadd.f32 %v3122, %v2454
    %v3131 = vmax.f32 %v3125, 0.0
    %v3132 = vmax.f32 %v3126, 0.0
    %v3133 = vmax.f32 %v3127, 0.0
    %v3134 = vmax.f32 %v3128, 0.0
    %v3135 = vmax.f32 %v3129, 0.0
    %v3136 = vmax.f32 %v3130, 0.0
    %v3137 = vpack.c.bf16 %v3134, %v3131
    %v3138 = vpack.c.bf16 %v3135, %v3132
    %v3139 = vpack.c.bf16 %v3136, %v3133
    %v3140 = vld [vmem:[%s7] sm:$0xf]
    %v3141 = vld [vmem:[%s7 + $0x4] sm:$0xf]
    %v3142 = vld [vmem:[%s7 + $0x8] sm:$0xf]
    %v3143 = vld [vmem:[%s7 + $0xc] sm:$0xf]
    %v3144 = vld [vmem:[%s7 + $0x10] sm:$0xf]
    %v3145 = vld [vmem:[%s7 + $0x14] sm:$0xf]
    %v3146 = vld [vmem:[%s7 + $0x18] sm:$0xf]
    %v3147 = vld [vmem:[%s7 + $0x1c] sm:$0xf]
    %v3148 = vld [vmem:[%s7 + $0x20] sm:$0xf]
    %v3149 = vld [vmem:[%s7 + $0x24] sm:$0xf]
    %v3150 = vld [vmem:[%s7 + $0x28] sm:$0xf]
    %v3151 = vld [vmem:[%s7 + $0x2c] sm:$0xf]
    %v3152 = vld [vmem:[%s7 + $0x30] sm:$0xf]
    %v3153 = vld [vmem:[%s7 + $0x34] sm:$0xf]
    %v3154 = vld [vmem:[%s7 + $0x38] sm:$0xf]
    %v3155 = vld [vmem:[%s7 + $0x3c] sm:$0xf]
    %v3156 = vld [vmem:[%s7 + $0x40] sm:$0xf]
    %v3157 = vld [vmem:[%s7 + $0x44] sm:$0xf]
    %v3158 = vld [vmem:[%s7 + $0x48] sm:$0xf]
    %v3159 = vld [vmem:[%s7 + $0x4c] sm:$0xf]
    %v3160 = vld [vmem:[%s7 + $0x50] sm:$0xf]
    %v3161 = vld [vmem:[%s7 + $0x54] sm:$0xf]
    %v3162 = vld [vmem:[%s7 + $0x58] sm:$0xf]
    %v3163 = vld [vmem:[%s7 + $0x5c] sm:$0xf]
    %v3164 = vld [vmem:[%s7 + $0x60] sm:$0xf]
    %v3165 = vld [vmem:[%s7 + $0x64] sm:$0xf]
    %v3166 = vld [vmem:[%s7 + $0x68] sm:$0xf]
    %v3167 = vld [vmem:[%s7 + $0x6c] sm:$0xf]
    %v3168 = vld [vmem:[%s7 + $0x70] sm:$0xf]
    %v3169 = vld [vmem:[%s7 + $0x74] sm:$0xf]
    %v3170 = vld [vmem:[%s7 + $0x78] sm:$0xf]
    %v3171 = vld [vmem:[%s7 + $0x7c] sm:$0xf]
    %v3172 = vld [vmem:[%s7 + $0x80] sm:$0xf]
    %v3173 = vld [vmem:[%s7 + $0x84] sm:$0xf]
    %v3174 = vld [vmem:[%s7 + $0x88] sm:$0xf]
    %v3175 = vld [vmem:[%s7 + $0x8c] sm:$0xf]
    %v3176 = vld [vmem:[%s7 + $0x90] sm:$0xf]
    %v3177 = vld [vmem:[%s7 + $0x94] sm:$0xf]
    %v3178 = vld [vmem:[%s7 + $0x98] sm:$0xf]
    %v3179 = vld [vmem:[%s7 + $0x9c] sm:$0xf]
    %v3180 = vld [vmem:[%s7 + $0xa0] sm:$0xf]
    %v3181 = vld [vmem:[%s7 + $0xa4] sm:$0xf]
    %v3182 = vld [vmem:[%s7 + $0xa8] sm:$0xf]
    %v3183 = vld [vmem:[%s7 + $0xac] sm:$0xf]
    %v3184 = vld [vmem:[%s7 + $0xb0] sm:$0xf]
    %v3185 = vld [vmem:[%s7 + $0xb4] sm:$0xf]
    %v3186 = vld [vmem:[%s7 + $0xb8] sm:$0xf]
    %v3187 = vld [vmem:[%s7 + $0xbc] sm:$0xf]
    %v3188 = vld [vmem:[#allocation14] sm:$0x1]
    %v3190 = vlaneseq
    %v3191 = vshrl.u32 %v3190, 7
    %v3192 = vsub.s32 0, %v3191
    %v3193 = vrot.slane %v3188, %v3192
    %v3243 = vunpack.c.l.b16 %v3140
    %v3244 = vunpack.c.l.b16 %v3141
    %v3245 = vunpack.c.l.b16 %v3142
    %v3246 = vunpack.c.l.b16 %v3143
    %v3247 = vunpack.c.l.b16 %v3144
    %v3248 = vunpack.c.l.b16 %v3145
    %v3249 = vunpack.c.l.b16 %v3146
    %v3250 = vunpack.c.l.b16 %v3147
    %v3251 = vunpack.c.l.b16 %v3148
    %v3252 = vunpack.c.l.b16 %v3149
    %v3253 = vunpack.c.l.b16 %v3150
    %v3254 = vunpack.c.l.b16 %v3151
    %v3255 = vunpack.c.l.b16 %v3152
    %v3256 = vunpack.c.l.b16 %v3153
    %v3257 = vunpack.c.l.b16 %v3154
    %v3258 = vunpack.c.l.b16 %v3155
    %v3259 = vunpack.c.l.b16 %v3156
    %v3260 = vunpack.c.l.b16 %v3157
    %v3261 = vunpack.c.l.b16 %v3158
    %v3262 = vunpack.c.l.b16 %v3159
    %v3263 = vunpack.c.l.b16 %v3160
    %v3264 = vunpack.c.l.b16 %v3161
    %v3265 = vunpack.c.l.b16 %v3162
    %v3266 = vunpack.c.l.b16 %v3163
    %v3267 = vunpack.c.l.b16 %v3164
    %v3268 = vunpack.c.l.b16 %v3165
    %v3269 = vunpack.c.l.b16 %v3166
    %v3270 = vunpack.c.l.b16 %v3167
    %v3271 = vunpack.c.l.b16 %v3168
    %v3272 = vunpack.c.l.b16 %v3169
    %v3273 = vunpack.c.l.b16 %v3170
    %v3274 = vunpack.c.l.b16 %v3171
    %v3275 = vunpack.c.l.b16 %v3172
    %v3276 = vunpack.c.l.b16 %v3173
    %v3277 = vunpack.c.l.b16 %v3174
    %v3278 = vunpack.c.l.b16 %v3175
    %v3279 = vunpack.c.l.b16 %v3176
    %v3280 = vunpack.c.l.b16 %v3177
    %v3281 = vunpack.c.l.b16 %v3178
    %v3282 = vunpack.c.l.b16 %v3179
    %v3283 = vunpack.c.l.b16 %v3180
    %v3284 = vunpack.c.l.b16 %v3181
    %v3285 = vunpack.c.l.b16 %v3182
    %v3286 = vunpack.c.l.b16 %v3183
    %v3287 = vunpack.c.l.b16 %v3184
    %v3288 = vunpack.c.l.b16 %v3185
    %v3289 = vunpack.c.l.b16 %v3186
    %v3290 = vunpack.c.l.b16 %v3187
    %v3291 = vpack.c.b16 %v3244, %v3243
    %v3292 = vpack.c.b16 %v3246, %v3245
    %v3293 = vpack.c.b16 %v3248, %v3247
    %v3294 = vpack.c.b16 %v3250, %v3249
    %v3295 = vpack.c.b16 %v3252, %v3251
    %v3296 = vpack.c.b16 %v3254, %v3253
    %v3297 = vpack.c.b16 %v3256, %v3255
    %v3298 = vpack.c.b16 %v3258, %v3257
    %v3299 = vpack.c.b16 %v3260, %v3259
    %v3300 = vpack.c.b16 %v3262, %v3261
    %v3301 = vpack.c.b16 %v3264, %v3263
    %v3302 = vpack.c.b16 %v3266, %v3265
    %v3303 = vpack.c.b16 %v3268, %v3267
    %v3304 = vpack.c.b16 %v3270, %v3269
    %v3305 = vpack.c.b16 %v3272, %v3271
    %v3306 = vpack.c.b16 %v3274, %v3273
    %v3307 = vpack.c.b16 %v3276, %v3275
    %v3308 = vpack.c.b16 %v3278, %v3277
    %v3309 = vpack.c.b16 %v3280, %v3279
    %v3310 = vpack.c.b16 %v3282, %v3281
    %v3311 = vpack.c.b16 %v3284, %v3283
    %v3312 = vpack.c.b16 %v3286, %v3285
    %v3313 = vpack.c.b16 %v3288, %v3287
    %v3314 = vpack.c.b16 %v3290, %v3289
    %3339 = vmatprep.subr.bf16.mxu0 0
    %3340 = vmatpush1.bf16.msra.mxu0 %v3291
    %3341 = vmatprep.subr.bf16.mxu0 0
    %3342 = vmatpush1.bf16.msra.mxu0 %v3292
    %3343 = vmatprep.subr.bf16.mxu0 0
    %3344 = vmatpush1.bf16.msra.mxu0 %v3293
    %3345 = vmatprep.subr.bf16.mxu0 0
    %3346 = vmatpush1.bf16.msra.mxu0 %v3294
    %3347 = vmatprep.subr.bf16.mxu0 0
    %3348 = vmatpush1.bf16.msra.mxu0 %v3295
    %3349 = vmatprep.subr.bf16.mxu0 0
    %3350 = vmatpush1.bf16.msra.mxu0 %v3296
    %3351 = vmatprep.subr.bf16.mxu0 0
    %3352 = vmatpush1.bf16.msra.mxu0 %v3297
    %3353 = vmatprep.subr.bf16.mxu0 0
    %3354 = vmatpush1.bf16.msra.mxu0 %v3298
    %3355 = vmatprep.subr.bf16.mxu0 0
    %3356 = vmatpush1.bf16.msra.mxu0 %v3299
    %3357 = vmatprep.subr.bf16.mxu0 0
    %3358 = vmatpush1.bf16.msra.mxu0 %v3300
    %3359 = vmatprep.subr.bf16.mxu0 0
    %3360 = vmatpush1.bf16.msra.mxu0 %v3301
    %3361 = vmatprep.subr.bf16.mxu0 0
    %3362 = vmatpush1.bf16.msra.mxu0 %v3302
    %3363 = vmatprep.subr.bf16.mxu0 0
    %3364 = vmatpush1.bf16.msra.mxu0 %v3303
    %3365 = vmatprep.subr.bf16.mxu0 0
    %3366 = vmatpush1.bf16.msra.mxu0 %v3304
    %3367 = vmatprep.subr.bf16.mxu0 0
    %3368 = vmatpush1.bf16.msra.mxu0 %v3305
    %3369 = vmatprep.subr.bf16.mxu0 0
    %3370 = vmatpush1.bf16.msra.mxu0 %v3306
    %3371 = vmatprep.mubr.bf16.mxu0 %v3138
    %3372 = vmatmul.mubr.bf16.gmra.mrb[0].mxu0 %v3137
    %v3373 = vpop.f32.mrb[0].mxu0
    %v3374 = vadd.f32 %v3193, %v3373
    %v3375 = vpop.f32.mrb[0].mxu0
    %v3376 = vpop.f32.mrb[0].mxu0
    %v3377 = vadd.f32 %v3193, %v3376
    %v3378 = vpop.f32.mrb[0].mxu0
    %3379 = vdwg.mxu0
    %3380 = vmatprep.subr.bf16.mxu0 0
    %3381 = vmatpush1.bf16.msra.mxu0 %v3307
    %3382 = vmatprep.subr.bf16.mxu0 0
    %3383 = vmatpush1.bf16.msra.mxu0 %v3308
    %3384 = vmatprep.subr.bf16.mxu0 0
    %3385 = vmatpush1.bf16.msra.mxu0 %v3309
    %3386 = vmatprep.subr.bf16.mxu0 0
    %3387 = vmatpush1.bf16.msra.mxu0 %v3310
    %3388 = vmatprep.subr.bf16.mxu0 0
    %3389 = vmatpush1.bf16.msra.mxu0 %v3311
    %3390 = vmatprep.subr.bf16.mxu0 0
    %3391 = vmatpush1.bf16.msra.mxu0 %v3312
    %3392 = vmatprep.subr.bf16.mxu0 0
    %3393 = vmatpush1.bf16.msra.mxu0 %v3313
    %3394 = vmatprep.subr.bf16.mxu0 0
    %3395 = vmatpush1.bf16.msra.mxu0 %v3314
    %3396 = vmatprep.subr.bf16.mxu0 0
    %3397 = vmatpush1.bf16.msra.mxu0 0
    %3398 = vmatprep.subr.bf16.mxu0 0
    %3399 = vmatpush1.bf16.msra.mxu0 0
    %3400 = vmatprep.subr.bf16.mxu0 0
    %3401 = vmatpush1.bf16.msra.mxu0 0
    %3402 = vmatprep.subr.bf16.mxu0 0
    %3403 = vmatpush1.bf16.msra.mxu0 0
    %3404 = vmatprep.subr.bf16.mxu0 0
    %3405 = vmatpush1.bf16.msra.mxu0 0
    %3406 = vmatprep.subr.bf16.mxu0 0
    %3407 = vmatpush1.bf16.msra.mxu0 0
    %3408 = vmatprep.subr.bf16.mxu0 0
    %3409 = vmatpush1.bf16.msra.mxu0 0
    %3410 = vmatprep.subr.bf16.mxu0 0
    %3411 = vmatpush1.bf16.msra.mxu0 0
    %3412 = vmatprep.mubr.bf16.mxu0 0
    %3413 = vmatmul.mubr.bf16.gmra.mrb[0].mxu0 %v3139
    %v3414 = vpop.f32.mrb[0].mxu0
    %v3415 = vadd.f32 %v3374, %v3414
    %v3416 = vpop.f32.mrb[0].mxu0
    %v3417 = vpop.f32.mrb[0].mxu0
    %v3418 = vadd.f32 %v3377, %v3417
    %v3419 = vpop.f32.mrb[0].mxu0
    %3420 = vdwg.mxu0
    %v3421 = vmax.f32 %v3415, 0.0
    %v3422 = vmax.f32 %v3418, 0.0
    %v3423 = vpack.c.bf16 %v3422, %v3421
    %v3424 = vld [vmem:[%s9] sm:$0xf]
    %v3425 = vld [vmem:[%s9 + $0x4] sm:$0xf]
    %v3426 = vld [vmem:[%s9 + $0x8] sm:$0xf]
    %v3427 = vld [vmem:[#allocation16] sm:$0x1]
    %v3429 = vlaneseq
    %v3430 = vshrl.u32 %v3429, 7
    %v3431 = vsub.s32 0, %v3430
    %v3432 = vrot.slane %v3427, %v3431
    %v3437 = vunpack.c.l.b16 %v3424
    %v3438 = vunpack.c.l.b16 %v3425
    %v3439 = vunpack.c.l.b16 %v3426
    %v3440 = vpack.c.b16 %v3438, %v3437
    %v3441 = vpack.c.b16 %v3439, %v3439
    %vm3443 = vcmask 195584
    %v3445 = vsel %vm3443, %v3423, 0
    %v3448 = vsel %vm253, %v3441, 0
    %3450 = vmatprep.subr.bf16.mxu0 0
    %3451 = vmatpush1.bf16.msra.mxu0 %v3440
    %3452 = vmatprep.subr.bf16.mxu0 0
    %3453 = vmatpush1.bf16.msra.mxu0 %v3448
    %3454 = vmatprep.subr.bf16.mxu0 0
    %3455 = vmatpush1.bf16.msra.mxu0 0
    %3456 = vmatprep.subr.bf16.mxu0 0
    %3457 = vmatpush1.bf16.msra.mxu0 0
    %3458 = vmatprep.subr.bf16.mxu0 0
    %3459 = vmatpush1.bf16.msra.mxu0 0
    %3460 = vmatprep.subr.bf16.mxu0 0
    %3461 = vmatpush1.bf16.msra.mxu0 0
    %3462 = vmatprep.subr.bf16.mxu0 0
    %3463 = vmatpush1.bf16.msra.mxu0 0
    %3464 = vmatprep.subr.bf16.mxu0 0
    %3465 = vmatpush1.bf16.msra.mxu0 0
    %3466 = vmatprep.subr.bf16.mxu0 0
    %3467 = vmatpush1.bf16.msra.mxu0 0
    %3468 = vmatprep.subr.bf16.mxu0 0
    %3469 = vmatpush1.bf16.msra.mxu0 0
    %3470 = vmatprep.subr.bf16.mxu0 0
    %3471 = vmatpush1.bf16.msra.mxu0 0
    %3472 = vmatprep.subr.bf16.mxu0 0
    %3473 = vmatpush1.bf16.msra.mxu0 0
    %3474 = vmatprep.subr.bf16.mxu0 0
    %3475 = vmatpush1.bf16.msra.mxu0 0
    %3476 = vmatprep.subr.bf16.mxu0 0
    %3477 = vmatpush1.bf16.msra.mxu0 0
    %3478 = vmatprep.subr.bf16.mxu0 0
    %3479 = vmatpush1.bf16.msra.mxu0 0
    %3480 = vmatprep.subr.bf16.mxu0 0
    %3481 = vmatpush1.bf16.msra.mxu0 0
    %3482 = vmatprep.mubr.bf16.mxu0 0
    %3483 = vmatmul.mubr.bf16.gmra.mrb[0].mxu0 %v3445
    %v3484 = vpop.f32.mrb[0].mxu0
    %v3485 = vadd.f32 %v3432, %v3484
    %v3486 = vpop.f32.mrb[0].mxu0
    %v3487 = vpop.f32.mrb[0].mxu0
    %v3488 = vadd.f32 %v3432, %v3487
    %v3489 = vpop.f32.mrb[0].mxu0
    %3490 = vdwg.mxu0
    %v3491 = vmax.f32 %v3485, 0.0
    %v3492 = vmax.f32 %v3488, 0.0
    %v3493 = vpack.c.bf16 %v3492, %v3491
    %v3494 = vld [vmem:[#allocation17] sm:$0xf]
    %v3495 = vld [vmem:[#allocation19] sm:$0x1]
    %v3497 = vlaneseq
    %v3498 = vshrl.u32 %v3497, 7
    %v3499 = vsub.s32 0, %v3498
    %v3500 = vrot.slane %v3495, %v3499
    %vm3502 = vcmask 64512
    %v3504 = vsel %vm3502, %v3493, 0
    %v3507 = vsel %vm253, %v3494, 0
    %3509 = vmatprep.subr.bf16.mxu0 0
    %3510 = vmatpush1.bf16.msra.mxu0 %v3507
    %3511 = vmatprep.subr.bf16.mxu0 0
    %3512 = vmatpush1.bf16.msra.mxu0 0
    %3513 = vmatprep.subr.bf16.mxu0 0
    %3514 = vmatpush1.bf16.msra.mxu0 0
    %3515 = vmatprep.subr.bf16.mxu0 0
    %3516 = vmatpush1.bf16.msra.mxu0 0
    %3517 = vmatprep.subr.bf16.mxu0 0
    %3518 = vmatpush1.bf16.msra.mxu0 0
    %3519 = vmatprep.subr.bf16.mxu0 0
    %3520 = vmatpush1.bf16.msra.mxu0 0
    %3521 = vmatprep.subr.bf16.mxu0 0
    %3522 = vmatpush1.bf16.msra.mxu0 0
    %3523 = vmatprep.subr.bf16.mxu0 0
    %3524 = vmatpush1.bf16.msra.mxu0 0
    %3525 = vmatprep.subr.bf16.mxu0 0
    %3526 = vmatpush1.bf16.msra.mxu0 0
    %3527 = vmatprep.subr.bf16.mxu0 0
    %3528 = vmatpush1.bf16.msra.mxu0 0
    %3529 = vmatprep.subr.bf16.mxu0 0
    %3530 = vmatpush1.bf16.msra.mxu0 0
    %3531 = vmatprep.subr.bf16.mxu0 0
    %3532 = vmatpush1.bf16.msra.mxu0 0
    %3533 = vmatprep.subr.bf16.mxu0 0
    %3534 = vmatpush1.bf16.msra.mxu0 0
    %3535 = vmatprep.subr.bf16.mxu0 0
    %3536 = vmatpush1.bf16.msra.mxu0 0
    %3537 = vmatprep.subr.bf16.mxu0 0
    %3538 = vmatpush1.bf16.msra.mxu0 0
    %3539 = vmatprep.subr.bf16.mxu0 0
    %3540 = vmatpush1.bf16.msra.mxu0 0
    %3541 = vmatprep.mubr.bf16.mxu0 0
    %3542 = vmatmul.mubr.bf16.gmra.mrb[0].mxu0 %v3504
    %v3543 = vpop.f32.mrb[0].mxu0
    %v3544 = vadd.f32 %v3500, %v3543
    %v3545 = vpop.f32.mrb[0].mxu0
    %v3546 = vpop.f32.mrb[0].mxu0
    %v3547 = vadd.f32 %v3500, %v3546
    %v3548 = vpop.f32.mrb[0].mxu0
    %3549 = vdwg.mxu0
    %3550 = vst [vmem:[#allocation20] sm:$0xff] %v3544
    %3551 = vst [vmem:[#allocation20 + $0x8] sm:$0xff] %v3547
    // Predicated region
    $region98: #{tpu_custom_call.1} parent=1 // pred_check
      _
    $region99: #{tpu_custom_call.1} parent=1 // pred_check_branch
      %3553 = sbr.rel (0) target = $region101
    $region100: #{tpu_custom_call.1} parent=1 // pred_region
      %s3555 = ssub.s32 256, 256
      %3556 = vsyncadd [#allocation4], %s3555
      %s3557 = sshll.u32 [#allocation20], 4
      %s3558 = int_to_ptr.vmem [resolvable:$true] %s3557
      %3563 = dma.vmem_to_hbm [thread:$0]  %s3558, 256, %s13, [#allocation4], 128, 128, 8
    $region101: #{tpu_custom_call.1} parent=1 // pred_fallthru
      _
    // Predicated region
    $region102: #{tpu_custom_call.1} parent=1 // pred_check
      _
    $region103: #{tpu_custom_call.1} parent=1 // pred_check_branch
      %3565 = sbr.rel (0) target = $region105
    $region104: #{tpu_custom_call.1} parent=1 // pred_region
      %3566 = dma.done [#allocation4], 256
    $region105: #{tpu_custom_call.1} parent=1 // pred_fallthru
      _
    %3567 = vsyncpa [#allocation3], 1
    %3568 = vsyncpa [#allocation6], 1
    %3569 = vsyncpa [#allocation9], 1
    %3570 = vsyncpa [#allocation12], 1
    %3571 = vsyncpa [#allocation15], 1
    %3572 = vsyncpa [#allocation18], 1
    %3573 = vsyncpa [#allocation4], 1

</llo_original>
